<compile_context>
chip_gen: v5e
topology: v5e:2x2
jax: 0.10.0
libtpu: 0.0.40
codegen_flags: <defaults>
</compile_context>

<pallas_src>
import math
import jax
import jax.numpy as jnp
from jax.experimental import pallas as pl
from jax.experimental.pallas import tpu as pltpu

# --- small "bert" stand-in config (bert-base-uncased would be H=768, L=12) ---
VOCAB = 100
MAX_POS = 16
TYPE_VOCAB = 2
HIDDEN = 128                     # lane-dense: multiple of 128
N_HEADS = 4
HEAD_DIM = HIDDEN // N_HEADS
INTERMEDIATE = 4 * HIDDEN
N_LAYERS = 2
NUM_CLASSES = 3
CLS_PAD = 128                    # lane-dense padded classifier width
LN_EPS = 1e-12


# ----------------------------- in-kernel helpers -----------------------------
def _layernorm(x, g, b):
    mu = jnp.mean(x, axis=-1, keepdims=True)
    var = jnp.mean(jnp.square(x - mu), axis=-1, keepdims=True)
    return (x - mu) * jax.lax.rsqrt(var + LN_EPS) * g + b


def _softmax(x):
    x = x - jnp.max(x, axis=-1, keepdims=True)
    e = jnp.exp(x)
    return e * pl.reciprocal(jnp.sum(e, axis=-1, keepdims=True), approx=True)


def _sigmoid(x):
    # EUP-friendly sigmoid: 0.5 * (1 + tanh(x/2))
    return 0.5 * (jnp.tanh(0.5 * x) + 1.0)


def _gelu(x):
    # TODO(synk): HF BERT uses exact erf-based GELU; tanh approximation used here.
    c = math.sqrt(2.0 / math.pi)
    return 0.5 * x * (1.0 + jnp.tanh(c * (x + 0.044715 * x * x * x)))


# ------------------------------- fused kernel --------------------------------
# grid = (batch_blocks, layers); one batch element per "parallel" batch block,
# layer weights streamed along the "arbitrary" layer axis.
def fused_bert_kernel(emb_ref, mask_ref, embg_ref, embb_ref,
                      wq_ref, bq_ref, wk_ref, bk_ref, wv_ref, bv_ref,
                      wo_ref, bo_ref, ln1g_ref, ln1b_ref,
                      w1_ref, b1_ref, w2_ref, b2_ref, ln2g_ref, ln2b_ref,
                      wp_ref, bp_ref, wc_ref, bc_ref,
                      o_ref, x_ref):
    l = pl.program_id(1)
    S, H = x_ref.shape
    scale = 1.0 / math.sqrt(HEAD_DIM)

    # ---- layer-0 prologue: embedding LayerNorm into the persistent hidden state.
    @pl.when(l == 0)
    def _():
        x_ref[...] = _layernorm(emb_ref[0].astype(jnp.float32),
                                embg_ref[...], embb_ref[...])

    x = x_ref[...]                                         # (S, H) f32
    xb = x.astype(jnp.bfloat16)
    xhb = jnp.broadcast_to(xb, (N_HEADS, S, H))            # head-batched activations

    # ---- self-attention: all heads at once via leading-batch 3-D einsums.
    # Head-major weight slabs (prepared host-side) mean no in-kernel transposes,
    # no per-head lane slices, no masked stores, no ctx scratch.
    q = jnp.einsum("hsk,hkd->hsd", xhb, wq_ref[0],
                   preferred_element_type=jnp.float32) + bq_ref[0]   # (NH,S,HD)
    k = jnp.einsum("hsk,hkd->hsd", xhb, wk_ref[0],
                   preferred_element_type=jnp.float32) + bk_ref[0]
    v = jnp.einsum("hsk,hkd->hsd", xhb, wv_ref[0],
                   preferred_element_type=jnp.float32) + bv_ref[0]

    s = jnp.einsum("hqd,hkd->hqk", q.astype(jnp.bfloat16), k.astype(jnp.bfloat16),
                   preferred_element_type=jnp.float32) * scale       # (NH,S,S)
    mask_bias = (1.0 - mask_ref[...].astype(jnp.float32)) * -10000.0  # (1,1,S)
    p = _softmax(s + mask_bias)                                       # f32 stats
    ctx = jnp.einsum("hqk,hkd->hqd", p.astype(jnp.bfloat16), v.astype(jnp.bfloat16),
                     preferred_element_type=jnp.float32)              # (NH,S,HD)

    # Output projection: per-head batched (S,HD)@(HD,H), statically summed over
    # the head axis (equivalent to concat-then-matmul against the full wo).
    proj = jnp.einsum("hsd,hdj->hsj", ctx.astype(jnp.bfloat16), wo_ref[0],
                      preferred_element_type=jnp.float32)             # (NH,S,H)
    attn = proj[0]
    for h in range(1, N_HEADS):
        attn = attn + proj[h]
    attn = attn + bo_ref[0]
    h1 = _layernorm(attn + x, ln1g_ref[0], ln1b_ref[0])

    # ---- FFN
    inter = _gelu(jnp.dot(h1.astype(jnp.bfloat16), w1_ref[0],
                          preferred_element_type=jnp.float32) + b1_ref[0])
    ffn = jnp.dot(inter.astype(jnp.bfloat16), w2_ref[0],
                  preferred_element_type=jnp.float32) + b2_ref[0]
    x_new = _layernorm(ffn + h1, ln2g_ref[0], ln2b_ref[0])
    x_ref[...] = x_new

    # ---- last-layer epilogue: [CLS] pooler + lane-dense padded classifier + sigmoid.
    @pl.when(l == pl.num_programs(1) - 1)
    def _():
        cls = x_new[0:1, :]                                           # (1, H)
        pooled = jnp.tanh(jnp.dot(cls.astype(jnp.bfloat16), wp_ref[...],
                                  preferred_element_type=jnp.float32) + bp_ref[...])
        logits = jnp.dot(pooled.astype(jnp.bfloat16), wc_ref[...],
                         preferred_element_type=jnp.float32) + bc_ref[...]
        o_ref[...] = _sigmoid(logits)[None].astype(o_ref.dtype)       # (1,1,CLS_PAD)


# ------------------------------ parameter setup -------------------------------
def init_params(key):
    keys = iter(jax.random.split(key, 16))

    def normal(shape):
        return 0.02 * jax.random.normal(next(keys), shape, jnp.float32)

    def zeros(shape):
        return jnp.zeros(shape, jnp.float32)

    def ones(shape):
        return jnp.ones(shape, jnp.float32)

    L, H, I = N_LAYERS, HIDDEN, INTERMEDIATE
    return {
        "word_emb": normal((VOCAB, H)),
        "pos_emb": normal((MAX_POS, H)),
        "type_emb": normal((TYPE_VOCAB, H)),
        "emb_ln_g": ones((1, H)), "emb_ln_b": zeros((1, H)),
        # canonical BERT layouts, stacked on a leading layer axis
        "wq": normal((L, H, H)), "bq": zeros((L, 1, H)),
        "wk": normal((L, H, H)), "bk": zeros((L, 1, H)),
        "wv": normal((L, H, H)), "bv": zeros((L, 1, H)),
        "wo": normal((L, H, H)), "bo": zeros((L, 1, H)),
        "ln1_g": ones((L, 1, H)), "ln1_b": zeros((L, 1, H)),
        "w1": normal((L, H, I)), "b1": zeros((L, 1, I)),
        "w2": normal((L, I, H)), "b2": zeros((L, 1, H)),
        "ln2_g": ones((L, 1, H)), "ln2_b": zeros((L, 1, H)),
        "wp": normal((H, H)), "bp": zeros((1, H)),          # pooler
        "wc": normal((H, NUM_CLASSES)), "bc": zeros((1, NUM_CLASSES)),
    }


def _head_major_qkv(w, b):
    """(L,H,H)/(L,1,H) canonical layout -> (L,NH,H,HD) bf16 / (L,NH,1,HD) f32."""
    L = w.shape[0]
    w_hm = (w.reshape(L, HIDDEN, N_HEADS, HEAD_DIM)
             .transpose(0, 2, 1, 3).astype(jnp.bfloat16))
    b_hm = b.reshape(L, N_HEADS, 1, HEAD_DIM).astype(jnp.float32)
    return w_hm, b_hm


# --------------------------------- forward ------------------------------------
def flat_bert_forward(params, input_ids, att_mask):
    B, S = input_ids.shape
    H, L, NH, HD = HIDDEN, N_LAYERS, N_HEADS, HEAD_DIM

    # Embedding-table gathers stay in plain JAX (data-dependent HBM gather).
    # TODO(synk): at bert-base scale, fuse the gather into the kernel via
    # scalar-prefetched row indices instead of materializing `emb` in HBM.
    positions = jnp.arange(S)
    token_type = jnp.zeros((B, S), jnp.int32)   # TODO(synk): segment ids fixed to 0
    emb = (params["word_emb"][input_ids]
           + params["pos_emb"][positions][None, :, :]
           + params["type_emb"][token_type]).astype(jnp.bfloat16)   # bf16 halves DMA
    mask = att_mask.astype(jnp.float32).reshape(B, 1, S)

    # Host-side weight layout prep (pure reshape/transpose, one-time, free at
    # kernel time): head-major QKV / output-projection slabs, bf16 matmul weights,
    # lane-dense padded classifier.
    wq, bq = _head_major_qkv(params["wq"], params["bq"])
    wk, bk = _head_major_qkv(params["wk"], params["bk"])
    wv, bv = _head_major_qkv(params["wv"], params["bv"])
    wo = params["wo"].reshape(L, NH, HD, H).astype(jnp.bfloat16)
    w1 = params["w1"].astype(jnp.bfloat16)
    w2 = params["w2"].astype(jnp.bfloat16)
    wp = params["wp"].astype(jnp.bfloat16)
    wc = (jnp.zeros((H, CLS_PAD), jnp.float32)
          .at[:, :NUM_CLASSES].set(params["wc"]).astype(jnp.bfloat16))
    bc = jnp.zeros((1, CLS_PAD), jnp.float32).at[:, :NUM_CLASSES].set(params["bc"])

    args = (emb, mask, params["emb_ln_g"], params["emb_ln_b"],
            wq, bq, wk, bk, wv, bv, wo, params["bo"],
            params["ln1_g"], params["ln1_b"],
            w1, params["b1"], w2, params["b2"],
            params["ln2_g"], params["ln2_b"],
            wp, params["bp"], wc, bc)

    def layer_spec(shape):        # streamed per layer along the "arbitrary" axis
        nd = len(shape)
        return pl.BlockSpec((1,) + tuple(shape[1:]),
                            lambda b, l, _nd=nd: (l,) + (0,) * (_nd - 1))

    def resident_spec(shape):     # constant block index -> stays VMEM-resident
        nd = len(shape)
        return pl.BlockSpec(tuple(shape), lambda b, l, _nd=nd: (0,) * _nd)

    in_specs = [
        pl.BlockSpec((1, S, H), lambda b, l: (b, 0, 0)),       # emb   (per batch)
        pl.BlockSpec((1, 1, S), lambda b, l: (b, 0, 0)),       # mask  (per batch)
        resident_spec(params["emb_ln_g"].shape), resident_spec(params["emb_ln_b"].shape),
        layer_spec(wq.shape), layer_spec(bq.shape),
        layer_spec(wk.shape), layer_spec(bk.shape),
        layer_spec(wv.shape), layer_spec(bv.shape),
        layer_spec(wo.shape), layer_spec(params["bo"].shape),
        layer_spec(params["ln1_g"].shape), layer_spec(params["ln1_b"].shape),
        layer_spec(w1.shape), layer_spec(params["b1"].shape),
        layer_spec(w2.shape), layer_spec(params["b2"].shape),
        layer_spec(params["ln2_g"].shape), layer_spec(params["ln2_b"].shape),
        resident_spec(wp.shape), resident_spec(params["bp"].shape),
        resident_spec(wc.shape), resident_spec(bc.shape),
    ]
    out_spec = pl.BlockSpec((1, 1, CLS_PAD), lambda b, l: (b, 0, 0))

    # Explicit VMEM budget (v7x: 64 MiB physical): double-buffered per-layer
    # weight slabs + resident params + activations, with headroom.
    per_layer = sum(a.nbytes // L for a in
                    (wq, bq, wk, bk, wv, bv, wo, params["bo"],
                     params["ln1_g"], params["ln1_b"], w1, params["b1"],
                     w2, params["b2"], params["ln2_g"], params["ln2_b"]))
    resident = sum(a.nbytes for a in (params["emb_ln_g"], params["emb_ln_b"],
                                      wp, params["bp"], wc, bc))
    acts = 2 * (emb.nbytes // B) + 2 * (mask.nbytes // B) + S * H * 4 + 2 * CLS_PAD * 4
    vmem_limit = int(min(max(2 * per_layer + resident + acts + (4 << 20), 8 << 20),
                         64 << 20))

    out = pl.pallas_call(
        fused_bert_kernel,
        out_shape=jax.ShapeDtypeStruct((B, 1, CLS_PAD), jnp.float32),
        grid_spec=pltpu.PrefetchScalarGridSpec(
            num_scalar_prefetch=0,
            grid=(B, L),                         # batch (parallel) x layers (streamed)
            in_specs=in_specs,
            out_specs=out_spec,
            scratch_shapes=[pltpu.VMEM((S, H), jnp.float32)]),   # hidden-state carry
        compiler_params=pltpu.CompilerParams(
            dimension_semantics=("parallel", "arbitrary"),
            vmem_limit_bytes=vmem_limit),
    )(*args)

    return out.reshape(B, CLS_PAD)[:, :NUM_CLASSES]


if __name__ == "__main__":
    key = jax.random.PRNGKey(0)
    pkey, ikey = jax.random.split(key)
    params = init_params(pkey)

    B, S = 2, 8
    input_ids = jax.random.randint(ikey, (B, S), 0, VOCAB, dtype=jnp.int32)
    att_mask = jnp.array([[1, 1, 1, 1, 1, 1, 1, 1],
                          [1, 1, 1, 1, 1, 0, 0, 0]], dtype=jnp.int32)

    out = flat_bert_forward(params, input_ids, att_mask)
    out = jax.block_until_ready(out)
    assert out.shape == (B, NUM_CLASSES)
    assert bool(jnp.all((out >= 0.0) & (out <= 1.0)))
    print("KERNEL_OK")
</pallas_src>

<mosaic_0001>
module attributes {stable_mosaic.version = 11 : i64} {
  func.func @fused_bert_kernel(%arg0: i32, %arg1: i32, %arg2: memref<1x8x128xbf16, #tpu.memory_space<vmem>>, %arg3: memref<1x1x8xf32, #tpu.memory_space<vmem>>, %arg4: memref<1x128xf32, #tpu.memory_space<vmem>>, %arg5: memref<1x128xf32, #tpu.memory_space<vmem>>, %arg6: memref<1x4x128x32xbf16, #tpu.memory_space<vmem>>, %arg7: memref<1x4x1x32xf32, #tpu.memory_space<vmem>>, %arg8: memref<1x4x128x32xbf16, #tpu.memory_space<vmem>>, %arg9: memref<1x4x1x32xf32, #tpu.memory_space<vmem>>, %arg10: memref<1x4x128x32xbf16, #tpu.memory_space<vmem>>, %arg11: memref<1x4x1x32xf32, #tpu.memory_space<vmem>>, %arg12: memref<1x4x32x128xbf16, #tpu.memory_space<vmem>>, %arg13: memref<1x1x128xf32, #tpu.memory_space<vmem>>, %arg14: memref<1x1x128xf32, #tpu.memory_space<vmem>>, %arg15: memref<1x1x128xf32, #tpu.memory_space<vmem>>, %arg16: memref<1x128x512xbf16, #tpu.memory_space<vmem>>, %arg17: memref<1x1x512xf32, #tpu.memory_space<vmem>>, %arg18: memref<1x512x128xbf16, #tpu.memory_space<vmem>>, %arg19: memref<1x1x128xf32, #tpu.memory_space<vmem>>, %arg20: memref<1x1x128xf32, #tpu.memory_space<vmem>>, %arg21: memref<1x1x128xf32, #tpu.memory_space<vmem>>, %arg22: memref<128x128xbf16, #tpu.memory_space<vmem>>, %arg23: memref<1x128xf32, #tpu.memory_space<vmem>>, %arg24: memref<128x128xbf16, #tpu.memory_space<vmem>>, %arg25: memref<1x128xf32, #tpu.memory_space<vmem>>, %arg26: memref<1x1x128xf32, #tpu.memory_space<vmem>>, %arg27: memref<8x128xf32, #tpu.memory_space<vmem>>) attributes {dimension_semantics = [#tpu.dimension_semantics<parallel>, #tpu.dimension_semantics<arbitrary>], iteration_bounds = array<i64: 2, 2>, scalar_prefetch = 0 : i64, scratch_operands = 1 : i64, tpu.core_type = #tpu.core_type<tc>, window_params = [{transform_indices = @transform_0, window_bounds = array<i64: 1, 8, 128>}, {transform_indices = @transform_1, window_bounds = array<i64: 1, 1, 8>}, {pipeline_mode = #tpu.pipeline_mode<synchronous>, transform_indices = @transform_2, window_bounds = array<i64: 1, 128>}, {pipeline_mode = #tpu.pipeline_mode<synchronous>, transform_indices = @transform_3, window_bounds = array<i64: 1, 128>}, {transform_indices = @transform_4, window_bounds = array<i64: 1, 4, 128, 32>}, {transform_indices = @transform_5, window_bounds = array<i64: 1, 4, 1, 32>}, {transform_indices = @transform_6, window_bounds = array<i64: 1, 4, 128, 32>}, {transform_indices = @transform_7, window_bounds = array<i64: 1, 4, 1, 32>}, {transform_indices = @transform_8, window_bounds = array<i64: 1, 4, 128, 32>}, {transform_indices = @transform_9, window_bounds = array<i64: 1, 4, 1, 32>}, {transform_indices = @transform_10, window_bounds = array<i64: 1, 4, 32, 128>}, {transform_indices = @transform_11, window_bounds = array<i64: 1, 1, 128>}, {transform_indices = @transform_12, window_bounds = array<i64: 1, 1, 128>}, {transform_indices = @transform_13, window_bounds = array<i64: 1, 1, 128>}, {transform_indices = @transform_14, window_bounds = array<i64: 1, 128, 512>}, {transform_indices = @transform_15, window_bounds = array<i64: 1, 1, 512>}, {transform_indices = @transform_16, window_bounds = array<i64: 1, 512, 128>}, {transform_indices = @transform_17, window_bounds = array<i64: 1, 1, 128>}, {transform_indices = @transform_18, window_bounds = array<i64: 1, 1, 128>}, {transform_indices = @transform_19, window_bounds = array<i64: 1, 1, 128>}, {pipeline_mode = #tpu.pipeline_mode<synchronous>, transform_indices = @transform_20, window_bounds = array<i64: 128, 128>}, {pipeline_mode = #tpu.pipeline_mode<synchronous>, transform_indices = @transform_21, window_bounds = array<i64: 1, 128>}, {pipeline_mode = #tpu.pipeline_mode<synchronous>, transform_indices = @transform_22, window_bounds = array<i64: 128, 128>}, {pipeline_mode = #tpu.pipeline_mode<synchronous>, transform_indices = @transform_23, window_bounds = array<i64: 1, 128>}, {transform_indices = @transform_24, window_bounds = array<i64: 1, 1, 128>}]} {
    %c0_i32 = arith.constant 0 : i32
    %0 = arith.cmpi eq, %arg1, %c0_i32 : i32
    %1 = arith.extui %0 : i1 to i32
    %c0_i32_0 = arith.constant 0 : i32
    %2 = arith.cmpi ne, %1, %c0_i32_0 : i32
    scf.if %2 {
      %c0_89 = arith.constant 0 : index
      %c0_90 = arith.constant 0 : index
      %c0_91 = arith.constant 0 : index
      %159 = vector.load %arg2[%c0_89, %c0_90, %c0_91] : memref<1x8x128xbf16, #tpu.memory_space<vmem>>, vector<1x8x128xbf16>
      %160 = vector.shape_cast %159 : vector<1x8x128xbf16> to vector<8x128xbf16>
      %161 = arith.extf %160 : vector<8x128xbf16> to vector<8x128xf32>
      %c0_92 = arith.constant 0 : index
      %c0_93 = arith.constant 0 : index
      %162 = vector.load %arg4[%c0_92, %c0_93] : memref<1x128xf32, #tpu.memory_space<vmem>>, vector<1x128xf32>
      %c0_94 = arith.constant 0 : index
      %c0_95 = arith.constant 0 : index
      %163 = vector.load %arg5[%c0_94, %c0_95] : memref<1x128xf32, #tpu.memory_space<vmem>>, vector<1x128xf32>
      %cst_96 = arith.constant dense<0.000000e+00> : vector<8xf32>
      %164 = vector.multi_reduction <add>, %161, %cst_96 [1] : vector<8x128xf32> to vector<8xf32>
      %165 = vector.shape_cast %164 : vector<8xf32> to vector<8x1xf32>
      %cst_97 = arith.constant 1.280000e+02 : f32
      %166 = vector.broadcast %cst_97 : f32 to vector<8x1xf32>
      %167 = arith.divf %165, %166 : vector<8x1xf32>
      %168 = vector.broadcast %167 : vector<8x1xf32> to vector<8x128xf32>
      %169 = arith.subf %161, %168 : vector<8x128xf32>
      %170 = arith.mulf %169, %169 : vector<8x128xf32>
      %cst_98 = arith.constant dense<0.000000e+00> : vector<8xf32>
      %171 = vector.multi_reduction <add>, %170, %cst_98 [1] : vector<8x128xf32> to vector<8xf32>
      %172 = vector.shape_cast %171 : vector<8xf32> to vector<8x1xf32>
      %cst_99 = arith.constant 1.280000e+02 : f32
      %173 = vector.broadcast %cst_99 : f32 to vector<8x1xf32>
      %174 = arith.divf %172, %173 : vector<8x1xf32>
      %175 = vector.broadcast %167 : vector<8x1xf32> to vector<8x128xf32>
      %176 = arith.subf %161, %175 : vector<8x128xf32>
      %cst_100 = arith.constant 9.99999996E-13 : f32
      %177 = vector.broadcast %cst_100 : f32 to vector<8x1xf32>
      %178 = arith.addf %174, %177 : vector<8x1xf32>
      %179 = math.rsqrt %178 : vector<8x1xf32>
      %180 = vector.broadcast %179 : vector<8x1xf32> to vector<8x128xf32>
      %181 = arith.mulf %176, %180 : vector<8x128xf32>
      %182 = vector.broadcast %162 : vector<1x128xf32> to vector<8x128xf32>
      %183 = arith.mulf %181, %182 : vector<8x128xf32>
      %184 = vector.broadcast %163 : vector<1x128xf32> to vector<8x128xf32>
      %185 = arith.addf %183, %184 : vector<8x128xf32>
      %c0_101 = arith.constant 0 : index
      %c0_102 = arith.constant 0 : index
      %186 = vector.load %arg27[%c0_101, %c0_102] : memref<8x128xf32, #tpu.memory_space<vmem>>, vector<8x128xf32>
      tpu.vector_store %arg27[%c0_101, %c0_102], %185 {strides = array<i32>} : memref<8x128xf32, #tpu.memory_space<vmem>>, vector<8x128xf32>,
    } else {
    }
    %c0 = arith.constant 0 : index
    %c0_1 = arith.constant 0 : index
    %3 = vector.load %arg27[%c0, %c0_1] : memref<8x128xf32, #tpu.memory_space<vmem>>, vector<8x128xf32>
    %4 = arith.truncf %3 : vector<8x128xf32> to vector<8x128xbf16>
    %5 = vector.shape_cast %4 : vector<8x128xbf16> to vector<1x8x128xbf16>
    %6 = vector.broadcast %5 : vector<1x8x128xbf16> to vector<4x8x128xbf16>
    %c0_2 = arith.constant 0 : index
    %c0_3 = arith.constant 0 : index
    %c0_4 = arith.constant 0 : index
    %c0_5 = arith.constant 0 : index
    %7 = vector.load %arg6[%c0_2, %c0_3, %c0_4, %c0_5] : memref<1x4x128x32xbf16, #tpu.memory_space<vmem>>, vector<1x4x128x32xbf16>
    %8 = vector.shape_cast %7 : vector<1x4x128x32xbf16> to vector<4x128x32xbf16>
    "tpu.trace_start"() <{level = 10 : i32, message = "hsk,hkd->hsd"}> : () -> ()
    %cst = arith.constant dense<0.000000e+00> : vector<4x8x32xf32>
    %9 = tpu.matmul %6, %8, %cst {dimension_numbers = #tpu.dot_dimension_numbers<[2], [1], [1], [2], [0, 0, 0, 1, 1, 2], [0], [0]>} : vector<4x8x128xbf16>, vector<4x128x32xbf16>, vector<4x8x32xf32> -> vector<4x8x32xf32>
    "tpu.trace_stop"() : () -> ()
    %c0_6 = arith.constant 0 : index
    %c0_7 = arith.constant 0 : index
    %c0_8 = arith.constant 0 : index
    %c0_9 = arith.constant 0 : index
    %10 = vector.load %arg7[%c0_6, %c0_7, %c0_8, %c0_9] : memref<1x4x1x32xf32, #tpu.memory_space<vmem>>, vector<1x4x1x32xf32>
    %11 = vector.shape_cast %10 : vector<1x4x1x32xf32> to vector<4x1x32xf32>
    %12 = vector.broadcast %11 : vector<4x1x32xf32> to vector<4x8x32xf32>
    %13 = arith.addf %9, %12 : vector<4x8x32xf32>
    %c0_10 = arith.constant 0 : index
    %c0_11 = arith.constant 0 : index
    %c0_12 = arith.constant 0 : index
    %c0_13 = arith.constant 0 : index
    %14 = vector.load %arg8[%c0_10, %c0_11, %c0_12, %c0_13] : memref<1x4x128x32xbf16, #tpu.memory_space<vmem>>, vector<1x4x128x32xbf16>
    %15 = vector.shape_cast %14 : vector<1x4x128x32xbf16> to vector<4x128x32xbf16>
    "tpu.trace_start"() <{level = 10 : i32, message = "hsk,hkd->hsd"}> : () -> ()
    %cst_14 = arith.constant dense<0.000000e+00> : vector<4x8x32xf32>
    %16 = tpu.matmul %6, %15, %cst_14 {dimension_numbers = #tpu.dot_dimension_numbers<[2], [1], [1], [2], [0, 0, 0, 1, 1, 2], [0], [0]>} : vector<4x8x128xbf16>, vector<4x128x32xbf16>, vector<4x8x32xf32> -> vector<4x8x32xf32>
    "tpu.trace_stop"() : () -> ()
    %c0_15 = arith.constant 0 : index
    %c0_16 = arith.constant 0 : index
    %c0_17 = arith.constant 0 : index
    %c0_18 = arith.constant 0 : index
    %17 = vector.load %arg9[%c0_15, %c0_16, %c0_17, %c0_18] : memref<1x4x1x32xf32, #tpu.memory_space<vmem>>, vector<1x4x1x32xf32>
    %18 = vector.shape_cast %17 : vector<1x4x1x32xf32> to vector<4x1x32xf32>
    %19 = vector.broadcast %18 : vector<4x1x32xf32> to vector<4x8x32xf32>
    %20 = arith.addf %16, %19 : vector<4x8x32xf32>
    %c0_19 = arith.constant 0 : index
    %c0_20 = arith.constant 0 : index
    %c0_21 = arith.constant 0 : index
    %c0_22 = arith.constant 0 : index
    %21 = vector.load %arg10[%c0_19, %c0_20, %c0_21, %c0_22] : memref<1x4x128x32xbf16, #tpu.memory_space<vmem>>, vector<1x4x128x32xbf16>
    %22 = vector.shape_cast %21 : vector<1x4x128x32xbf16> to vector<4x128x32xbf16>
    "tpu.trace_start"() <{level = 10 : i32, message = "hsk,hkd->hsd"}> : () -> ()
    %cst_23 = arith.constant dense<0.000000e+00> : vector<4x8x32xf32>
    %23 = tpu.matmul %6, %22, %cst_23 {dimension_numbers = #tpu.dot_dimension_numbers<[2], [1], [1], [2], [0, 0, 0, 1, 1, 2], [0], [0]>} : vector<4x8x128xbf16>, vector<4x128x32xbf16>, vector<4x8x32xf32> -> vector<4x8x32xf32>
    "tpu.trace_stop"() : () -> ()
    %c0_24 = arith.constant 0 : index
    %c0_25 = arith.constant 0 : index
    %c0_26 = arith.constant 0 : index
    %c0_27 = arith.constant 0 : index
    %24 = vector.load %arg11[%c0_24, %c0_25, %c0_26, %c0_27] : memref<1x4x1x32xf32, #tpu.memory_space<vmem>>, vector<1x4x1x32xf32>
    %25 = vector.shape_cast %24 : vector<1x4x1x32xf32> to vector<4x1x32xf32>
    %26 = vector.broadcast %25 : vector<4x1x32xf32> to vector<4x8x32xf32>
    %27 = arith.addf %23, %26 : vector<4x8x32xf32>
    %28 = arith.truncf %13 : vector<4x8x32xf32> to vector<4x8x32xbf16>
    %29 = arith.truncf %20 : vector<4x8x32xf32> to vector<4x8x32xbf16>
    "tpu.trace_start"() <{level = 10 : i32, message = "hqd,hkd->hqk"}> : () -> ()
    %cst_28 = arith.constant dense<0.000000e+00> : vector<4x8x8xf32>
    %30 = tpu.matmul %28, %29, %cst_28 {dimension_numbers = #tpu.dot_dimension_numbers<[2], [2], [1], [1], [0, 0, 0, 1, 1, 1], [0], [0]>} : vector<4x8x32xbf16>, vector<4x8x32xbf16>, vector<4x8x8xf32> -> vector<4x8x8xf32>
    "tpu.trace_stop"() : () -> ()
    %cst_29 = arith.constant 0.176776692 : f32
    %31 = vector.broadcast %cst_29 : f32 to vector<4x8x8xf32>
    %32 = arith.mulf %30, %31 : vector<4x8x8xf32>
    %c0_30 = arith.constant 0 : index
    %c0_31 = arith.constant 0 : index
    %c0_32 = arith.constant 0 : index
    %33 = vector.load %arg3[%c0_30, %c0_31, %c0_32] : memref<1x1x8xf32, #tpu.memory_space<vmem>>, vector<1x1x8xf32>
    %cst_33 = arith.constant 1.000000e+00 : f32
    %34 = vector.broadcast %cst_33 : f32 to vector<1x1x8xf32>
    %35 = arith.subf %34, %33 : vector<1x1x8xf32>
    %cst_34 = arith.constant -1.000000e+04 : f32
    %36 = vector.broadcast %cst_34 : f32 to vector<1x1x8xf32>
    %37 = arith.mulf %35, %36 : vector<1x1x8xf32>
    %38 = vector.broadcast %37 : vector<1x1x8xf32> to vector<4x8x8xf32>
    %39 = arith.addf %32, %38 : vector<4x8x8xf32>
    %cst_35 = arith.constant dense<0xFF800000> : vector<4x8xf32>
    %40 = vector.multi_reduction <maximumf>, %39, %cst_35 [2] : vector<4x8x8xf32> to vector<4x8xf32>
    %41 = vector.shape_cast %40 : vector<4x8xf32> to vector<4x8x1xf32>
    %42 = vector.broadcast %41 : vector<4x8x1xf32> to vector<4x8x8xf32>
    %43 = arith.subf %39, %42 : vector<4x8x8xf32>
    %44 = math.exp %43 : vector<4x8x8xf32>
    %cst_36 = arith.constant dense<0.000000e+00> : vector<4x8xf32>
    %45 = vector.multi_reduction <add>, %44, %cst_36 [2] : vector<4x8x8xf32> to vector<4x8xf32>
    %46 = vector.shape_cast %45 : vector<4x8xf32> to vector<4x8x1xf32>
    %47 = tpu.reciprocal %46 {approx = true} : vector<4x8x1xf32> -> vector<4x8x1xf32>
    %48 = vector.broadcast %47 : vector<4x8x1xf32> to vector<4x8x8xf32>
    %49 = arith.mulf %44, %48 : vector<4x8x8xf32>
    %50 = arith.truncf %49 : vector<4x8x8xf32> to vector<4x8x8xbf16>
    %51 = arith.truncf %27 : vector<4x8x32xf32> to vector<4x8x32xbf16>
    "tpu.trace_start"() <{level = 10 : i32, message = "hqk,hkd->hqd"}> : () -> ()
    %cst_37 = arith.constant dense<0.000000e+00> : vector<4x8x32xf32>
    %52 = tpu.matmul %50, %51, %cst_37 {dimension_numbers = #tpu.dot_dimension_numbers<[2], [1], [1], [2], [0, 0, 0, 1, 1, 2], [0], [0]>} : vector<4x8x8xbf16>, vector<4x8x32xbf16>, vector<4x8x32xf32> -> vector<4x8x32xf32>
    "tpu.trace_stop"() : () -> ()
    %53 = arith.truncf %52 : vector<4x8x32xf32> to vector<4x8x32xbf16>
    %c0_38 = arith.constant 0 : index
    %c0_39 = arith.constant 0 : index
    %c0_40 = arith.constant 0 : index
    %c0_41 = arith.constant 0 : index
    %54 = vector.load %arg12[%c0_38, %c0_39, %c0_40, %c0_41] : memref<1x4x32x128xbf16, #tpu.memory_space<vmem>>, vector<1x4x32x128xbf16>
    %55 = vector.shape_cast %54 : vector<1x4x32x128xbf16> to vector<4x32x128xbf16>
    "tpu.trace_start"() <{level = 10 : i32, message = "hsd,hdj->hsj"}> : () -> ()
    %cst_42 = arith.constant dense<0.000000e+00> : vector<4x8x128xf32>
    %56 = tpu.matmul %53, %55, %cst_42 {dimension_numbers = #tpu.dot_dimension_numbers<[2], [1], [1], [2], [0, 0, 0, 1, 1, 2], [0], [0]>} : vector<4x8x32xbf16>, vector<4x32x128xbf16>, vector<4x8x128xf32> -> vector<4x8x128xf32>
    "tpu.trace_stop"() : () -> ()
    %57 = vector.extract_strided_slice %56 {offsets = [0, 0, 0], sizes = [1, 8, 128], strides = [1, 1, 1]} : vector<4x8x128xf32> to vector<1x8x128xf32>
    %58 = vector.shape_cast %57 : vector<1x8x128xf32> to vector<8x128xf32>
    %59 = vector.extract_strided_slice %56 {offsets = [1, 0, 0], sizes = [1, 8, 128], strides = [1, 1, 1]} : vector<4x8x128xf32> to vector<1x8x128xf32>
    %60 = vector.shape_cast %59 : vector<1x8x128xf32> to vector<8x128xf32>
    %61 = arith.addf %58, %60 : vector<8x128xf32>
    %62 = vector.extract_strided_slice %56 {offsets = [2, 0, 0], sizes = [1, 8, 128], strides = [1, 1, 1]} : vector<4x8x128xf32> to vector<1x8x128xf32>
    %63 = vector.shape_cast %62 : vector<1x8x128xf32> to vector<8x128xf32>
    %64 = arith.addf %61, %63 : vector<8x128xf32>
    %65 = vector.extract_strided_slice %56 {offsets = [3, 0, 0], sizes = [1, 8, 128], strides = [1, 1, 1]} : vector<4x8x128xf32> to vector<1x8x128xf32>
    %66 = vector.shape_cast %65 : vector<1x8x128xf32> to vector<8x128xf32>
    %67 = arith.addf %64, %66 : vector<8x128xf32>
    %c0_43 = arith.constant 0 : index
    %c0_44 = arith.constant 0 : index
    %c0_45 = arith.constant 0 : index
    %68 = vector.load %arg13[%c0_43, %c0_44, %c0_45] : memref<1x1x128xf32, #tpu.memory_space<vmem>>, vector<1x1x128xf32>
    %69 = vector.shape_cast %68 : vector<1x1x128xf32> to vector<1x128xf32>
    %70 = vector.broadcast %69 : vector<1x128xf32> to vector<8x128xf32>
    %71 = arith.addf %67, %70 : vector<8x128xf32>
    %72 = arith.addf %71, %3 : vector<8x128xf32>
    %c0_46 = arith.constant 0 : index
    %c0_47 = arith.constant 0 : index
    %c0_48 = arith.constant 0 : index
    %73 = vector.load %arg14[%c0_46, %c0_47, %c0_48] : memref<1x1x128xf32, #tpu.memory_space<vmem>>, vector<1x1x128xf32>
    %74 = vector.shape_cast %73 : vector<1x1x128xf32> to vector<1x128xf32>
    %c0_49 = arith.constant 0 : index
    %c0_50 = arith.constant 0 : index
    %c0_51 = arith.constant 0 : index
    %75 = vector.load %arg15[%c0_49, %c0_50, %c0_51] : memref<1x1x128xf32, #tpu.memory_space<vmem>>, vector<1x1x128xf32>
    %76 = vector.shape_cast %75 : vector<1x1x128xf32> to vector<1x128xf32>
    %cst_52 = arith.constant dense<0.000000e+00> : vector<8xf32>
    %77 = vector.multi_reduction <add>, %72, %cst_52 [1] : vector<8x128xf32> to vector<8xf32>
    %78 = vector.shape_cast %77 : vector<8xf32> to vector<8x1xf32>
    %cst_53 = arith.constant 1.280000e+02 : f32
    %79 = vector.broadcast %cst_53 : f32 to vector<8x1xf32>
    %80 = arith.divf %78, %79 : vector<8x1xf32>
    %81 = vector.broadcast %80 : vector<8x1xf32> to vector<8x128xf32>
    %82 = arith.subf %72, %81 : vector<8x128xf32>
    %83 = arith.mulf %82, %82 : vector<8x128xf32>
    %cst_54 = arith.constant dense<0.000000e+00> : vector<8xf32>
    %84 = vector.multi_reduction <add>, %83, %cst_54 [1] : vector<8x128xf32> to vector<8xf32>
    %85 = vector.shape_cast %84 : vector<8xf32> to vector<8x1xf32>
    %cst_55 = arith.constant 1.280000e+02 : f32
    %86 = vector.broadcast %cst_55 : f32 to vector<8x1xf32>
    %87 = arith.divf %85, %86 : vector<8x1xf32>
    %88 = vector.broadcast %80 : vector<8x1xf32> to vector<8x128xf32>
    %89 = arith.subf %72, %88 : vector<8x128xf32>
    %cst_56 = arith.constant 9.99999996E-13 : f32
    %90 = vector.broadcast %cst_56 : f32 to vector<8x1xf32>
    %91 = arith.addf %87, %90 : vector<8x1xf32>
    %92 = math.rsqrt %91 : vector<8x1xf32>
    %93 = vector.broadcast %92 : vector<8x1xf32> to vector<8x128xf32>
    %94 = arith.mulf %89, %93 : vector<8x128xf32>
    %95 = vector.broadcast %74 : vector<1x128xf32> to vector<8x128xf32>
    %96 = arith.mulf %94, %95 : vector<8x128xf32>
    %97 = vector.broadcast %76 : vector<1x128xf32> to vector<8x128xf32>
    %98 = arith.addf %96, %97 : vector<8x128xf32>
    %99 = arith.truncf %98 : vector<8x128xf32> to vector<8x128xbf16>
    %c0_57 = arith.constant 0 : index
    %c0_58 = arith.constant 0 : index
    %c0_59 = arith.constant 0 : index
    %100 = vector.load %arg16[%c0_57, %c0_58, %c0_59] : memref<1x128x512xbf16, #tpu.memory_space<vmem>>, vector<1x128x512xbf16>
    %101 = vector.shape_cast %100 : vector<1x128x512xbf16> to vector<128x512xbf16>
    %cst_60 = arith.constant dense<0.000000e+00> : vector<8x512xf32>
    %102 = tpu.matmul %99, %101, %cst_60 {dimension_numbers = #tpu.dot_dimension_numbers<[1], [0], [0], [1], [0, 0, 1, 1], [], []>} : vector<8x128xbf16>, vector<128x512xbf16>, vector<8x512xf32> -> vector<8x512xf32>
    %c0_61 = arith.constant 0 : index
    %c0_62 = arith.constant 0 : index
    %c0_63 = arith.constant 0 : index
    %103 = vector.load %arg17[%c0_61, %c0_62, %c0_63] : memref<1x1x512xf32, #tpu.memory_space<vmem>>, vector<1x1x512xf32>
    %104 = vector.shape_cast %103 : vector<1x1x512xf32> to vector<1x512xf32>
    %105 = vector.broadcast %104 : vector<1x512xf32> to vector<8x512xf32>
    %106 = arith.addf %102, %105 : vector<8x512xf32>
    %cst_64 = arith.constant 5.000000e-01 : f32
    %107 = vector.broadcast %cst_64 : f32 to vector<8x512xf32>
    %108 = arith.mulf %107, %106 : vector<8x512xf32>
    %cst_65 = arith.constant 4.471500e-02 : f32
    %109 = vector.broadcast %cst_65 : f32 to vector<8x512xf32>
    %110 = arith.mulf %109, %106 : vector<8x512xf32>
    %111 = arith.mulf %110, %106 : vector<8x512xf32>
    %112 = arith.mulf %111, %106 : vector<8x512xf32>
    %113 = arith.addf %106, %112 : vector<8x512xf32>
    %cst_66 = arith.constant 0.797884583 : f32
    %114 = vector.broadcast %cst_66 : f32 to vector<8x512xf32>
    %115 = arith.mulf %114, %113 : vector<8x512xf32>
    %116 = math.tanh %115 : vector<8x512xf32>
    %cst_67 = arith.constant 1.000000e+00 : f32
    %117 = vector.broadcast %cst_67 : f32 to vector<8x512xf32>
    %118 = arith.addf %117, %116 : vector<8x512xf32>
    %119 = arith.mulf %108, %118 : vector<8x512xf32>
    %120 = arith.truncf %119 : vector<8x512xf32> to vector<8x512xbf16>
    %c0_68 = arith.constant 0 : index
    %c0_69 = arith.constant 0 : index
    %c0_70 = arith.constant 0 : index
    %121 = vector.load %arg18[%c0_68, %c0_69, %c0_70] : memref<1x512x128xbf16, #tpu.memory_space<vmem>>, vector<1x512x128xbf16>
    %122 = vector.shape_cast %121 : vector<1x512x128xbf16> to vector<512x128xbf16>
    %cst_71 = arith.constant dense<0.000000e+00> : vector<8x128xf32>
    %123 = tpu.matmul %120, %122, %cst_71 {dimension_numbers = #tpu.dot_dimension_numbers<[1], [0], [0], [1], [0, 0, 1, 1], [], []>} : vector<8x512xbf16>, vector<512x128xbf16>, vector<8x128xf32> -> vector<8x128xf32>
    %c0_72 = arith.constant 0 : index
    %c0_73 = arith.constant 0 : index
    %c0_74 = arith.constant 0 : index
    %124 = vector.load %arg19[%c0_72, %c0_73, %c0_74] : memref<1x1x128xf32, #tpu.memory_space<vmem>>, vector<1x1x128xf32>
    %125 = vector.shape_cast %124 : vector<1x1x128xf32> to vector<1x128xf32>
    %126 = vector.broadcast %125 : vector<1x128xf32> to vector<8x128xf32>
    %127 = arith.addf %123, %126 : vector<8x128xf32>
    %128 = arith.addf %127, %98 : vector<8x128xf32>
    %c0_75 = arith.constant 0 : index
    %c0_76 = arith.constant 0 : index
    %c0_77 = arith.constant 0 : index
    %129 = vector.load %arg20[%c0_75, %c0_76, %c0_77] : memref<1x1x128xf32, #tpu.memory_space<vmem>>, vector<1x1x128xf32>
    %130 = vector.shape_cast %129 : vector<1x1x128xf32> to vector<1x128xf32>
    %c0_78 = arith.constant 0 : index
    %c0_79 = arith.constant 0 : index
    %c0_80 = arith.constant 0 : index
    %131 = vector.load %arg21[%c0_78, %c0_79, %c0_80] : memref<1x1x128xf32, #tpu.memory_space<vmem>>, vector<1x1x128xf32>
    %132 = vector.shape_cast %131 : vector<1x1x128xf32> to vector<1x128xf32>
    %cst_81 = arith.constant dense<0.000000e+00> : vector<8xf32>
    %133 = vector.multi_reduction <add>, %128, %cst_81 [1] : vector<8x128xf32> to vector<8xf32>
    %134 = vector.shape_cast %133 : vector<8xf32> to vector<8x1xf32>
    %cst_82 = arith.constant 1.280000e+02 : f32
    %135 = vector.broadcast %cst_82 : f32 to vector<8x1xf32>
    %136 = arith.divf %134, %135 : vector<8x1xf32>
    %137 = vector.broadcast %136 : vector<8x1xf32> to vector<8x128xf32>
    %138 = arith.subf %128, %137 : vector<8x128xf32>
    %139 = arith.mulf %138, %138 : vector<8x128xf32>
    %cst_83 = arith.constant dense<0.000000e+00> : vector<8xf32>
    %140 = vector.multi_reduction <add>, %139, %cst_83 [1] : vector<8x128xf32> to vector<8xf32>
    %141 = vector.shape_cast %140 : vector<8xf32> to vector<8x1xf32>
    %cst_84 = arith.constant 1.280000e+02 : f32
    %142 = vector.broadcast %cst_84 : f32 to vector<8x1xf32>
    %143 = arith.divf %141, %142 : vector<8x1xf32>
    %144 = vector.broadcast %136 : vector<8x1xf32> to vector<8x128xf32>
    %145 = arith.subf %128, %144 : vector<8x128xf32>
    %cst_85 = arith.constant 9.99999996E-13 : f32
    %146 = vector.broadcast %cst_85 : f32 to vector<8x1xf32>
    %147 = arith.addf %143, %146 : vector<8x1xf32>
    %148 = math.rsqrt %147 : vector<8x1xf32>
    %149 = vector.broadcast %148 : vector<8x1xf32> to vector<8x128xf32>
    %150 = arith.mulf %145, %149 : vector<8x128xf32>
    %151 = vector.broadcast %130 : vector<1x128xf32> to vector<8x128xf32>
    %152 = arith.mulf %150, %151 : vector<8x128xf32>
    %153 = vector.broadcast %132 : vector<1x128xf32> to vector<8x128xf32>
    %154 = arith.addf %152, %153 : vector<8x128xf32>
    %c0_86 = arith.constant 0 : index
    %c0_87 = arith.constant 0 : index
    %155 = vector.load %arg27[%c0_86, %c0_87] : memref<8x128xf32, #tpu.memory_space<vmem>>, vector<8x128xf32>
    tpu.vector_store %arg27[%c0_86, %c0_87], %154 {strides = array<i32>} : memref<8x128xf32, #tpu.memory_space<vmem>>, vector<8x128xf32>,
    %c1_i32 = arith.constant 1 : i32
    %156 = arith.cmpi eq, %arg1, %c1_i32 : i32
    %157 = arith.extui %156 : i1 to i32
    %c0_i32_88 = arith.constant 0 : i32
    %158 = arith.cmpi ne, %157, %c0_i32_88 : i32
    scf.if %158 {
      %159 = vector.extract_strided_slice %154 {offsets = [0, 0], sizes = [1, 128], strides = [1, 1]} : vector<8x128xf32> to vector<1x128xf32>
      %160 = arith.truncf %159 : vector<1x128xf32> to vector<1x128xbf16>
      %c0_89 = arith.constant 0 : index
      %c0_90 = arith.constant 0 : index
      %161 = vector.load %arg22[%c0_89, %c0_90] : memref<128x128xbf16, #tpu.memory_space<vmem>>, vector<128x128xbf16>
      %cst_91 = arith.constant dense<0.000000e+00> : vector<1x128xf32>
      %162 = tpu.matmul %160, %161, %cst_91 {dimension_numbers = #tpu.dot_dimension_numbers<[1], [0], [0], [1], [0, 0, 1, 1], [], []>} : vector<1x128xbf16>, vector<128x128xbf16>, vector<1x128xf32> -> vector<1x128xf32>
      %c0_92 = arith.constant 0 : index
      %c0_93 = arith.constant 0 : index
      %163 = vector.load %arg23[%c0_92, %c0_93] : memref<1x128xf32, #tpu.memory_space<vmem>>, vector<1x128xf32>
      %164 = arith.addf %162, %163 : vector<1x128xf32>
      %165 = math.tanh %164 : vector<1x128xf32>
      %166 = arith.truncf %165 : vector<1x128xf32> to vector<1x128xbf16>
      %c0_94 = arith.constant 0 : index
      %c0_95 = arith.constant 0 : index
      %167 = vector.load %arg24[%c0_94, %c0_95] : memref<128x128xbf16, #tpu.memory_space<vmem>>, vector<128x128xbf16>
      %cst_96 = arith.constant dense<0.000000e+00> : vector<1x128xf32>
      %168 = tpu.matmul %166, %167, %cst_96 {dimension_numbers = #tpu.dot_dimension_numbers<[1], [0], [0], [1], [0, 0, 1, 1], [], []>} : vector<1x128xbf16>, vector<128x128xbf16>, vector<1x128xf32> -> vector<1x128xf32>
      %c0_97 = arith.constant 0 : index
      %c0_98 = arith.constant 0 : index
      %169 = vector.load %arg25[%c0_97, %c0_98] : memref<1x128xf32, #tpu.memory_space<vmem>>, vector<1x128xf32>
      %170 = arith.addf %168, %169 : vector<1x128xf32>
      %cst_99 = arith.constant 5.000000e-01 : f32
      %171 = vector.broadcast %cst_99 : f32 to vector<1x128xf32>
      %172 = arith.mulf %171, %170 : vector<1x128xf32>
      %173 = math.tanh %172 : vector<1x128xf32>
      %cst_100 = arith.constant 1.000000e+00 : f32
      %174 = vector.broadcast %cst_100 : f32 to vector<1x128xf32>
      %175 = arith.addf %173, %174 : vector<1x128xf32>
      %cst_101 = arith.constant 5.000000e-01 : f32
      %176 = vector.broadcast %cst_101 : f32 to vector<1x128xf32>
      %177 = arith.mulf %176, %175 : vector<1x128xf32>
      %178 = vector.shape_cast %177 : vector<1x128xf32> to vector<1x1x128xf32>
      %c0_102 = arith.constant 0 : index
      %c0_103 = arith.constant 0 : index
      %c0_104 = arith.constant 0 : index
      %179 = vector.load %arg26[%c0_102, %c0_103, %c0_104] : memref<1x1x128xf32, #tpu.memory_space<vmem>>, vector<1x1x128xf32>
      tpu.vector_store %arg26[%c0_102, %c0_103, %c0_104], %178 {strides = array<i32>} : memref<1x1x128xf32, #tpu.memory_space<vmem>>, vector<1x1x128xf32>,
    } else {
    }
    return
  }
  func.func @transform_0(%arg0: i32, %arg1: i32) -> (i32, i32, i32) {
    %c0_i32 = arith.constant 0 : i32
    %c0_i32_0 = arith.constant 0 : i32
    %c0_i32_1 = arith.constant 0 : i32
    return %arg0, %c0_i32, %c0_i32_0 : i32, i32, i32
  }
  func.func @transform_1(%arg0: i32, %arg1: i32) -> (i32, i32, i32) {
    %c0_i32 = arith.constant 0 : i32
    %c0_i32_0 = arith.constant 0 : i32
    %c0_i32_1 = arith.constant 0 : i32
    return %arg0, %c0_i32, %c0_i32_0 : i32, i32, i32
  }
  func.func @transform_2(%arg0: i32, %arg1: i32) -> (i32, i32) {
    %c0_i32 = arith.constant 0 : i32
    %c0_i32_0 = arith.constant 0 : i32
    %c0_i32_1 = arith.constant 0 : i32
    return %c0_i32, %c0_i32_0 : i32, i32
  }
  func.func @transform_3(%arg0: i32, %arg1: i32) -> (i32, i32) {
    %c0_i32 = arith.constant 0 : i32
    %c0_i32_0 = arith.constant 0 : i32
    %c0_i32_1 = arith.constant 0 : i32
    return %c0_i32, %c0_i32_0 : i32, i32
  }
  func.func @transform_4(%arg0: i32, %arg1: i32) -> (i32, i32, i32, i32) {
    %c0_i32 = arith.constant 0 : i32
    %c0_i32_0 = arith.constant 0 : i32
    %c0_i32_1 = arith.constant 0 : i32
    %c0_i32_2 = arith.constant 0 : i32
    return %arg1, %c0_i32, %c0_i32_0, %c0_i32_1 : i32, i32, i32, i32
  }
  func.func @transform_5(%arg0: i32, %arg1: i32) -> (i32, i32, i32, i32) {
    %c0_i32 = arith.constant 0 : i32
    %c0_i32_0 = arith.constant 0 : i32
    %c0_i32_1 = arith.constant 0 : i32
    %c0_i32_2 = arith.constant 0 : i32
    return %arg1, %c0_i32, %c0_i32_0, %c0_i32_1 : i32, i32, i32, i32
  }
  func.func @transform_6(%arg0: i32, %arg1: i32) -> (i32, i32, i32, i32) {
    %c0_i32 = arith.constant 0 : i32
    %c0_i32_0 = arith.constant 0 : i32
    %c0_i32_1 = arith.constant 0 : i32
    %c0_i32_2 = arith.constant 0 : i32
    return %arg1, %c0_i32, %c0_i32_0, %c0_i32_1 : i32, i32, i32, i32
  }
  func.func @transform_7(%arg0: i32, %arg1: i32) -> (i32, i32, i32, i32) {
    %c0_i32 = arith.constant 0 : i32
    %c0_i32_0 = arith.constant 0 : i32
    %c0_i32_1 = arith.constant 0 : i32
    %c0_i32_2 = arith.constant 0 : i32
    return %arg1, %c0_i32, %c0_i32_0, %c0_i32_1 : i32, i32, i32, i32
  }
  func.func @transform_8(%arg0: i32, %arg1: i32) -> (i32, i32, i32, i32) {
    %c0_i32 = arith.constant 0 : i32
    %c0_i32_0 = arith.constant 0 : i32
    %c0_i32_1 = arith.constant 0 : i32
    %c0_i32_2 = arith.constant 0 : i32
    return %arg1, %c0_i32, %c0_i32_0, %c0_i32_1 : i32, i32, i32, i32
  }
  func.func @transform_9(%arg0: i32, %arg1: i32) -> (i32, i32, i32, i32) {
    %c0_i32 = arith.constant 0 : i32
    %c0_i32_0 = arith.constant 0 : i32
    %c0_i32_1 = arith.constant 0 : i32
    %c0_i32_2 = arith.constant 0 : i32
    return %arg1, %c0_i32, %c0_i32_0, %c0_i32_1 : i32, i32, i32, i32
  }
  func.func @transform_10(%arg0: i32, %arg1: i32) -> (i32, i32, i32, i32) {
    %c0_i32 = arith.constant 0 : i32
    %c0_i32_0 = arith.constant 0 : i32
    %c0_i32_1 = arith.constant 0 : i32
    %c0_i32_2 = arith.constant 0 : i32
    return %arg1, %c0_i32, %c0_i32_0, %c0_i32_1 : i32, i32, i32, i32
  }
  func.func @transform_11(%arg0: i32, %arg1: i32) -> (i32, i32, i32) {
    %c0_i32 = arith.constant 0 : i32
    %c0_i32_0 = arith.constant 0 : i32
    %c0_i32_1 = arith.constant 0 : i32
    return %arg1, %c0_i32, %c0_i32_0 : i32, i32, i32
  }
  func.func @transform_12(%arg0: i32, %arg1: i32) -> (i32, i32, i32) {
    %c0_i32 = arith.constant 0 : i32
    %c0_i32_0 = arith.constant 0 : i32
    %c0_i32_1 = arith.constant 0 : i32
    return %arg1, %c0_i32, %c0_i32_0 : i32, i32, i32
  }
  func.func @transform_13(%arg0: i32, %arg1: i32) -> (i32, i32, i32) {
    %c0_i32 = arith.constant 0 : i32
    %c0_i32_0 = arith.constant 0 : i32
    %c0_i32_1 = arith.constant 0 : i32
    return %arg1, %c0_i32, %c0_i32_0 : i32, i32, i32
  }
  func.func @transform_14(%arg0: i32, %arg1: i32) -> (i32, i32, i32) {
    %c0_i32 = arith.constant 0 : i32
    %c0_i32_0 = arith.constant 0 : i32
    %c0_i32_1 = arith.constant 0 : i32
    return %arg1, %c0_i32, %c0_i32_0 : i32, i32, i32
  }
  func.func @transform_15(%arg0: i32, %arg1: i32) -> (i32, i32, i32) {
    %c0_i32 = arith.constant 0 : i32
    %c0_i32_0 = arith.constant 0 : i32
    %c0_i32_1 = arith.constant 0 : i32
    return %arg1, %c0_i32, %c0_i32_0 : i32, i32, i32
  }
  func.func @transform_16(%arg0: i32, %arg1: i32) -> (i32, i32, i32) {
    %c0_i32 = arith.constant 0 : i32
    %c0_i32_0 = arith.constant 0 : i32
    %c0_i32_1 = arith.constant 0 : i32
    return %arg1, %c0_i32, %c0_i32_0 : i32, i32, i32
  }
  func.func @transform_17(%arg0: i32, %arg1: i32) -> (i32, i32, i32) {
    %c0_i32 = arith.constant 0 : i32
    %c0_i32_0 = arith.constant 0 : i32
    %c0_i32_1 = arith.constant 0 : i32
    return %arg1, %c0_i32, %c0_i32_0 : i32, i32, i32
  }
  func.func @transform_18(%arg0: i32, %arg1: i32) -> (i32, i32, i32) {
    %c0_i32 = arith.constant 0 : i32
    %c0_i32_0 = arith.constant 0 : i32
    %c0_i32_1 = arith.constant 0 : i32
    return %arg1, %c0_i32, %c0_i32_0 : i32, i32, i32
  }
  func.func @transform_19(%arg0: i32, %arg1: i32) -> (i32, i32, i32) {
    %c0_i32 = arith.constant 0 : i32
    %c0_i32_0 = arith.constant 0 : i32
    %c0_i32_1 = arith.constant 0 : i32
    return %arg1, %c0_i32, %c0_i32_0 : i32, i32, i32
  }
  func.func @transform_20(%arg0: i32, %arg1: i32) -> (i32, i32) {
    %c0_i32 = arith.constant 0 : i32
    %c0_i32_0 = arith.constant 0 : i32
    %c0_i32_1 = arith.constant 0 : i32
    return %c0_i32, %c0_i32_0 : i32, i32
  }
  func.func @transform_21(%arg0: i32, %arg1: i32) -> (i32, i32) {
    %c0_i32 = arith.constant 0 : i32
    %c0_i32_0 = arith.constant 0 : i32
    %c0_i32_1 = arith.constant 0 : i32
    return %c0_i32, %c0_i32_0 : i32, i32
  }
  func.func @transform_22(%arg0: i32, %arg1: i32) -> (i32, i32) {
    %c0_i32 = arith.constant 0 : i32
    %c0_i32_0 = arith.constant 0 : i32
    %c0_i32_1 = arith.constant 0 : i32
    return %c0_i32, %c0_i32_0 : i32, i32
  }
  func.func @transform_23(%arg0: i32, %arg1: i32) -> (i32, i32) {
    %c0_i32 = arith.constant 0 : i32
    %c0_i32_0 = arith.constant 0 : i32
    %c0_i32_1 = arith.constant 0 : i32
    return %c0_i32, %c0_i32_0 : i32, i32
  }
  func.func @transform_24(%arg0: i32, %arg1: i32) -> (i32, i32, i32) {
    %c0_i32 = arith.constant 0 : i32
    %c0_i32_0 = arith.constant 0 : i32
    %c0_i32_1 = arith.constant 0 : i32
    return %arg0, %c0_i32, %c0_i32_0 : i32, i32, i32
  }
}

</mosaic_0001>

<llo_original>
// kernel: tpu_custom_call.1
$region0: #{tpu_custom_call.1}
  #allocation0 [shape = 'u32[]', space=smem, size = 0x4, offset = 0x4, fixed_abs, tag = 'smem constant byte address 0x4 - core index']
  #allocation1 [shape = 'u32[72,128]{1,0:T(1,128)}', space=vmem, size = 0x9000, scoped, tag = 'internal scratch']
  #allocation2 [shape = 'f32[8,128]{1,0:T(8,128)}', space=vmem, size = 0x1000, scoped, tag = 'scratch operand']
  %s0 = inlined_call_operand.vmem [shape: bf16[2,8,128], index: 0, kind: input, shape index: {}]
  %s1 = inlined_call_operand.vmem [shape: f32[2,1,8], index: 1, kind: input, shape index: {}]
  %s2 = inlined_call_operand.vmem [shape: f32[1,128], index: 2, kind: input, shape index: {}]
  %s3 = inlined_call_operand.vmem [shape: f32[1,128], index: 3, kind: input, shape index: {}]
  %s4 = inlined_call_operand.vmem [shape: bf16[2,4,128,32], index: 4, kind: input, shape index: {}]
  %s5 = inlined_call_operand.vmem [shape: f32[2,4,1,32], index: 5, kind: input, shape index: {}]
  %s6 = inlined_call_operand.vmem [shape: bf16[2,4,128,32], index: 6, kind: input, shape index: {}]
  %s7 = inlined_call_operand.vmem [shape: f32[2,4,1,32], index: 7, kind: input, shape index: {}]
  %s8 = inlined_call_operand.vmem [shape: bf16[2,4,128,32], index: 8, kind: input, shape index: {}]
  %s9 = inlined_call_operand.vmem [shape: f32[2,4,1,32], index: 9, kind: input, shape index: {}]
  %s10 = inlined_call_operand.vmem [shape: bf16[2,4,32,128], index: 10, kind: input, shape index: {}]
  %s11 = inlined_call_operand.vmem [shape: f32[2,1,128], index: 11, kind: input, shape index: {}]
  %s12 = inlined_call_operand.vmem [shape: f32[2,1,128], index: 12, kind: input, shape index: {}]
  %s13 = inlined_call_operand.vmem [shape: f32[2,1,128], index: 13, kind: input, shape index: {}]
  %s14 = inlined_call_operand.vmem [shape: bf16[2,128,512], index: 14, kind: input, shape index: {}]
  %s15 = inlined_call_operand.vmem [shape: f32[2,1,512], index: 15, kind: input, shape index: {}]
  %s16 = inlined_call_operand.vmem [shape: bf16[2,512,128], index: 16, kind: input, shape index: {}]
  %s17 = inlined_call_operand.vmem [shape: f32[2,1,128], index: 17, kind: input, shape index: {}]
  %s18 = inlined_call_operand.vmem [shape: f32[2,1,128], index: 18, kind: input, shape index: {}]
  %s19 = inlined_call_operand.vmem [shape: f32[2,1,128], index: 19, kind: input, shape index: {}]
  %s20 = inlined_call_operand.vmem [shape: bf16[128,128], index: 20, kind: input, shape index: {}]
  %s21 = inlined_call_operand.vmem [shape: f32[1,128], index: 21, kind: input, shape index: {}]
  %s22 = inlined_call_operand.vmem [shape: bf16[128,128], index: 22, kind: input, shape index: {}]
  %s23 = inlined_call_operand.vmem [shape: f32[1,128], index: 23, kind: input, shape index: {}]
  %s24 = inlined_call_operand.hbm [shape: f32[2,1,128], index: 24, kind: output, shape index: {}]
  %s25 = sld [smem:[#allocation0]]
  $region137: #{tpu_custom_call.1} parent=0
    _
  %s27 = ssub.s32 1, %s25
  %s28 = scalar_select 0, %s27, %s25
  $region1: #{tpu_custom_call.1} parent=0
    #allocation3 [shape = 'u8[1024]{0}', space=vmem, size = 0x400, scoped, tag = 'output window, operand 0']
    #allocation4 [shape = 's32[2]{0}', space=sflag, size = 0x8, scoped, tag = 'scoped memory for tpu_custom_call.1']
    %29 = vsyncpa [#allocation4], 0
    %s30 = scalar_lea.sflag [#allocation4], 1
    %31 = vsyncpa %s30, 0
    loop: start=0, step=1, limit=6
    $region2: #{tpu_custom_call.1} parent=1 // loop_pre_header
      _
    $region3: #{tpu_custom_call.1} parent=1 // loop_header
      %s33 = sphi 0, %s37
      %p34 = scmp.ge.s32.totalorder %s33, 6
      %s40 = sphi 0, %s52
      %s41 = sphi 0, %s48
      %s42 = sphi 0, %s40
      %s43 = sphi 0, %s41
      %s44 = sphi 0, %s42
      %s45 = sphi 0, %s43
      %s55 = sphi 0, %s57
      %s58 = sphi 0, %s55
      %s59 = sphi 0, %s58
      %s75 = sphi 0, %s59
      %s81 = sphi 0, %s83
      %s84 = sphi 0, %s81
      %s85 = sphi 0, %s84
      %s101 = sphi 0, %s85
      %s105 = sphi 0, %s105
      %s107 = sphi 0, %s105
      %s108 = sphi 0, %s107
      %s122 = sphi 0, %s108
      %s126 = sphi 0, %s126
      %s128 = sphi 0, %s126
      %s129 = sphi 0, %s128
      %s143 = sphi 0, %s129
      %s149 = sphi 0, %s151
      %s152 = sphi 0, %s149
      %s153 = sphi 0, %s152
      %s169 = sphi 0, %s153
      %s175 = sphi 0, %s177
      %s178 = sphi 0, %s175
      %s179 = sphi 0, %s178
      %s195 = sphi 0, %s179
      %s201 = sphi 0, %s203
      %s204 = sphi 0, %s201
      %s205 = sphi 0, %s204
      %s221 = sphi 0, %s205
      %s227 = sphi 0, %s229
      %s230 = sphi 0, %s227
      %s231 = sphi 0, %s230
      %s247 = sphi 0, %s231
      %s253 = sphi 0, %s255
      %s256 = sphi 0, %s253
      %s257 = sphi 0, %s256
      %s273 = sphi 0, %s257
      %s279 = sphi 0, %s281
      %s282 = sphi 0, %s279
      %s283 = sphi 0, %s282
      %s299 = sphi 0, %s283
      %s305 = sphi 0, %s307
      %s308 = sphi 0, %s305
      %s309 = sphi 0, %s308
      %s325 = sphi 0, %s309
      %s331 = sphi 0, %s333
      %s334 = sphi 0, %s331
      %s335 = sphi 0, %s334
      %s351 = sphi 0, %s335
      %s357 = sphi 0, %s359
      %s360 = sphi 0, %s357
      %s361 = sphi 0, %s360
      %s377 = sphi 0, %s361
      %s383 = sphi 0, %s385
      %s386 = sphi 0, %s383
      %s387 = sphi 0, %s386
      %s403 = sphi 0, %s387
      %s409 = sphi 0, %s411
      %s412 = sphi 0, %s409
      %s413 = sphi 0, %s412
      %s429 = sphi 0, %s413
      %s435 = sphi 0, %s437
      %s438 = sphi 0, %s435
      %s439 = sphi 0, %s438
      %s455 = sphi 0, %s439
      %s461 = sphi 0, %s463
      %s464 = sphi 0, %s461
      %s465 = sphi 0, %s464
      %s481 = sphi 0, %s465
      %s487 = sphi 0, %s489
      %s490 = sphi 0, %s487
      %s491 = sphi 0, %s490
      %s507 = sphi 0, %s491
      %s513 = sphi 0, %s515
      %s516 = sphi 0, %s513
      %s517 = sphi 0, %s516
      %s533 = sphi 0, %s517
      %s539 = sphi 0, %s541
      %s542 = sphi 0, %s539
      %s543 = sphi 0, %s542
      %s559 = sphi 0, %s543
      %s563 = sphi 0, %s563
      %s565 = sphi 0, %s563
      %s566 = sphi 0, %s565
      %s580 = sphi 0, %s566
      %s584 = sphi 0, %s584
      %s586 = sphi 0, %s584
      %s587 = sphi 0, %s586
      %s601 = sphi 0, %s587
      %s605 = sphi 0, %s605
      %s607 = sphi 0, %s605
      %s608 = sphi 0, %s607
      %s622 = sphi 0, %s608
      %s626 = sphi 0, %s626
      %s628 = sphi 0, %s626
      %s629 = sphi 0, %s628
      %s643 = sphi 0, %s629
      %s649 = sphi 0, %s651
      %s652 = sphi 0, %s649
      %s653 = sphi 0, %s652
      %s669 = sphi 0, %s653
    $region4: #{tpu_custom_call.1} parent=1 // loop_header_branch
      %36 = sbr.rel (%p34) target = $region8
    $region5: #{tpu_custom_call.1} parent=1 // loop_body
      %s38 = ssub.s32 %s33, 1
      %s39 = ssub.s32 %s33, 2
      %s46 = sadd.s32 1, %s41
      %p47 = scmp.ge.s32.totalorder %s46, 2
      %s48 = scalar_select %p47, 0, %s46
      %s49 = sadd.s32 1, %s40
      %s50 = scalar_select %p47, %s49, %s40
      %p51 = scmp.ge.s32.totalorder %s50, 2
      %s52 = scalar_select %p51, 0, %s50
      %s53 = ssub.s32 %s40, %s52
      %p54 = scmp.eq.s32.totalorder %s53, 0
      %s56 = sadd.s32 %s55, 1
      %s57 = scalar_select %p54, %s55, %s56
      %p60 = pneg %p54
      %p61 = scmp.eq.s32.totalorder %s33, 3
      %p62 = por %p60, %p61
      %p63 = scmp.ne.s32.totalorder %s55, %s58
      %p64 = scmp.eq.s32.totalorder %s33, 0
      %p65 = por %p63, %p64
      %p66 = scmp.ne.s32.totalorder %s55, %s58
      %p67 = scmp.eq.s32.totalorder %s38, 3
      %p68 = por %p66, %p67
      %p69 = scmp.ne.s32.totalorder %s58, %s59
      %p70 = scmp.eq.s32.totalorder %s38, 0
      %p71 = por %p69, %p70
      %p72 = scmp.ne.s32.totalorder %s58, %s59
      %p73 = scmp.eq.s32.totalorder %s39, 3
      %p74 = por %p72, %p73
      %p76 = scmp.ne.s32.totalorder %s59, %s75
      %p77 = scmp.eq.s32.totalorder %s39, 0
      %p78 = por %p76, %p77
      %s79 = ssub.s32 %s40, %s52
      %p80 = scmp.eq.s32.totalorder %s79, 0
      %s82 = sadd.s32 %s81, 1
      %s83 = scalar_select %p80, %s81, %s82
      %p86 = pneg %p80
      %p87 = scmp.eq.s32.totalorder %s33, 3
      %p88 = por %p86, %p87
      %p89 = scmp.ne.s32.totalorder %s81, %s84
      %p90 = scmp.eq.s32.totalorder %s33, 0
      %p91 = por %p89, %p90
      %p92 = scmp.ne.s32.totalorder %s81, %s84
      %p93 = scmp.eq.s32.totalorder %s38, 3
      %p94 = por %p92, %p93
      %p95 = scmp.ne.s32.totalorder %s84, %s85
      %p96 = scmp.eq.s32.totalorder %s38, 0
      %p97 = por %p95, %p96
      %p98 = scmp.ne.s32.totalorder %s84, %s85
      %p99 = scmp.eq.s32.totalorder %s39, 3
      %p100 = por %p98, %p99
      %p102 = scmp.ne.s32.totalorder %s85, %s101
      %p103 = scmp.eq.s32.totalorder %s39, 0
      %p104 = por %p102, %p103
      %s106 = sadd.s32 %s105, 1
      %p109 = scmp.eq.s32.totalorder %s33, 3
      %p110 = scmp.ne.s32.totalorder %s105, %s107
      %p111 = scmp.eq.s32.totalorder %s33, 0
      %p112 = por %p110, %p111
      %p113 = scmp.ne.s32.totalorder %s105, %s107
      %p114 = scmp.eq.s32.totalorder %s38, 3
      %p115 = por %p113, %p114
      %p116 = scmp.ne.s32.totalorder %s107, %s108
      %p117 = scmp.eq.s32.totalorder %s38, 0
      %p118 = por %p116, %p117
      %p119 = scmp.ne.s32.totalorder %s107, %s108
      %p120 = scmp.eq.s32.totalorder %s39, 3
      %p121 = por %p119, %p120
      %p123 = scmp.ne.s32.totalorder %s108, %s122
      %p124 = scmp.eq.s32.totalorder %s39, 0
      %p125 = por %p123, %p124
      %s127 = sadd.s32 %s126, 1
      %p130 = scmp.eq.s32.totalorder %s33, 3
      %p131 = scmp.ne.s32.totalorder %s126, %s128
      %p132 = scmp.eq.s32.totalorder %s33, 0
      %p133 = por %p131, %p132
      %p134 = scmp.ne.s32.totalorder %s126, %s128
      %p135 = scmp.eq.s32.totalorder %s38, 3
      %p136 = por %p134, %p135
      %p137 = scmp.ne.s32.totalorder %s128, %s129
      %p138 = scmp.eq.s32.totalorder %s38, 0
      %p139 = por %p137, %p138
      %p140 = scmp.ne.s32.totalorder %s128, %s129
      %p141 = scmp.eq.s32.totalorder %s39, 3
      %p142 = por %p140, %p141
      %p144 = scmp.ne.s32.totalorder %s129, %s143
      %p145 = scmp.eq.s32.totalorder %s39, 0
      %p146 = por %p144, %p145
      %s147 = ssub.s32 %s41, %s48
      %p148 = scmp.eq.s32.totalorder %s147, 0
      %s150 = sadd.s32 %s149, 1
      %s151 = scalar_select %p148, %s149, %s150
      %p154 = pneg %p148
      %p155 = scmp.eq.s32.totalorder %s33, 3
      %p156 = por %p154, %p155
      %p157 = scmp.ne.s32.totalorder %s149, %s152
      %p158 = scmp.eq.s32.totalorder %s33, 0
      %p159 = por %p157, %p158
      %p160 = scmp.ne.s32.totalorder %s149, %s152
      %p161 = scmp.eq.s32.totalorder %s38, 3
      %p162 = por %p160, %p161
      %p163 = scmp.ne.s32.totalorder %s152, %s153
      %p164 = scmp.eq.s32.totalorder %s38, 0
      %p165 = por %p163, %p164
      %p166 = scmp.ne.s32.totalorder %s152, %s153
      %p167 = scmp.eq.s32.totalorder %s39, 3
      %p168 = por %p166, %p167
      %p170 = scmp.ne.s32.totalorder %s153, %s169
      %p171 = scmp.eq.s32.totalorder %s39, 0
      %p172 = por %p170, %p171
      %s173 = ssub.s32 %s41, %s48
      %p174 = scmp.eq.s32.totalorder %s173, 0
      %s176 = sadd.s32 %s175, 1
      %s177 = scalar_select %p174, %s175, %s176
      %p180 = pneg %p174
      %p181 = scmp.eq.s32.totalorder %s33, 3
      %p182 = por %p180, %p181
      %p183 = scmp.ne.s32.totalorder %s175, %s178
      %p184 = scmp.eq.s32.totalorder %s33, 0
      %p185 = por %p183, %p184
      %p186 = scmp.ne.s32.totalorder %s175, %s178
      %p187 = scmp.eq.s32.totalorder %s38, 3
      %p188 = por %p186, %p187
      %p189 = scmp.ne.s32.totalorder %s178, %s179
      %p190 = scmp.eq.s32.totalorder %s38, 0
      %p191 = por %p189, %p190
      %p192 = scmp.ne.s32.totalorder %s178, %s179
      %p193 = scmp.eq.s32.totalorder %s39, 3
      %p194 = por %p192, %p193
      %p196 = scmp.ne.s32.totalorder %s179, %s195
      %p197 = scmp.eq.s32.totalorder %s39, 0
      %p198 = por %p196, %p197
      %s199 = ssub.s32 %s41, %s48
      %p200 = scmp.eq.s32.totalorder %s199, 0
      %s202 = sadd.s32 %s201, 1
      %s203 = scalar_select %p200, %s201, %s202
      %p206 = pneg %p200
      %p207 = scmp.eq.s32.totalorder %s33, 3
      %p208 = por %p206, %p207
      %p209 = scmp.ne.s32.totalorder %s201, %s204
      %p210 = scmp.eq.s32.totalorder %s33, 0
      %p211 = por %p209, %p210
      %p212 = scmp.ne.s32.totalorder %s201, %s204
      %p213 = scmp.eq.s32.totalorder %s38, 3
      %p214 = por %p212, %p213
      %p215 = scmp.ne.s32.totalorder %s204, %s205
      %p216 = scmp.eq.s32.totalorder %s38, 0
      %p217 = por %p215, %p216
      %p218 = scmp.ne.s32.totalorder %s204, %s205
      %p219 = scmp.eq.s32.totalorder %s39, 3
      %p220 = por %p218, %p219
      %p222 = scmp.ne.s32.totalorder %s205, %s221
      %p223 = scmp.eq.s32.totalorder %s39, 0
      %p224 = por %p222, %p223
      %s225 = ssub.s32 %s41, %s48
      %p226 = scmp.eq.s32.totalorder %s225, 0
      %s228 = sadd.s32 %s227, 1
      %s229 = scalar_select %p226, %s227, %s228
      %p232 = pneg %p226
      %p233 = scmp.eq.s32.totalorder %s33, 3
      %p234 = por %p232, %p233
      %p235 = scmp.ne.s32.totalorder %s227, %s230
      %p236 = scmp.eq.s32.totalorder %s33, 0
      %p237 = por %p235, %p236
      %p238 = scmp.ne.s32.totalorder %s227, %s230
      %p239 = scmp.eq.s32.totalorder %s38, 3
      %p240 = por %p238, %p239
      %p241 = scmp.ne.s32.totalorder %s230, %s231
      %p242 = scmp.eq.s32.totalorder %s38, 0
      %p243 = por %p241, %p242
      %p244 = scmp.ne.s32.totalorder %s230, %s231
      %p245 = scmp.eq.s32.totalorder %s39, 3
      %p246 = por %p244, %p245
      %p248 = scmp.ne.s32.totalorder %s231, %s247
      %p249 = scmp.eq.s32.totalorder %s39, 0
      %p250 = por %p248, %p249
      %s251 = ssub.s32 %s41, %s48
      %p252 = scmp.eq.s32.totalorder %s251, 0
      %s254 = sadd.s32 %s253, 1
      %s255 = scalar_select %p252, %s253, %s254
      %p258 = pneg %p252
      %p259 = scmp.eq.s32.totalorder %s33, 3
      %p260 = por %p258, %p259
      %p261 = scmp.ne.s32.totalorder %s253, %s256
      %p262 = scmp.eq.s32.totalorder %s33, 0
      %p263 = por %p261, %p262
      %p264 = scmp.ne.s32.totalorder %s253, %s256
      %p265 = scmp.eq.s32.totalorder %s38, 3
      %p266 = por %p264, %p265
      %p267 = scmp.ne.s32.totalorder %s256, %s257
      %p268 = scmp.eq.s32.totalorder %s38, 0
      %p269 = por %p267, %p268
      %p270 = scmp.ne.s32.totalorder %s256, %s257
      %p271 = scmp.eq.s32.totalorder %s39, 3
      %p272 = por %p270, %p271
      %p274 = scmp.ne.s32.totalorder %s257, %s273
      %p275 = scmp.eq.s32.totalorder %s39, 0
      %p276 = por %p274, %p275
      %s277 = ssub.s32 %s41, %s48
      %p278 = scmp.eq.s32.totalorder %s277, 0
      %s280 = sadd.s32 %s279, 1
      %s281 = scalar_select %p278, %s279, %s280
      %p284 = pneg %p278
      %p285 = scmp.eq.s32.totalorder %s33, 3
      %p286 = por %p284, %p285
      %p287 = scmp.ne.s32.totalorder %s279, %s282
      %p288 = scmp.eq.s32.totalorder %s33, 0
      %p289 = por %p287, %p288
      %p290 = scmp.ne.s32.totalorder %s279, %s282
      %p291 = scmp.eq.s32.totalorder %s38, 3
      %p292 = por %p290, %p291
      %p293 = scmp.ne.s32.totalorder %s282, %s283
      %p294 = scmp.eq.s32.totalorder %s38, 0
      %p295 = por %p293, %p294
      %p296 = scmp.ne.s32.totalorder %s282, %s283
      %p297 = scmp.eq.s32.totalorder %s39, 3
      %p298 = por %p296, %p297
      %p300 = scmp.ne.s32.totalorder %s283, %s299
      %p301 = scmp.eq.s32.totalorder %s39, 0
      %p302 = por %p300, %p301
      %s303 = ssub.s32 %s41, %s48
      %p304 = scmp.eq.s32.totalorder %s303, 0
      %s306 = sadd.s32 %s305, 1
      %s307 = scalar_select %p304, %s305, %s306
      %p310 = pneg %p304
      %p311 = scmp.eq.s32.totalorder %s33, 3
      %p312 = por %p310, %p311
      %p313 = scmp.ne.s32.totalorder %s305, %s308
      %p314 = scmp.eq.s32.totalorder %s33, 0
      %p315 = por %p313, %p314
      %p316 = scmp.ne.s32.totalorder %s305, %s308
      %p317 = scmp.eq.s32.totalorder %s38, 3
      %p318 = por %p316, %p317
      %p319 = scmp.ne.s32.totalorder %s308, %s309
      %p320 = scmp.eq.s32.totalorder %s38, 0
      %p321 = por %p319, %p320
      %p322 = scmp.ne.s32.totalorder %s308, %s309
      %p323 = scmp.eq.s32.totalorder %s39, 3
      %p324 = por %p322, %p323
      %p326 = scmp.ne.s32.totalorder %s309, %s325
      %p327 = scmp.eq.s32.totalorder %s39, 0
      %p328 = por %p326, %p327
      %s329 = ssub.s32 %s41, %s48
      %p330 = scmp.eq.s32.totalorder %s329, 0
      %s332 = sadd.s32 %s331, 1
      %s333 = scalar_select %p330, %s331, %s332
      %p336 = pneg %p330
      %p337 = scmp.eq.s32.totalorder %s33, 3
      %p338 = por %p336, %p337
      %p339 = scmp.ne.s32.totalorder %s331, %s334
      %p340 = scmp.eq.s32.totalorder %s33, 0
      %p341 = por %p339, %p340
      %p342 = scmp.ne.s32.totalorder %s331, %s334
      %p343 = scmp.eq.s32.totalorder %s38, 3
      %p344 = por %p342, %p343
      %p345 = scmp.ne.s32.totalorder %s334, %s335
      %p346 = scmp.eq.s32.totalorder %s38, 0
      %p347 = por %p345, %p346
      %p348 = scmp.ne.s32.totalorder %s334, %s335
      %p349 = scmp.eq.s32.totalorder %s39, 3
      %p350 = por %p348, %p349
      %p352 = scmp.ne.s32.totalorder %s335, %s351
      %p353 = scmp.eq.s32.totalorder %s39, 0
      %p354 = por %p352, %p353
      %s355 = ssub.s32 %s41, %s48
      %p356 = scmp.eq.s32.totalorder %s355, 0
      %s358 = sadd.s32 %s357, 1
      %s359 = scalar_select %p356, %s357, %s358
      %p362 = pneg %p356
      %p363 = scmp.eq.s32.totalorder %s33, 3
      %p364 = por %p362, %p363
      %p365 = scmp.ne.s32.totalorder %s357, %s360
      %p366 = scmp.eq.s32.totalorder %s33, 0
      %p367 = por %p365, %p366
      %p368 = scmp.ne.s32.totalorder %s357, %s360
      %p369 = scmp.eq.s32.totalorder %s38, 3
      %p370 = por %p368, %p369
      %p371 = scmp.ne.s32.totalorder %s360, %s361
      %p372 = scmp.eq.s32.totalorder %s38, 0
      %p373 = por %p371, %p372
      %p374 = scmp.ne.s32.totalorder %s360, %s361
      %p375 = scmp.eq.s32.totalorder %s39, 3
      %p376 = por %p374, %p375
      %p378 = scmp.ne.s32.totalorder %s361, %s377
      %p379 = scmp.eq.s32.totalorder %s39, 0
      %p380 = por %p378, %p379
      %s381 = ssub.s32 %s41, %s48
      %p382 = scmp.eq.s32.totalorder %s381, 0
      %s384 = sadd.s32 %s383, 1
      %s385 = scalar_select %p382, %s383, %s384
      %p388 = pneg %p382
      %p389 = scmp.eq.s32.totalorder %s33, 3
      %p390 = por %p388, %p389
      %p391 = scmp.ne.s32.totalorder %s383, %s386
      %p392 = scmp.eq.s32.totalorder %s33, 0
      %p393 = por %p391, %p392
      %p394 = scmp.ne.s32.totalorder %s383, %s386
      %p395 = scmp.eq.s32.totalorder %s38, 3
      %p396 = por %p394, %p395
      %p397 = scmp.ne.s32.totalorder %s386, %s387
      %p398 = scmp.eq.s32.totalorder %s38, 0
      %p399 = por %p397, %p398
      %p400 = scmp.ne.s32.totalorder %s386, %s387
      %p401 = scmp.eq.s32.totalorder %s39, 3
      %p402 = por %p400, %p401
      %p404 = scmp.ne.s32.totalorder %s387, %s403
      %p405 = scmp.eq.s32.totalorder %s39, 0
      %p406 = por %p404, %p405
      %s407 = ssub.s32 %s41, %s48
      %p408 = scmp.eq.s32.totalorder %s407, 0
      %s410 = sadd.s32 %s409, 1
      %s411 = scalar_select %p408, %s409, %s410
      %p414 = pneg %p408
      %p415 = scmp.eq.s32.totalorder %s33, 3
      %p416 = por %p414, %p415
      %p417 = scmp.ne.s32.totalorder %s409, %s412
      %p418 = scmp.eq.s32.totalorder %s33, 0
      %p419 = por %p417, %p418
      %p420 = scmp.ne.s32.totalorder %s409, %s412
      %p421 = scmp.eq.s32.totalorder %s38, 3
      %p422 = por %p420, %p421
      %p423 = scmp.ne.s32.totalorder %s412, %s413
      %p424 = scmp.eq.s32.totalorder %s38, 0
      %p425 = por %p423, %p424
      %p426 = scmp.ne.s32.totalorder %s412, %s413
      %p427 = scmp.eq.s32.totalorder %s39, 3
      %p428 = por %p426, %p427
      %p430 = scmp.ne.s32.totalorder %s413, %s429
      %p431 = scmp.eq.s32.totalorder %s39, 0
      %p432 = por %p430, %p431
      %s433 = ssub.s32 %s41, %s48
      %p434 = scmp.eq.s32.totalorder %s433, 0
      %s436 = sadd.s32 %s435, 1
      %s437 = scalar_select %p434, %s435, %s436
      %p440 = pneg %p434
      %p441 = scmp.eq.s32.totalorder %s33, 3
      %p442 = por %p440, %p441
      %p443 = scmp.ne.s32.totalorder %s435, %s438
      %p444 = scmp.eq.s32.totalorder %s33, 0
      %p445 = por %p443, %p444
      %p446 = scmp.ne.s32.totalorder %s435, %s438
      %p447 = scmp.eq.s32.totalorder %s38, 3
      %p448 = por %p446, %p447
      %p449 = scmp.ne.s32.totalorder %s438, %s439
      %p450 = scmp.eq.s32.totalorder %s38, 0
      %p451 = por %p449, %p450
      %p452 = scmp.ne.s32.totalorder %s438, %s439
      %p453 = scmp.eq.s32.totalorder %s39, 3
      %p454 = por %p452, %p453
      %p456 = scmp.ne.s32.totalorder %s439, %s455
      %p457 = scmp.eq.s32.totalorder %s39, 0
      %p458 = por %p456, %p457
      %s459 = ssub.s32 %s41, %s48
      %p460 = scmp.eq.s32.totalorder %s459, 0
      %s462 = sadd.s32 %s461, 1
      %s463 = scalar_select %p460, %s461, %s462
      %p466 = pneg %p460
      %p467 = scmp.eq.s32.totalorder %s33, 3
      %p468 = por %p466, %p467
      %p469 = scmp.ne.s32.totalorder %s461, %s464
      %p470 = scmp.eq.s32.totalorder %s33, 0
      %p471 = por %p469, %p470
      %p472 = scmp.ne.s32.totalorder %s461, %s464
      %p473 = scmp.eq.s32.totalorder %s38, 3
      %p474 = por %p472, %p473
      %p475 = scmp.ne.s32.totalorder %s464, %s465
      %p476 = scmp.eq.s32.totalorder %s38, 0
      %p477 = por %p475, %p476
      %p478 = scmp.ne.s32.totalorder %s464, %s465
      %p479 = scmp.eq.s32.totalorder %s39, 3
      %p480 = por %p478, %p479
      %p482 = scmp.ne.s32.totalorder %s465, %s481
      %p483 = scmp.eq.s32.totalorder %s39, 0
      %p484 = por %p482, %p483
      %s485 = ssub.s32 %s41, %s48
      %p486 = scmp.eq.s32.totalorder %s485, 0
      %s488 = sadd.s32 %s487, 1
      %s489 = scalar_select %p486, %s487, %s488
      %p492 = pneg %p486
      %p493 = scmp.eq.s32.totalorder %s33, 3
      %p494 = por %p492, %p493
      %p495 = scmp.ne.s32.totalorder %s487, %s490
      %p496 = scmp.eq.s32.totalorder %s33, 0
      %p497 = por %p495, %p496
      %p498 = scmp.ne.s32.totalorder %s487, %s490
      %p499 = scmp.eq.s32.totalorder %s38, 3
      %p500 = por %p498, %p499
      %p501 = scmp.ne.s32.totalorder %s490, %s491
      %p502 = scmp.eq.s32.totalorder %s38, 0
      %p503 = por %p501, %p502
      %p504 = scmp.ne.s32.totalorder %s490, %s491
      %p505 = scmp.eq.s32.totalorder %s39, 3
      %p506 = por %p504, %p505
      %p508 = scmp.ne.s32.totalorder %s491, %s507
      %p509 = scmp.eq.s32.totalorder %s39, 0
      %p510 = por %p508, %p509
      %s511 = ssub.s32 %s41, %s48
      %p512 = scmp.eq.s32.totalorder %s511, 0
      %s514 = sadd.s32 %s513, 1
      %s515 = scalar_select %p512, %s513, %s514
      %p518 = pneg %p512
      %p519 = scmp.eq.s32.totalorder %s33, 3
      %p520 = por %p518, %p519
      %p521 = scmp.ne.s32.totalorder %s513, %s516
      %p522 = scmp.eq.s32.totalorder %s33, 0
      %p523 = por %p521, %p522
      %p524 = scmp.ne.s32.totalorder %s513, %s516
      %p525 = scmp.eq.s32.totalorder %s38, 3
      %p526 = por %p524, %p525
      %p527 = scmp.ne.s32.totalorder %s516, %s517
      %p528 = scmp.eq.s32.totalorder %s38, 0
      %p529 = por %p527, %p528
      %p530 = scmp.ne.s32.totalorder %s516, %s517
      %p531 = scmp.eq.s32.totalorder %s39, 3
      %p532 = por %p530, %p531
      %p534 = scmp.ne.s32.totalorder %s517, %s533
      %p535 = scmp.eq.s32.totalorder %s39, 0
      %p536 = por %p534, %p535
      %s537 = ssub.s32 %s41, %s48
      %p538 = scmp.eq.s32.totalorder %s537, 0
      %s540 = sadd.s32 %s539, 1
      %s541 = scalar_select %p538, %s539, %s540
      %p544 = pneg %p538
      %p545 = scmp.eq.s32.totalorder %s33, 3
      %p546 = por %p544, %p545
      %p547 = scmp.ne.s32.totalorder %s539, %s542
      %p548 = scmp.eq.s32.totalorder %s33, 0
      %p549 = por %p547, %p548
      %p550 = scmp.ne.s32.totalorder %s539, %s542
      %p551 = scmp.eq.s32.totalorder %s38, 3
      %p552 = por %p550, %p551
      %p553 = scmp.ne.s32.totalorder %s542, %s543
      %p554 = scmp.eq.s32.totalorder %s38, 0
      %p555 = por %p553, %p554
      %p556 = scmp.ne.s32.totalorder %s542, %s543
      %p557 = scmp.eq.s32.totalorder %s39, 3
      %p558 = por %p556, %p557
      %p560 = scmp.ne.s32.totalorder %s543, %s559
      %p561 = scmp.eq.s32.totalorder %s39, 0
      %p562 = por %p560, %p561
      %s564 = sadd.s32 %s563, 1
      %p567 = scmp.eq.s32.totalorder %s33, 3
      %p568 = scmp.ne.s32.totalorder %s563, %s565
      %p569 = scmp.eq.s32.totalorder %s33, 0
      %p570 = por %p568, %p569
      %p571 = scmp.ne.s32.totalorder %s563, %s565
      %p572 = scmp.eq.s32.totalorder %s38, 3
      %p573 = por %p571, %p572
      %p574 = scmp.ne.s32.totalorder %s565, %s566
      %p575 = scmp.eq.s32.totalorder %s38, 0
      %p576 = por %p574, %p575
      %p577 = scmp.ne.s32.totalorder %s565, %s566
      %p578 = scmp.eq.s32.totalorder %s39, 3
      %p579 = por %p577, %p578
      %p581 = scmp.ne.s32.totalorder %s566, %s580
      %p582 = scmp.eq.s32.totalorder %s39, 0
      %p583 = por %p581, %p582
      %s585 = sadd.s32 %s584, 1
      %p588 = scmp.eq.s32.totalorder %s33, 3
      %p589 = scmp.ne.s32.totalorder %s584, %s586
      %p590 = scmp.eq.s32.totalorder %s33, 0
      %p591 = por %p589, %p590
      %p592 = scmp.ne.s32.totalorder %s584, %s586
      %p593 = scmp.eq.s32.totalorder %s38, 3
      %p594 = por %p592, %p593
      %p595 = scmp.ne.s32.totalorder %s586, %s587
      %p596 = scmp.eq.s32.totalorder %s38, 0
      %p597 = por %p595, %p596
      %p598 = scmp.ne.s32.totalorder %s586, %s587
      %p599 = scmp.eq.s32.totalorder %s39, 3
      %p600 = por %p598, %p599
      %p602 = scmp.ne.s32.totalorder %s587, %s601
      %p603 = scmp.eq.s32.totalorder %s39, 0
      %p604 = por %p602, %p603
      %s606 = sadd.s32 %s605, 1
      %p609 = scmp.eq.s32.totalorder %s33, 3
      %p610 = scmp.ne.s32.totalorder %s605, %s607
      %p611 = scmp.eq.s32.totalorder %s33, 0
      %p612 = por %p610, %p611
      %p613 = scmp.ne.s32.totalorder %s605, %s607
      %p614 = scmp.eq.s32.totalorder %s38, 3
      %p615 = por %p613, %p614
      %p616 = scmp.ne.s32.totalorder %s607, %s608
      %p617 = scmp.eq.s32.totalorder %s38, 0
      %p618 = por %p616, %p617
      %p619 = scmp.ne.s32.totalorder %s607, %s608
      %p620 = scmp.eq.s32.totalorder %s39, 3
      %p621 = por %p619, %p620
      %p623 = scmp.ne.s32.totalorder %s608, %s622
      %p624 = scmp.eq.s32.totalorder %s39, 0
      %p625 = por %p623, %p624
      %s627 = sadd.s32 %s626, 1
      %p630 = scmp.eq.s32.totalorder %s33, 3
      %p631 = scmp.ne.s32.totalorder %s626, %s628
      %p632 = scmp.eq.s32.totalorder %s33, 0
      %p633 = por %p631, %p632
      %p634 = scmp.ne.s32.totalorder %s626, %s628
      %p635 = scmp.eq.s32.totalorder %s38, 3
      %p636 = por %p634, %p635
      %p637 = scmp.ne.s32.totalorder %s628, %s629
      %p638 = scmp.eq.s32.totalorder %s38, 0
      %p639 = por %p637, %p638
      %p640 = scmp.ne.s32.totalorder %s628, %s629
      %p641 = scmp.eq.s32.totalorder %s39, 3
      %p642 = por %p640, %p641
      %p644 = scmp.ne.s32.totalorder %s629, %s643
      %p645 = scmp.eq.s32.totalorder %s39, 0
      %p646 = por %p644, %p645
      %s647 = ssub.s32 %s40, %s52
      %p648 = scmp.eq.s32.totalorder %s647, 0
      %s650 = sadd.s32 %s649, 1
      %s651 = scalar_select %p648, %s649, %s650
      %p654 = pneg %p648
      %p655 = scmp.eq.s32.totalorder %s33, 3
      %p656 = por %p654, %p655
      %p657 = scmp.ne.s32.totalorder %s649, %s652
      %p658 = scmp.eq.s32.totalorder %s33, 0
      %p659 = por %p657, %p658
      %p660 = scmp.ne.s32.totalorder %s649, %s652
      %p661 = scmp.eq.s32.totalorder %s38, 3
      %p662 = por %p660, %p661
      %p663 = scmp.ne.s32.totalorder %s652, %s653
      %p664 = scmp.eq.s32.totalorder %s38, 0
      %p665 = por %p663, %p664
      %p666 = scmp.ne.s32.totalorder %s652, %s653
      %p667 = scmp.eq.s32.totalorder %s39, 3
      %p668 = por %p666, %p667
      %p670 = scmp.ne.s32.totalorder %s653, %s669
      %p671 = scmp.eq.s32.totalorder %s39, 0
      %p672 = por %p670, %p671
      %p673 = scmp.le.s32.totalorder 1, %s33
      %p674 = scmp.lt.s32.totalorder %s33, 5
      %p675 = pnand %p673, %p674
      %p676 = pneg %p675
      // Predicated region
      $region9: #{tpu_custom_call.1} parent=5 // pred_check
        _
      $region10: #{tpu_custom_call.1} parent=5 // pred_check_branch
        %678 = sbr.rel (%p675) target = $region12
      $region11: #{tpu_custom_call.1} parent=5 // pred_region
        %s679 = ssub.s32 %s33, 1
        // Predicated region
        $region13: #{tpu_custom_call.1} parent=11 // pred_check
          %p680 = pneg %p118
        $region14: #{tpu_custom_call.1} parent=11 // pred_check_branch
          %682 = sbr.rel (%p680) target = $region16
        $region15: #{tpu_custom_call.1} parent=11 // pred_region
          _
        $region16: #{tpu_custom_call.1} parent=11 // pred_fallthru
          _
        // Predicated region
        $region17: #{tpu_custom_call.1} parent=11 // pred_check
          %p683 = pneg %p139
        $region18: #{tpu_custom_call.1} parent=11 // pred_check_branch
          %685 = sbr.rel (%p683) target = $region20
        $region19: #{tpu_custom_call.1} parent=11 // pred_region
          _
        $region20: #{tpu_custom_call.1} parent=11 // pred_fallthru
          _
        // Predicated region
        $region21: #{tpu_custom_call.1} parent=11 // pred_check
          %p686 = pneg %p576
        $region22: #{tpu_custom_call.1} parent=11 // pred_check_branch
          %688 = sbr.rel (%p686) target = $region24
        $region23: #{tpu_custom_call.1} parent=11 // pred_region
          _
        $region24: #{tpu_custom_call.1} parent=11 // pred_fallthru
          _
        // Predicated region
        $region25: #{tpu_custom_call.1} parent=11 // pred_check
          %p689 = pneg %p597
        $region26: #{tpu_custom_call.1} parent=11 // pred_check_branch
          %691 = sbr.rel (%p689) target = $region28
        $region27: #{tpu_custom_call.1} parent=11 // pred_region
          _
        $region28: #{tpu_custom_call.1} parent=11 // pred_fallthru
          _
        // Predicated region
        $region29: #{tpu_custom_call.1} parent=11 // pred_check
          %p692 = pneg %p618
        $region30: #{tpu_custom_call.1} parent=11 // pred_check_branch
          %694 = sbr.rel (%p692) target = $region32
        $region31: #{tpu_custom_call.1} parent=11 // pred_region
          _
        $region32: #{tpu_custom_call.1} parent=11 // pred_fallthru
          _
        // Predicated region
        $region33: #{tpu_custom_call.1} parent=11 // pred_check
          %p695 = pneg %p639
        $region34: #{tpu_custom_call.1} parent=11 // pred_check_branch
          %697 = sbr.rel (%p695) target = $region36
        $region35: #{tpu_custom_call.1} parent=11 // pred_region
          _
        $region36: #{tpu_custom_call.1} parent=11 // pred_fallthru
          _
      $region12: #{tpu_custom_call.1} parent=5 // pred_fallthru
        _
      %p698 = scmp.lt.s32.totalorder %s33, 4
      // Predicated region
      $region37: #{tpu_custom_call.1} parent=5 // pred_check
        %p699 = pneg %p698
      $region38: #{tpu_custom_call.1} parent=5 // pred_check_branch
        %701 = sbr.rel (%p699) target = $region40
      $region39: #{tpu_custom_call.1} parent=5 // pred_region
        // Predicated region
        $region41: #{tpu_custom_call.1} parent=39 // pred_check
          %p702 = pneg %p65
        $region42: #{tpu_custom_call.1} parent=39 // pred_check_branch
          %704 = sbr.rel (%p702) target = $region44
        $region43: #{tpu_custom_call.1} parent=39 // pred_region
          %p705 = scmp.lt.s32.totalorder %s40, 1
          %s706 = scalar_select %p705, %s40, 1
          %s707 = smul.addr %s706, 4
          %s708 = scalar_lea.vmem %s0, %s707
        $region44: #{tpu_custom_call.1} parent=39 // pred_fallthru
          _
        // Predicated region
        $region45: #{tpu_custom_call.1} parent=39 // pred_check
          %p709 = pneg %p91
        $region46: #{tpu_custom_call.1} parent=39 // pred_check_branch
          %711 = sbr.rel (%p709) target = $region48
        $region47: #{tpu_custom_call.1} parent=39 // pred_region
          %p712 = scmp.lt.s32.totalorder %s40, 1
          %s713 = scalar_select %p712, %s40, 1
          %s714 = scalar_lea.vmem %s1, %s713
        $region48: #{tpu_custom_call.1} parent=39 // pred_fallthru
          _
        // Predicated region
        $region49: #{tpu_custom_call.1} parent=39 // pred_check
          %p715 = pneg %p159
        $region50: #{tpu_custom_call.1} parent=39 // pred_check_branch
          %717 = sbr.rel (%p715) target = $region52
        $region51: #{tpu_custom_call.1} parent=39 // pred_region
          %p718 = scmp.lt.s32.totalorder %s41, 1
          %s719 = scalar_select %p718, %s41, 1
          %s720 = smul.addr %s719, 64
          %s721 = smul.addr %s720, 4
          %s722 = scalar_lea.vmem %s4, %s721
        $region52: #{tpu_custom_call.1} parent=39 // pred_fallthru
          _
        // Predicated region
        $region53: #{tpu_custom_call.1} parent=39 // pred_check
          %p723 = pneg %p185
        $region54: #{tpu_custom_call.1} parent=39 // pred_check_branch
          %725 = sbr.rel (%p723) target = $region56
        $region55: #{tpu_custom_call.1} parent=39 // pred_region
          %p726 = scmp.lt.s32.totalorder %s41, 1
          %s727 = scalar_select %p726, %s41, 1
          %s728 = smul.addr %s727, 4
          %s729 = scalar_lea.vmem %s5, %s728
        $region56: #{tpu_custom_call.1} parent=39 // pred_fallthru
          _
        // Predicated region
        $region57: #{tpu_custom_call.1} parent=39 // pred_check
          %p730 = pneg %p211
        $region58: #{tpu_custom_call.1} parent=39 // pred_check_branch
          %732 = sbr.rel (%p730) target = $region60
        $region59: #{tpu_custom_call.1} parent=39 // pred_region
          %p733 = scmp.lt.s32.totalorder %s41, 1
          %s734 = scalar_select %p733, %s41, 1
          %s735 = smul.addr %s734, 64
          %s736 = smul.addr %s735, 4
          %s737 = scalar_lea.vmem %s6, %s736
        $region60: #{tpu_custom_call.1} parent=39 // pred_fallthru
          _
        // Predicated region
        $region61: #{tpu_custom_call.1} parent=39 // pred_check
          %p738 = pneg %p237
        $region62: #{tpu_custom_call.1} parent=39 // pred_check_branch
          %740 = sbr.rel (%p738) target = $region64
        $region63: #{tpu_custom_call.1} parent=39 // pred_region
          %p741 = scmp.lt.s32.totalorder %s41, 1
          %s742 = scalar_select %p741, %s41, 1
          %s743 = smul.addr %s742, 4
          %s744 = scalar_lea.vmem %s7, %s743
        $region64: #{tpu_custom_call.1} parent=39 // pred_fallthru
          _
        // Predicated region
        $region65: #{tpu_custom_call.1} parent=39 // pred_check
          %p745 = pneg %p263
        $region66: #{tpu_custom_call.1} parent=39 // pred_check_branch
          %747 = sbr.rel (%p745) target = $region68
        $region67: #{tpu_custom_call.1} parent=39 // pred_region
          %p748 = scmp.lt.s32.totalorder %s41, 1
          %s749 = scalar_select %p748, %s41, 1
          %s750 = smul.addr %s749, 64
          %s751 = smul.addr %s750, 4
          %s752 = scalar_lea.vmem %s8, %s751
        $region68: #{tpu_custom_call.1} parent=39 // pred_fallthru
          _
        // Predicated region
        $region69: #{tpu_custom_call.1} parent=39 // pred_check
          %p753 = pneg %p289
        $region70: #{tpu_custom_call.1} parent=39 // pred_check_branch
          %755 = sbr.rel (%p753) target = $region72
        $region71: #{tpu_custom_call.1} parent=39 // pred_region
          %p756 = scmp.lt.s32.totalorder %s41, 1
          %s757 = scalar_select %p756, %s41, 1
          %s758 = smul.addr %s757, 4
          %s759 = scalar_lea.vmem %s9, %s758
        $region72: #{tpu_custom_call.1} parent=39 // pred_fallthru
          _
        // Predicated region
        $region73: #{tpu_custom_call.1} parent=39 // pred_check
          %p760 = pneg %p315
        $region74: #{tpu_custom_call.1} parent=39 // pred_check_branch
          %762 = sbr.rel (%p760) target = $region76
        $region75: #{tpu_custom_call.1} parent=39 // pred_region
          %p763 = scmp.lt.s32.totalorder %s41, 1
          %s764 = scalar_select %p763, %s41, 1
          %s765 = smul.addr %s764, 16
          %s766 = smul.addr %s765, 4
          %s767 = scalar_lea.vmem %s10, %s766
        $region76: #{tpu_custom_call.1} parent=39 // pred_fallthru
          _
        // Predicated region
        $region77: #{tpu_custom_call.1} parent=39 // pred_check
          %p768 = pneg %p341
        $region78: #{tpu_custom_call.1} parent=39 // pred_check_branch
          %770 = sbr.rel (%p768) target = $region80
        $region79: #{tpu_custom_call.1} parent=39 // pred_region
          %p771 = scmp.lt.s32.totalorder %s41, 1
          %s772 = scalar_select %p771, %s41, 1
          %s773 = scalar_lea.vmem %s11, %s772
        $region80: #{tpu_custom_call.1} parent=39 // pred_fallthru
          _
        // Predicated region
        $region81: #{tpu_custom_call.1} parent=39 // pred_check
          %p774 = pneg %p367
        $region82: #{tpu_custom_call.1} parent=39 // pred_check_branch
          %776 = sbr.rel (%p774) target = $region84
        $region83: #{tpu_custom_call.1} parent=39 // pred_region
          %p777 = scmp.lt.s32.totalorder %s41, 1
          %s778 = scalar_select %p777, %s41, 1
          %s779 = scalar_lea.vmem %s12, %s778
        $region84: #{tpu_custom_call.1} parent=39 // pred_fallthru
          _
        // Predicated region
        $region85: #{tpu_custom_call.1} parent=39 // pred_check
          %p780 = pneg %p393
        $region86: #{tpu_custom_call.1} parent=39 // pred_check_branch
          %782 = sbr.rel (%p780) target = $region88
        $region87: #{tpu_custom_call.1} parent=39 // pred_region
          %p783 = scmp.lt.s32.totalorder %s41, 1
          %s784 = scalar_select %p783, %s41, 1
          %s785 = scalar_lea.vmem %s13, %s784
        $region88: #{tpu_custom_call.1} parent=39 // pred_fallthru
          _
        // Predicated region
        $region89: #{tpu_custom_call.1} parent=39 // pred_check
          %p786 = pneg %p419
        $region90: #{tpu_custom_call.1} parent=39 // pred_check_branch
          %788 = sbr.rel (%p786) target = $region92
        $region91: #{tpu_custom_call.1} parent=39 // pred_region
          %p789 = scmp.lt.s32.totalorder %s41, 1
          %s790 = scalar_select %p789, %s41, 1
          %s791 = smul.addr %s790, 64
          %s792 = smul.addr %s791, 4
          %s793 = scalar_lea.vmem %s14, %s792
        $region92: #{tpu_custom_call.1} parent=39 // pred_fallthru
          _
        // Predicated region
        $region93: #{tpu_custom_call.1} parent=39 // pred_check
          %p794 = pneg %p445
        $region94: #{tpu_custom_call.1} parent=39 // pred_check_branch
          %796 = sbr.rel (%p794) target = $region96
        $region95: #{tpu_custom_call.1} parent=39 // pred_region
          %p797 = scmp.lt.s32.totalorder %s41, 1
          %s798 = scalar_select %p797, %s41, 1
          %s799 = smul.addr %s798, 4
          %s800 = scalar_lea.vmem %s15, %s799
        $region96: #{tpu_custom_call.1} parent=39 // pred_fallthru
          _
        // Predicated region
        $region97: #{tpu_custom_call.1} parent=39 // pred_check
          %p801 = pneg %p471
        $region98: #{tpu_custom_call.1} parent=39 // pred_check_branch
          %803 = sbr.rel (%p801) target = $region100
        $region99: #{tpu_custom_call.1} parent=39 // pred_region
          %p804 = scmp.lt.s32.totalorder %s41, 1
          %s805 = scalar_select %p804, %s41, 1
          %s806 = smul.addr %s805, 64
          %s807 = smul.addr %s806, 4
          %s808 = scalar_lea.vmem %s16, %s807
        $region100: #{tpu_custom_call.1} parent=39 // pred_fallthru
          _
        // Predicated region
        $region101: #{tpu_custom_call.1} parent=39 // pred_check
          %p809 = pneg %p497
        $region102: #{tpu_custom_call.1} parent=39 // pred_check_branch
          %811 = sbr.rel (%p809) target = $region104
        $region103: #{tpu_custom_call.1} parent=39 // pred_region
          %p812 = scmp.lt.s32.totalorder %s41, 1
          %s813 = scalar_select %p812, %s41, 1
          %s814 = scalar_lea.vmem %s17, %s813
        $region104: #{tpu_custom_call.1} parent=39 // pred_fallthru
          _
        // Predicated region
        $region105: #{tpu_custom_call.1} parent=39 // pred_check
          %p815 = pneg %p523
        $region106: #{tpu_custom_call.1} parent=39 // pred_check_branch
          %817 = sbr.rel (%p815) target = $region108
        $region107: #{tpu_custom_call.1} parent=39 // pred_region
          %p818 = scmp.lt.s32.totalorder %s41, 1
          %s819 = scalar_select %p818, %s41, 1
          %s820 = scalar_lea.vmem %s18, %s819
        $region108: #{tpu_custom_call.1} parent=39 // pred_fallthru
          _
        // Predicated region
        $region109: #{tpu_custom_call.1} parent=39 // pred_check
          %p821 = pneg %p549
        $region110: #{tpu_custom_call.1} parent=39 // pred_check_branch
          %823 = sbr.rel (%p821) target = $region112
        $region111: #{tpu_custom_call.1} parent=39 // pred_region
          %p824 = scmp.lt.s32.totalorder %s41, 1
          %s825 = scalar_select %p824, %s41, 1
          %s826 = scalar_lea.vmem %s19, %s825
        $region112: #{tpu_custom_call.1} parent=39 // pred_fallthru
          _
      $region40: #{tpu_custom_call.1} parent=5 // pred_fallthru
        _
      %p827 = scmp.le.s32.totalorder 1, %s33
      %p828 = scmp.lt.s32.totalorder %s33, 5
      %p829 = pnand %p827, %p828
      %p830 = pneg %p829
      // Predicated region
      $region113: #{tpu_custom_call.1} parent=5 // pred_check
        _
      $region114: #{tpu_custom_call.1} parent=5 // pred_check_branch
        %832 = sbr.rel (%p829) target = $region116
      $region115: #{tpu_custom_call.1} parent=5 // pred_region
        %s833 = ssub.s32 %s33, 1
        %p834 = scmp.lt.s32.totalorder %s42, 1
        %s835 = scalar_select %p834, %s42, 1
        %s836 = smul.addr %s835, 4
        %s837 = scalar_lea.vmem %s0, %s836
        %p838 = pneg %p71
        %p839 = pneg %p68
        %p840 = scmp.lt.s32.totalorder %s42, 1
        %s841 = scalar_select %p840, %s42, 1
        %s842 = scalar_lea.vmem %s1, %s841
        %p843 = pneg %p97
        %p844 = pneg %p94
        %p845 = pneg %p118
        %p846 = pneg %p115
        %p847 = pneg %p139
        %p848 = pneg %p136
        %p849 = scmp.lt.s32.totalorder %s43, 1
        %s850 = scalar_select %p849, %s43, 1
        %s851 = smul.addr %s850, 64
        %s852 = smul.addr %s851, 4
        %s853 = scalar_lea.vmem %s4, %s852
        %p854 = pneg %p165
        %p855 = pneg %p162
        %p856 = scmp.lt.s32.totalorder %s43, 1
        %s857 = scalar_select %p856, %s43, 1
        %s858 = smul.addr %s857, 4
        %s859 = scalar_lea.vmem %s5, %s858
        %p860 = pneg %p191
        %p861 = pneg %p188
        %p862 = scmp.lt.s32.totalorder %s43, 1
        %s863 = scalar_select %p862, %s43, 1
        %s864 = smul.addr %s863, 64
        %s865 = smul.addr %s864, 4
        %s866 = scalar_lea.vmem %s6, %s865
        %p867 = pneg %p217
        %p868 = pneg %p214
        %p869 = scmp.lt.s32.totalorder %s43, 1
        %s870 = scalar_select %p869, %s43, 1
        %s871 = smul.addr %s870, 4
        %s872 = scalar_lea.vmem %s7, %s871
        %p873 = pneg %p243
        %p874 = pneg %p240
        %p875 = scmp.lt.s32.totalorder %s43, 1
        %s876 = scalar_select %p875, %s43, 1
        %s877 = smul.addr %s876, 64
        %s878 = smul.addr %s877, 4
        %s879 = scalar_lea.vmem %s8, %s878
        %p880 = pneg %p269
        %p881 = pneg %p266
        %p882 = scmp.lt.s32.totalorder %s43, 1
        %s883 = scalar_select %p882, %s43, 1
        %s884 = smul.addr %s883, 4
        %s885 = scalar_lea.vmem %s9, %s884
        %p886 = pneg %p295
        %p887 = pneg %p292
        %p888 = scmp.lt.s32.totalorder %s43, 1
        %s889 = scalar_select %p888, %s43, 1
        %s890 = smul.addr %s889, 16
        %s891 = smul.addr %s890, 4
        %s892 = scalar_lea.vmem %s10, %s891
        %p893 = pneg %p321
        %p894 = pneg %p318
        %p895 = scmp.lt.s32.totalorder %s43, 1
        %s896 = scalar_select %p895, %s43, 1
        %s897 = scalar_lea.vmem %s11, %s896
        %p898 = pneg %p347
        %p899 = pneg %p344
        %p900 = scmp.lt.s32.totalorder %s43, 1
        %s901 = scalar_select %p900, %s43, 1
        %s902 = scalar_lea.vmem %s12, %s901
        %p903 = pneg %p373
        %p904 = pneg %p370
        %p905 = scmp.lt.s32.totalorder %s43, 1
        %s906 = scalar_select %p905, %s43, 1
        %s907 = scalar_lea.vmem %s13, %s906
        %p908 = pneg %p399
        %p909 = pneg %p396
        %p910 = scmp.lt.s32.totalorder %s43, 1
        %s911 = scalar_select %p910, %s43, 1
        %s912 = smul.addr %s911, 64
        %s913 = smul.addr %s912, 4
        %s914 = scalar_lea.vmem %s14, %s913
        %p915 = pneg %p425
        %p916 = pneg %p422
        %p917 = scmp.lt.s32.totalorder %s43, 1
        %s918 = scalar_select %p917, %s43, 1
        %s919 = smul.addr %s918, 4
        %s920 = scalar_lea.vmem %s15, %s919
        %p921 = pneg %p451
        %p922 = pneg %p448
        %p923 = scmp.lt.s32.totalorder %s43, 1
        %s924 = scalar_select %p923, %s43, 1
        %s925 = smul.addr %s924, 64
        %s926 = smul.addr %s925, 4
        %s927 = scalar_lea.vmem %s16, %s926
        %p928 = pneg %p477
        %p929 = pneg %p474
        %p930 = scmp.lt.s32.totalorder %s43, 1
        %s931 = scalar_select %p930, %s43, 1
        %s932 = scalar_lea.vmem %s17, %s931
        %p933 = pneg %p503
        %p934 = pneg %p500
        %p935 = scmp.lt.s32.totalorder %s43, 1
        %s936 = scalar_select %p935, %s43, 1
        %s937 = scalar_lea.vmem %s18, %s936
        %p938 = pneg %p529
        %p939 = pneg %p526
        %p940 = scmp.lt.s32.totalorder %s43, 1
        %s941 = scalar_select %p940, %s43, 1
        %s942 = scalar_lea.vmem %s19, %s941
        %p943 = pneg %p555
        %p944 = pneg %p552
        %p945 = pneg %p576
        %p946 = pneg %p573
        %p947 = pneg %p597
        %p948 = pneg %p594
        %p949 = pneg %p618
        %p950 = pneg %p615
        %p951 = pneg %p639
        %p952 = pneg %p636
        %p953 = pneg %p665
        %p954 = pneg %p662
        %s955 = sand.u32 %s652, 1
        %s956 = scalar_lea.sflag [#allocation4], %s955
        %s957 = sand.u32 %s652, 1
        %s958 = scalar_lea.vmem [#allocation3], %s957
        %p959 = scmp.lt.s32.totalorder %s42, 1
        %s960 = scalar_select %p959, %s42, 1
        %s961 = smul.addr %s960, 4
        %s962 = scalar_lea.vmem %s0, %s961
        %p963 = scmp.lt.s32.totalorder %s42, 1
        %s964 = scalar_select %p963, %s42, 1
        %s965 = scalar_lea.vmem %s1, %s964
        %p966 = scmp.lt.s32.totalorder %s43, 1
        %s967 = scalar_select %p966, %s43, 1
        %s968 = smul.addr %s967, 64
        %s969 = smul.addr %s968, 4
        %s970 = scalar_lea.vmem %s4, %s969
        %p971 = scmp.lt.s32.totalorder %s43, 1
        %s972 = scalar_select %p971, %s43, 1
        %s973 = smul.addr %s972, 4
        %s974 = scalar_lea.vmem %s5, %s973
        %p975 = scmp.lt.s32.totalorder %s43, 1
        %s976 = scalar_select %p975, %s43, 1
        %s977 = smul.addr %s976, 64
        %s978 = smul.addr %s977, 4
        %s979 = scalar_lea.vmem %s6, %s978
        %p980 = scmp.lt.s32.totalorder %s43, 1
        %s981 = scalar_select %p980, %s43, 1
        %s982 = smul.addr %s981, 4
        %s983 = scalar_lea.vmem %s7, %s982
        %p984 = scmp.lt.s32.totalorder %s43, 1
        %s985 = scalar_select %p984, %s43, 1
        %s986 = smul.addr %s985, 64
        %s987 = smul.addr %s986, 4
        %s988 = scalar_lea.vmem %s8, %s987
        %p989 = scmp.lt.s32.totalorder %s43, 1
        %s990 = scalar_select %p989, %s43, 1
        %s991 = smul.addr %s990, 4
        %s992 = scalar_lea.vmem %s9, %s991
        %p993 = scmp.lt.s32.totalorder %s43, 1
        %s994 = scalar_select %p993, %s43, 1
        %s995 = smul.addr %s994, 16
        %s996 = smul.addr %s995, 4
        %s997 = scalar_lea.vmem %s10, %s996
        %p998 = scmp.lt.s32.totalorder %s43, 1
        %s999 = scalar_select %p998, %s43, 1
        %s1000 = scalar_lea.vmem %s11, %s999
        %p1001 = scmp.lt.s32.totalorder %s43, 1
        %s1002 = scalar_select %p1001, %s43, 1
        %s1003 = scalar_lea.vmem %s12, %s1002
        %p1004 = scmp.lt.s32.totalorder %s43, 1
        %s1005 = scalar_select %p1004, %s43, 1
        %s1006 = scalar_lea.vmem %s13, %s1005
        %p1007 = scmp.lt.s32.totalorder %s43, 1
        %s1008 = scalar_select %p1007, %s43, 1
        %s1009 = smul.addr %s1008, 64
        %s1010 = smul.addr %s1009, 4
        %s1011 = scalar_lea.vmem %s14, %s1010
        %p1012 = scmp.lt.s32.totalorder %s43, 1
        %s1013 = scalar_select %p1012, %s43, 1
        %s1014 = smul.addr %s1013, 4
        %s1015 = scalar_lea.vmem %s15, %s1014
        %p1016 = scmp.lt.s32.totalorder %s43, 1
        %s1017 = scalar_select %p1016, %s43, 1
        %s1018 = smul.addr %s1017, 64
        %s1019 = smul.addr %s1018, 4
        %s1020 = scalar_lea.vmem %s16, %s1019
        %p1021 = scmp.lt.s32.totalorder %s43, 1
        %s1022 = scalar_select %p1021, %s43, 1
        %s1023 = scalar_lea.vmem %s17, %s1022
        %p1024 = scmp.lt.s32.totalorder %s43, 1
        %s1025 = scalar_select %p1024, %s43, 1
        %s1026 = scalar_lea.vmem %s18, %s1025
        %p1027 = scmp.lt.s32.totalorder %s43, 1
        %s1028 = scalar_select %p1027, %s43, 1
        %s1029 = scalar_lea.vmem %s19, %s1028
        %p1031 = scmp.eq.s32.totalorder %s43, 0
        // Predicated region
        $region117: #{tpu_custom_call.1} parent=115 // pred_check
          %p1032 = pneg %p1031
        $region118: #{tpu_custom_call.1} parent=115 // pred_check_branch
          %1034 = sbr.rel (%p1032) target = $region120
        $region119: #{tpu_custom_call.1} parent=115 // pred_region
          %v1035 = vld [vmem:[%s962] sm:$0xf]
          %v1036 = vunpack.c.l.bf16 %v1035
          %v1037 = vld [vmem:[%s2] sm:$0x1]
          %v1038 = vld [vmem:[%s3] sm:$0x1]
          %1039 = vadd.xlane.f32.xlu0 %v1036
          %v1040 = vpop.xlane.xlu0 %1039
          %v1041 = vrcp.pop 128.0
          %v1042 = vmul.f32 128.0, %v1041
          %v1043 = vsub.f32 1.0, %v1042
          %v1044 = vmul.f32 %v1041, %v1043
          %v1045 = vadd.f32 %v1041, %v1044
          %vm1046 = vweird.f32 %v1041
          %v1047 = vsel %vm1046, %v1041, %v1045
          %v1048 = vmul.f32 %v1040, %v1047
          %v1049 = vsub.f32 %v1036, %v1048
          %v1050 = vmul.f32 %v1049, %v1049
          %1051 = vadd.xlane.f32.xlu0 %v1050
          %v1052 = vpop.xlane.xlu0 %1051
          %v1053 = vmul.f32 %v1052, %v1047
          %v1054 = vadd.f32 %v1053, 1e-12
          %v1055 = vrsqrt.pop %v1054
          %v1056 = vmul.f32 %v1055, %v1054
          %v1057 = vmul.f32 %v1056, %v1055
          %v1058 = vmul.f32 0.5, %v1057
          %v1059 = vsub.f32 1.5, %v1058
          %v1060 = vmul.f32 %v1055, %v1059
          %vm1061 = vweird.f32 %v1054
          %vm1062 = vweird.f32 %v1055
          %vm1063 = vmor %vm1061, %vm1062
          %v1064 = vsel %vm1063, %v1055, %v1060
          %v1065 = vmul.f32 %v1049, %v1064
          %v1067 = vperm.slane %v1037, 0
          %v1069 = vmul.f32 %v1065, %v1067
          %v1071 = vperm.slane %v1038, 0
          %v1073 = vadd.f32 %v1069, %v1071
          %1074 = vst [vmem:[#allocation2] sm:$0xff] %v1073
        $region120: #{tpu_custom_call.1} parent=115 // pred_fallthru
          _
        %v1075 = vld [vmem:[#allocation2] sm:$0xff]
        %v1076 = vpack.c.bf16 %v1075, %v1075
        %v1077 = vld [vmem:[%s970] sm:$0xf]
        %v1078 = vld [vmem:[%s970 + $0x4] sm:$0xf]
        %v1079 = vld [vmem:[%s970 + $0x8] sm:$0xf]
        %v1080 = vld [vmem:[%s970 + $0xc] sm:$0xf]
        %v1081 = vld [vmem:[%s970 + $0x10] sm:$0xf]
        %v1082 = vld [vmem:[%s970 + $0x14] sm:$0xf]
        %v1083 = vld [vmem:[%s970 + $0x18] sm:$0xf]
        %v1084 = vld [vmem:[%s970 + $0x1c] sm:$0xf]
        %v1085 = vld [vmem:[%s970 + $0x20] sm:$0xf]
        %v1086 = vld [vmem:[%s970 + $0x24] sm:$0xf]
        %v1087 = vld [vmem:[%s970 + $0x28] sm:$0xf]
        %v1088 = vld [vmem:[%s970 + $0x2c] sm:$0xf]
        %v1089 = vld [vmem:[%s970 + $0x30] sm:$0xf]
        %v1090 = vld [vmem:[%s970 + $0x34] sm:$0xf]
        %v1091 = vld [vmem:[%s970 + $0x38] sm:$0xf]
        %v1092 = vld [vmem:[%s970 + $0x3c] sm:$0xf]
        %v1093 = vld [vmem:[%s970 + $0x40] sm:$0xf]
        %v1094 = vld [vmem:[%s970 + $0x44] sm:$0xf]
        %v1095 = vld [vmem:[%s970 + $0x48] sm:$0xf]
        %v1096 = vld [vmem:[%s970 + $0x4c] sm:$0xf]
        %v1097 = vld [vmem:[%s970 + $0x50] sm:$0xf]
        %v1098 = vld [vmem:[%s970 + $0x54] sm:$0xf]
        %v1099 = vld [vmem:[%s970 + $0x58] sm:$0xf]
        %v1100 = vld [vmem:[%s970 + $0x5c] sm:$0xf]
        %v1101 = vld [vmem:[%s970 + $0x60] sm:$0xf]
        %v1102 = vld [vmem:[%s970 + $0x64] sm:$0xf]
        %v1103 = vld [vmem:[%s970 + $0x68] sm:$0xf]
        %v1104 = vld [vmem:[%s970 + $0x6c] sm:$0xf]
        %v1105 = vld [vmem:[%s970 + $0x70] sm:$0xf]
        %v1106 = vld [vmem:[%s970 + $0x74] sm:$0xf]
        %v1107 = vld [vmem:[%s970 + $0x78] sm:$0xf]
        %v1108 = vld [vmem:[%s970 + $0x7c] sm:$0xf]
        %v1109 = vld [vmem:[%s970 + $0x80] sm:$0xf]
        %v1110 = vld [vmem:[%s970 + $0x84] sm:$0xf]
        %v1111 = vld [vmem:[%s970 + $0x88] sm:$0xf]
        %v1112 = vld [vmem:[%s970 + $0x8c] sm:$0xf]
        %v1113 = vld [vmem:[%s970 + $0x90] sm:$0xf]
        %v1114 = vld [vmem:[%s970 + $0x94] sm:$0xf]
        %v1115 = vld [vmem:[%s970 + $0x98] sm:$0xf]
        %v1116 = vld [vmem:[%s970 + $0x9c] sm:$0xf]
        %v1117 = vld [vmem:[%s970 + $0xa0] sm:$0xf]
        %v1118 = vld [vmem:[%s970 + $0xa4] sm:$0xf]
        %v1119 = vld [vmem:[%s970 + $0xa8] sm:$0xf]
        %v1120 = vld [vmem:[%s970 + $0xac] sm:$0xf]
        %v1121 = vld [vmem:[%s970 + $0xb0] sm:$0xf]
        %v1122 = vld [vmem:[%s970 + $0xb4] sm:$0xf]
        %v1123 = vld [vmem:[%s970 + $0xb8] sm:$0xf]
        %v1124 = vld [vmem:[%s970 + $0xbc] sm:$0xf]
        %v1125 = vld [vmem:[%s970 + $0xc0] sm:$0xf]
        %v1126 = vld [vmem:[%s970 + $0xc4] sm:$0xf]
        %v1127 = vld [vmem:[%s970 + $0xc8] sm:$0xf]
        %v1128 = vld [vmem:[%s970 + $0xcc] sm:$0xf]
        %v1129 = vld [vmem:[%s970 + $0xd0] sm:$0xf]
        %v1130 = vld [vmem:[%s970 + $0xd4] sm:$0xf]
        %v1131 = vld [vmem:[%s970 + $0xd8] sm:$0xf]
        %v1132 = vld [vmem:[%s970 + $0xdc] sm:$0xf]
        %v1133 = vld [vmem:[%s970 + $0xe0] sm:$0xf]
        %v1134 = vld [vmem:[%s970 + $0xe4] sm:$0xf]
        %v1135 = vld [vmem:[%s970 + $0xe8] sm:$0xf]
        %v1136 = vld [vmem:[%s970 + $0xec] sm:$0xf]
        %v1137 = vld [vmem:[%s970 + $0xf0] sm:$0xf]
        %v1138 = vld [vmem:[%s970 + $0xf4] sm:$0xf]
        %v1139 = vld [vmem:[%s970 + $0xf8] sm:$0xf]
        %v1140 = vld [vmem:[%s970 + $0xfc] sm:$0xf]
        %v1141 = vld [vmem:[%s974] sm:$0x1]
        %v1142 = vld [vmem:[%s974 + $0x1] sm:$0x1]
        %v1143 = vld [vmem:[%s974 + $0x2] sm:$0x1]
        %v1144 = vld [vmem:[%s974 + $0x3] sm:$0x1]
        %v1149 = vperm.slane %v1141, 0
        %v1150 = vperm.slane %v1142, 0
        %v1151 = vperm.slane %v1143, 0
        %v1152 = vperm.slane %v1144, 0
        %v1173 = vunpack.c.l.b16 %v1077
        %v1174 = vunpack.c.l.b16 %v1078
        %v1175 = vunpack.c.l.b16 %v1079
        %v1176 = vunpack.c.l.b16 %v1080
        %v1177 = vunpack.c.l.b16 %v1081
        %v1178 = vunpack.c.l.b16 %v1082
        %v1179 = vunpack.c.l.b16 %v1083
        %v1180 = vunpack.c.l.b16 %v1084
        %v1181 = vunpack.c.l.b16 %v1085
        %v1182 = vunpack.c.l.b16 %v1086
        %v1183 = vunpack.c.l.b16 %v1087
        %v1184 = vunpack.c.l.b16 %v1088
        %v1185 = vunpack.c.l.b16 %v1089
        %v1186 = vunpack.c.l.b16 %v1090
        %v1187 = vunpack.c.l.b16 %v1091
        %v1188 = vunpack.c.l.b16 %v1092
        %v1189 = vpack.c.b16 %v1174, %v1173
        %v1190 = vpack.c.b16 %v1176, %v1175
        %v1191 = vpack.c.b16 %v1178, %v1177
        %v1192 = vpack.c.b16 %v1180, %v1179
        %v1193 = vpack.c.b16 %v1182, %v1181
        %v1194 = vpack.c.b16 %v1184, %v1183
        %v1195 = vpack.c.b16 %v1186, %v1185
        %v1196 = vpack.c.b16 %v1188, %v1187
        %1205 = vmatpush.bf16.msra.mxu0 %v1196
        %1206 = vmatpush.bf16.msra.mxu0 %v1195
        %1207 = vmatpush.bf16.msra.mxu0 %v1194
        %1208 = vmatpush.bf16.msra.mxu0 %v1193
        %1209 = vmatpush.bf16.msra.mxu0 %v1192
        %1210 = vmatpush.bf16.msra.mxu0 %v1191
        %1211 = vmatpush.bf16.msra.mxu0 %v1190
        %1212 = vmatpush.bf16.msra.mxu0 %v1189
        %1213 = vmatmul.bf16.gmra.mxu0 %v1076
        %v1214 = vpop.f32.mrf.mxu0
        %v1215 = vadd.f32 %v1149, %v1214
        %v1216 = vpop.f32.mrf.mxu0
        %1217 = vdwg.mxu0
        %v1234 = vunpack.c.l.b16 %v1093
        %v1235 = vunpack.c.l.b16 %v1094
        %v1236 = vunpack.c.l.b16 %v1095
        %v1237 = vunpack.c.l.b16 %v1096
        %v1238 = vunpack.c.l.b16 %v1097
        %v1239 = vunpack.c.l.b16 %v1098
        %v1240 = vunpack.c.l.b16 %v1099
        %v1241 = vunpack.c.l.b16 %v1100
        %v1242 = vunpack.c.l.b16 %v1101
        %v1243 = vunpack.c.l.b16 %v1102
        %v1244 = vunpack.c.l.b16 %v1103
        %v1245 = vunpack.c.l.b16 %v1104
        %v1246 = vunpack.c.l.b16 %v1105
        %v1247 = vunpack.c.l.b16 %v1106
        %v1248 = vunpack.c.l.b16 %v1107
        %v1249 = vunpack.c.l.b16 %v1108
        %v1250 = vpack.c.b16 %v1235, %v1234
        %v1251 = vpack.c.b16 %v1237, %v1236
        %v1252 = vpack.c.b16 %v1239, %v1238
        %v1253 = vpack.c.b16 %v1241, %v1240
        %v1254 = vpack.c.b16 %v1243, %v1242
        %v1255 = vpack.c.b16 %v1245, %v1244
        %v1256 = vpack.c.b16 %v1247, %v1246
        %v1257 = vpack.c.b16 %v1249, %v1248
        %1266 = vmatpush.bf16.msra.mxu0 %v1257
        %1267 = vmatpush.bf16.msra.mxu0 %v1256
        %1268 = vmatpush.bf16.msra.mxu0 %v1255
        %1269 = vmatpush.bf16.msra.mxu0 %v1254
        %1270 = vmatpush.bf16.msra.mxu0 %v1253
        %1271 = vmatpush.bf16.msra.mxu0 %v1252
        %1272 = vmatpush.bf16.msra.mxu0 %v1251
        %1273 = vmatpush.bf16.msra.mxu0 %v1250
        %1274 = vmatmul.bf16.gmra.mxu0 %v1076
        %v1275 = vpop.f32.mrf.mxu0
        %v1276 = vadd.f32 %v1150, %v1275
        %v1277 = vpop.f32.mrf.mxu0
        %1278 = vdwg.mxu0
        %v1295 = vunpack.c.l.b16 %v1109
        %v1296 = vunpack.c.l.b16 %v1110
        %v1297 = vunpack.c.l.b16 %v1111
        %v1298 = vunpack.c.l.b16 %v1112
        %v1299 = vunpack.c.l.b16 %v1113
        %v1300 = vunpack.c.l.b16 %v1114
        %v1301 = vunpack.c.l.b16 %v1115
        %v1302 = vunpack.c.l.b16 %v1116
        %v1303 = vunpack.c.l.b16 %v1117
        %v1304 = vunpack.c.l.b16 %v1118
        %v1305 = vunpack.c.l.b16 %v1119
        %v1306 = vunpack.c.l.b16 %v1120
        %v1307 = vunpack.c.l.b16 %v1121
        %v1308 = vunpack.c.l.b16 %v1122
        %v1309 = vunpack.c.l.b16 %v1123
        %v1310 = vunpack.c.l.b16 %v1124
        %v1311 = vpack.c.b16 %v1296, %v1295
        %v1312 = vpack.c.b16 %v1298, %v1297
        %v1313 = vpack.c.b16 %v1300, %v1299
        %v1314 = vpack.c.b16 %v1302, %v1301
        %v1315 = vpack.c.b16 %v1304, %v1303
        %v1316 = vpack.c.b16 %v1306, %v1305
        %v1317 = vpack.c.b16 %v1308, %v1307
        %v1318 = vpack.c.b16 %v1310, %v1309
        %1327 = vmatpush.bf16.msra.mxu0 %v1318
        %1328 = vmatpush.bf16.msra.mxu0 %v1317
        %1329 = vmatpush.bf16.msra.mxu0 %v1316
        %1330 = vmatpush.bf16.msra.mxu0 %v1315
        %1331 = vmatpush.bf16.msra.mxu0 %v1314
        %1332 = vmatpush.bf16.msra.mxu0 %v1313
        %1333 = vmatpush.bf16.msra.mxu0 %v1312
        %1334 = vmatpush.bf16.msra.mxu0 %v1311
        %1335 = vmatmul.bf16.gmra.mxu0 %v1076
        %v1336 = vpop.f32.mrf.mxu0
        %v1337 = vadd.f32 %v1151, %v1336
        %v1338 = vpop.f32.mrf.mxu0
        %1339 = vdwg.mxu0
        %v1356 = vunpack.c.l.b16 %v1125
        %v1357 = vunpack.c.l.b16 %v1126
        %v1358 = vunpack.c.l.b16 %v1127
        %v1359 = vunpack.c.l.b16 %v1128
        %v1360 = vunpack.c.l.b16 %v1129
        %v1361 = vunpack.c.l.b16 %v1130
        %v1362 = vunpack.c.l.b16 %v1131
        %v1363 = vunpack.c.l.b16 %v1132
        %v1364 = vunpack.c.l.b16 %v1133
        %v1365 = vunpack.c.l.b16 %v1134
        %v1366 = vunpack.c.l.b16 %v1135
        %v1367 = vunpack.c.l.b16 %v1136
        %v1368 = vunpack.c.l.b16 %v1137
        %v1369 = vunpack.c.l.b16 %v1138
        %v1370 = vunpack.c.l.b16 %v1139
        %v1371 = vunpack.c.l.b16 %v1140
        %v1372 = vpack.c.b16 %v1357, %v1356
        %v1373 = vpack.c.b16 %v1359, %v1358
        %v1374 = vpack.c.b16 %v1361, %v1360
        %v1375 = vpack.c.b16 %v1363, %v1362
        %v1376 = vpack.c.b16 %v1365, %v1364
        %v1377 = vpack.c.b16 %v1367, %v1366
        %v1378 = vpack.c.b16 %v1369, %v1368
        %v1379 = vpack.c.b16 %v1371, %v1370
        %1388 = vmatpush.bf16.msra.mxu0 %v1379
        %1389 = vmatpush.bf16.msra.mxu0 %v1378
        %1390 = vmatpush.bf16.msra.mxu0 %v1377
        %1391 = vmatpush.bf16.msra.mxu0 %v1376
        %1392 = vmatpush.bf16.msra.mxu0 %v1375
        %1393 = vmatpush.bf16.msra.mxu0 %v1374
        %1394 = vmatpush.bf16.msra.mxu0 %v1373
        %1395 = vmatpush.bf16.msra.mxu0 %v1372
        %1396 = vmatmul.bf16.gmra.mxu0 %v1076
        %v1397 = vpop.f32.mrf.mxu0
        %v1398 = vadd.f32 %v1152, %v1397
        %v1399 = vpop.f32.mrf.mxu0
        %1400 = vdwg.mxu0
        %v1401 = vld [vmem:[%s979] sm:$0xf]
        %v1402 = vld [vmem:[%s979 + $0x4] sm:$0xf]
        %v1403 = vld [vmem:[%s979 + $0x8] sm:$0xf]
        %v1404 = vld [vmem:[%s979 + $0xc] sm:$0xf]
        %v1405 = vld [vmem:[%s979 + $0x10] sm:$0xf]
        %v1406 = vld [vmem:[%s979 + $0x14] sm:$0xf]
        %v1407 = vld [vmem:[%s979 + $0x18] sm:$0xf]
        %v1408 = vld [vmem:[%s979 + $0x1c] sm:$0xf]
        %v1409 = vld [vmem:[%s979 + $0x20] sm:$0xf]
        %v1410 = vld [vmem:[%s979 + $0x24] sm:$0xf]
        %v1411 = vld [vmem:[%s979 + $0x28] sm:$0xf]
        %v1412 = vld [vmem:[%s979 + $0x2c] sm:$0xf]
        %v1413 = vld [vmem:[%s979 + $0x30] sm:$0xf]
        %v1414 = vld [vmem:[%s979 + $0x34] sm:$0xf]
        %v1415 = vld [vmem:[%s979 + $0x38] sm:$0xf]
        %v1416 = vld [vmem:[%s979 + $0x3c] sm:$0xf]
        %v1417 = vld [vmem:[%s979 + $0x40] sm:$0xf]
        %v1418 = vld [vmem:[%s979 + $0x44] sm:$0xf]
        %v1419 = vld [vmem:[%s979 + $0x48] sm:$0xf]
        %v1420 = vld [vmem:[%s979 + $0x4c] sm:$0xf]
        %v1421 = vld [vmem:[%s979 + $0x50] sm:$0xf]
        %v1422 = vld [vmem:[%s979 + $0x54] sm:$0xf]
        %v1423 = vld [vmem:[%s979 + $0x58] sm:$0xf]
        %v1424 = vld [vmem:[%s979 + $0x5c] sm:$0xf]
        %v1425 = vld [vmem:[%s979 + $0x60] sm:$0xf]
        %v1426 = vld [vmem:[%s979 + $0x64] sm:$0xf]
        %v1427 = vld [vmem:[%s979 + $0x68] sm:$0xf]
        %v1428 = vld [vmem:[%s979 + $0x6c] sm:$0xf]
        %v1429 = vld [vmem:[%s979 + $0x70] sm:$0xf]
        %v1430 = vld [vmem:[%s979 + $0x74] sm:$0xf]
        %v1431 = vld [vmem:[%s979 + $0x78] sm:$0xf]
        %v1432 = vld [vmem:[%s979 + $0x7c] sm:$0xf]
        %v1433 = vld [vmem:[%s979 + $0x80] sm:$0xf]
        %v1434 = vld [vmem:[%s979 + $0x84] sm:$0xf]
        %v1435 = vld [vmem:[%s979 + $0x88] sm:$0xf]
        %v1436 = vld [vmem:[%s979 + $0x8c] sm:$0xf]
        %v1437 = vld [vmem:[%s979 + $0x90] sm:$0xf]
        %v1438 = vld [vmem:[%s979 + $0x94] sm:$0xf]
        %v1439 = vld [vmem:[%s979 + $0x98] sm:$0xf]
        %v1440 = vld [vmem:[%s979 + $0x9c] sm:$0xf]
        %v1441 = vld [vmem:[%s979 + $0xa0] sm:$0xf]
        %v1442 = vld [vmem:[%s979 + $0xa4] sm:$0xf]
        %v1443 = vld [vmem:[%s979 + $0xa8] sm:$0xf]
        %v1444 = vld [vmem:[%s979 + $0xac] sm:$0xf]
        %v1445 = vld [vmem:[%s979 + $0xb0] sm:$0xf]
        %v1446 = vld [vmem:[%s979 + $0xb4] sm:$0xf]
        %v1447 = vld [vmem:[%s979 + $0xb8] sm:$0xf]
        %v1448 = vld [vmem:[%s979 + $0xbc] sm:$0xf]
        %v1449 = vld [vmem:[%s979 + $0xc0] sm:$0xf]
        %v1450 = vld [vmem:[%s979 + $0xc4] sm:$0xf]
        %v1451 = vld [vmem:[%s979 + $0xc8] sm:$0xf]
        %v1452 = vld [vmem:[%s979 + $0xcc] sm:$0xf]
        %v1453 = vld [vmem:[%s979 + $0xd0] sm:$0xf]
        %v1454 = vld [vmem:[%s979 + $0xd4] sm:$0xf]
        %v1455 = vld [vmem:[%s979 + $0xd8] sm:$0xf]
        %v1456 = vld [vmem:[%s979 + $0xdc] sm:$0xf]
        %v1457 = vld [vmem:[%s979 + $0xe0] sm:$0xf]
        %v1458 = vld [vmem:[%s979 + $0xe4] sm:$0xf]
        %v1459 = vld [vmem:[%s979 + $0xe8] sm:$0xf]
        %v1460 = vld [vmem:[%s979 + $0xec] sm:$0xf]
        %v1461 = vld [vmem:[%s979 + $0xf0] sm:$0xf]
        %v1462 = vld [vmem:[%s979 + $0xf4] sm:$0xf]
        %v1463 = vld [vmem:[%s979 + $0xf8] sm:$0xf]
        %v1464 = vld [vmem:[%s979 + $0xfc] sm:$0xf]
        %v1465 = vld [vmem:[%s983] sm:$0x1]
        %v1466 = vld [vmem:[%s983 + $0x1] sm:$0x1]
        %v1467 = vld [vmem:[%s983 + $0x2] sm:$0x1]
        %v1468 = vld [vmem:[%s983 + $0x3] sm:$0x1]
        %v1473 = vperm.slane %v1465, 0
        %v1474 = vperm.slane %v1466, 0
        %v1475 = vperm.slane %v1467, 0
        %v1476 = vperm.slane %v1468, 0
        %v1497 = vunpack.c.l.b16 %v1401
        %v1498 = vunpack.c.l.b16 %v1402
        %v1499 = vunpack.c.l.b16 %v1403
        %v1500 = vunpack.c.l.b16 %v1404
        %v1501 = vunpack.c.l.b16 %v1405
        %v1502 = vunpack.c.l.b16 %v1406
        %v1503 = vunpack.c.l.b16 %v1407
        %v1504 = vunpack.c.l.b16 %v1408
        %v1505 = vunpack.c.l.b16 %v1409
        %v1506 = vunpack.c.l.b16 %v1410
        %v1507 = vunpack.c.l.b16 %v1411
        %v1508 = vunpack.c.l.b16 %v1412
        %v1509 = vunpack.c.l.b16 %v1413
        %v1510 = vunpack.c.l.b16 %v1414
        %v1511 = vunpack.c.l.b16 %v1415
        %v1512 = vunpack.c.l.b16 %v1416
        %v1513 = vpack.c.b16 %v1498, %v1497
        %v1514 = vpack.c.b16 %v1500, %v1499
        %v1515 = vpack.c.b16 %v1502, %v1501
        %v1516 = vpack.c.b16 %v1504, %v1503
        %v1517 = vpack.c.b16 %v1506, %v1505
        %v1518 = vpack.c.b16 %v1508, %v1507
        %v1519 = vpack.c.b16 %v1510, %v1509
        %v1520 = vpack.c.b16 %v1512, %v1511
        %1529 = vmatpush.bf16.msra.mxu0 %v1520
        %1530 = vmatpush.bf16.msra.mxu0 %v1519
        %1531 = vmatpush.bf16.msra.mxu0 %v1518
        %1532 = vmatpush.bf16.msra.mxu0 %v1517
        %1533 = vmatpush.bf16.msra.mxu0 %v1516
        %1534 = vmatpush.bf16.msra.mxu0 %v1515
        %1535 = vmatpush.bf16.msra.mxu0 %v1514
        %1536 = vmatpush.bf16.msra.mxu0 %v1513
        %1537 = vmatmul.bf16.gmra.mxu0 %v1076
        %v1538 = vpop.f32.mrf.mxu0
        %v1539 = vadd.f32 %v1473, %v1538
        %v1540 = vpop.f32.mrf.mxu0
        %1541 = vdwg.mxu0
        %v1558 = vunpack.c.l.b16 %v1417
        %v1559 = vunpack.c.l.b16 %v1418
        %v1560 = vunpack.c.l.b16 %v1419
        %v1561 = vunpack.c.l.b16 %v1420
        %v1562 = vunpack.c.l.b16 %v1421
        %v1563 = vunpack.c.l.b16 %v1422
        %v1564 = vunpack.c.l.b16 %v1423
        %v1565 = vunpack.c.l.b16 %v1424
        %v1566 = vunpack.c.l.b16 %v1425
        %v1567 = vunpack.c.l.b16 %v1426
        %v1568 = vunpack.c.l.b16 %v1427
        %v1569 = vunpack.c.l.b16 %v1428
        %v1570 = vunpack.c.l.b16 %v1429
        %v1571 = vunpack.c.l.b16 %v1430
        %v1572 = vunpack.c.l.b16 %v1431
        %v1573 = vunpack.c.l.b16 %v1432
        %v1574 = vpack.c.b16 %v1559, %v1558
        %v1575 = vpack.c.b16 %v1561, %v1560
        %v1576 = vpack.c.b16 %v1563, %v1562
        %v1577 = vpack.c.b16 %v1565, %v1564
        %v1578 = vpack.c.b16 %v1567, %v1566
        %v1579 = vpack.c.b16 %v1569, %v1568
        %v1580 = vpack.c.b16 %v1571, %v1570
        %v1581 = vpack.c.b16 %v1573, %v1572
        %1590 = vmatpush.bf16.msra.mxu0 %v1581
        %1591 = vmatpush.bf16.msra.mxu0 %v1580
        %1592 = vmatpush.bf16.msra.mxu0 %v1579
        %1593 = vmatpush.bf16.msra.mxu0 %v1578
        %1594 = vmatpush.bf16.msra.mxu0 %v1577
        %1595 = vmatpush.bf16.msra.mxu0 %v1576
        %1596 = vmatpush.bf16.msra.mxu0 %v1575
        %1597 = vmatpush.bf16.msra.mxu0 %v1574
        %1598 = vmatmul.bf16.gmra.mxu0 %v1076
        %v1599 = vpop.f32.mrf.mxu0
        %v1600 = vadd.f32 %v1474, %v1599
        %v1601 = vpop.f32.mrf.mxu0
        %1602 = vdwg.mxu0
        %v1619 = vunpack.c.l.b16 %v1433
        %v1620 = vunpack.c.l.b16 %v1434
        %v1621 = vunpack.c.l.b16 %v1435
        %v1622 = vunpack.c.l.b16 %v1436
        %v1623 = vunpack.c.l.b16 %v1437
        %v1624 = vunpack.c.l.b16 %v1438
        %v1625 = vunpack.c.l.b16 %v1439
        %v1626 = vunpack.c.l.b16 %v1440
        %v1627 = vunpack.c.l.b16 %v1441
        %v1628 = vunpack.c.l.b16 %v1442
        %v1629 = vunpack.c.l.b16 %v1443
        %v1630 = vunpack.c.l.b16 %v1444
        %v1631 = vunpack.c.l.b16 %v1445
        %v1632 = vunpack.c.l.b16 %v1446
        %v1633 = vunpack.c.l.b16 %v1447
        %v1634 = vunpack.c.l.b16 %v1448
        %v1635 = vpack.c.b16 %v1620, %v1619
        %v1636 = vpack.c.b16 %v1622, %v1621
        %v1637 = vpack.c.b16 %v1624, %v1623
        %v1638 = vpack.c.b16 %v1626, %v1625
        %v1639 = vpack.c.b16 %v1628, %v1627
        %v1640 = vpack.c.b16 %v1630, %v1629
        %v1641 = vpack.c.b16 %v1632, %v1631
        %v1642 = vpack.c.b16 %v1634, %v1633
        %1651 = vmatpush.bf16.msra.mxu0 %v1642
        %1652 = vmatpush.bf16.msra.mxu0 %v1641
        %1653 = vmatpush.bf16.msra.mxu0 %v1640
        %1654 = vmatpush.bf16.msra.mxu0 %v1639
        %1655 = vmatpush.bf16.msra.mxu0 %v1638
        %1656 = vmatpush.bf16.msra.mxu0 %v1637
        %1657 = vmatpush.bf16.msra.mxu0 %v1636
        %1658 = vmatpush.bf16.msra.mxu0 %v1635
        %1659 = vmatmul.bf16.gmra.mxu0 %v1076
        %v1660 = vpop.f32.mrf.mxu0
        %v1661 = vadd.f32 %v1475, %v1660
        %v1662 = vpop.f32.mrf.mxu0
        %1663 = vdwg.mxu0
        %v1680 = vunpack.c.l.b16 %v1449
        %v1681 = vunpack.c.l.b16 %v1450
        %v1682 = vunpack.c.l.b16 %v1451
        %v1683 = vunpack.c.l.b16 %v1452
        %v1684 = vunpack.c.l.b16 %v1453
        %v1685 = vunpack.c.l.b16 %v1454
        %v1686 = vunpack.c.l.b16 %v1455
        %v1687 = vunpack.c.l.b16 %v1456
        %v1688 = vunpack.c.l.b16 %v1457
        %v1689 = vunpack.c.l.b16 %v1458
        %v1690 = vunpack.c.l.b16 %v1459
        %v1691 = vunpack.c.l.b16 %v1460
        %v1692 = vunpack.c.l.b16 %v1461
        %v1693 = vunpack.c.l.b16 %v1462
        %v1694 = vunpack.c.l.b16 %v1463
        %v1695 = vunpack.c.l.b16 %v1464
        %v1696 = vpack.c.b16 %v1681, %v1680
        %v1697 = vpack.c.b16 %v1683, %v1682
        %v1698 = vpack.c.b16 %v1685, %v1684
        %v1699 = vpack.c.b16 %v1687, %v1686
        %v1700 = vpack.c.b16 %v1689, %v1688
        %v1701 = vpack.c.b16 %v1691, %v1690
        %v1702 = vpack.c.b16 %v1693, %v1692
        %v1703 = vpack.c.b16 %v1695, %v1694
        %1712 = vmatpush.bf16.msra.mxu0 %v1703
        %1713 = vmatpush.bf16.msra.mxu0 %v1702
        %1714 = vmatpush.bf16.msra.mxu0 %v1701
        %1715 = vmatpush.bf16.msra.mxu0 %v1700
        %1716 = vmatpush.bf16.msra.mxu0 %v1699
        %1717 = vmatpush.bf16.msra.mxu0 %v1698
        %1718 = vmatpush.bf16.msra.mxu0 %v1697
        %1719 = vmatpush.bf16.msra.mxu0 %v1696
        %1720 = vmatmul.bf16.gmra.mxu0 %v1076
        %v1721 = vpop.f32.mrf.mxu0
        %v1722 = vadd.f32 %v1476, %v1721
        %v1723 = vpop.f32.mrf.mxu0
        %1724 = vdwg.mxu0
        %v1725 = vld [vmem:[%s988] sm:$0xf]
        %v1726 = vld [vmem:[%s988 + $0x4] sm:$0xf]
        %v1727 = vld [vmem:[%s988 + $0x8] sm:$0xf]
        %v1728 = vld [vmem:[%s988 + $0xc] sm:$0xf]
        %v1729 = vld [vmem:[%s988 + $0x10] sm:$0xf]
        %v1730 = vld [vmem:[%s988 + $0x14] sm:$0xf]
        %v1731 = vld [vmem:[%s988 + $0x18] sm:$0xf]
        %v1732 = vld [vmem:[%s988 + $0x1c] sm:$0xf]
        %v1733 = vld [vmem:[%s988 + $0x20] sm:$0xf]
        %v1734 = vld [vmem:[%s988 + $0x24] sm:$0xf]
        %v1735 = vld [vmem:[%s988 + $0x28] sm:$0xf]
        %v1736 = vld [vmem:[%s988 + $0x2c] sm:$0xf]
        %v1737 = vld [vmem:[%s988 + $0x30] sm:$0xf]
        %v1738 = vld [vmem:[%s988 + $0x34] sm:$0xf]
        %v1739 = vld [vmem:[%s988 + $0x38] sm:$0xf]
        %v1740 = vld [vmem:[%s988 + $0x3c] sm:$0xf]
        %v1741 = vld [vmem:[%s988 + $0x40] sm:$0xf]
        %v1742 = vld [vmem:[%s988 + $0x44] sm:$0xf]
        %v1743 = vld [vmem:[%s988 + $0x48] sm:$0xf]
        %v1744 = vld [vmem:[%s988 + $0x4c] sm:$0xf]
        %v1745 = vld [vmem:[%s988 + $0x50] sm:$0xf]
        %v1746 = vld [vmem:[%s988 + $0x54] sm:$0xf]
        %v1747 = vld [vmem:[%s988 + $0x58] sm:$0xf]
        %v1748 = vld [vmem:[%s988 + $0x5c] sm:$0xf]
        %v1749 = vld [vmem:[%s988 + $0x60] sm:$0xf]
        %v1750 = vld [vmem:[%s988 + $0x64] sm:$0xf]
        %v1751 = vld [vmem:[%s988 + $0x68] sm:$0xf]
        %v1752 = vld [vmem:[%s988 + $0x6c] sm:$0xf]
        %v1753 = vld [vmem:[%s988 + $0x70] sm:$0xf]
        %v1754 = vld [vmem:[%s988 + $0x74] sm:$0xf]
        %v1755 = vld [vmem:[%s988 + $0x78] sm:$0xf]
        %v1756 = vld [vmem:[%s988 + $0x7c] sm:$0xf]
        %v1757 = vld [vmem:[%s988 + $0x80] sm:$0xf]
        %v1758 = vld [vmem:[%s988 + $0x84] sm:$0xf]
        %v1759 = vld [vmem:[%s988 + $0x88] sm:$0xf]
        %v1760 = vld [vmem:[%s988 + $0x8c] sm:$0xf]
        %v1761 = vld [vmem:[%s988 + $0x90] sm:$0xf]
        %v1762 = vld [vmem:[%s988 + $0x94] sm:$0xf]
        %v1763 = vld [vmem:[%s988 + $0x98] sm:$0xf]
        %v1764 = vld [vmem:[%s988 + $0x9c] sm:$0xf]
        %v1765 = vld [vmem:[%s988 + $0xa0] sm:$0xf]
        %v1766 = vld [vmem:[%s988 + $0xa4] sm:$0xf]
        %v1767 = vld [vmem:[%s988 + $0xa8] sm:$0xf]
        %v1768 = vld [vmem:[%s988 + $0xac] sm:$0xf]
        %v1769 = vld [vmem:[%s988 + $0xb0] sm:$0xf]
        %v1770 = vld [vmem:[%s988 + $0xb4] sm:$0xf]
        %v1771 = vld [vmem:[%s988 + $0xb8] sm:$0xf]
        %v1772 = vld [vmem:[%s988 + $0xbc] sm:$0xf]
        %v1773 = vld [vmem:[%s988 + $0xc0] sm:$0xf]
        %v1774 = vld [vmem:[%s988 + $0xc4] sm:$0xf]
        %v1775 = vld [vmem:[%s988 + $0xc8] sm:$0xf]
        %v1776 = vld [vmem:[%s988 + $0xcc] sm:$0xf]
        %v1777 = vld [vmem:[%s988 + $0xd0] sm:$0xf]
        %v1778 = vld [vmem:[%s988 + $0xd4] sm:$0xf]
        %v1779 = vld [vmem:[%s988 + $0xd8] sm:$0xf]
        %v1780 = vld [vmem:[%s988 + $0xdc] sm:$0xf]
        %v1781 = vld [vmem:[%s988 + $0xe0] sm:$0xf]
        %v1782 = vld [vmem:[%s988 + $0xe4] sm:$0xf]
        %v1783 = vld [vmem:[%s988 + $0xe8] sm:$0xf]
        %v1784 = vld [vmem:[%s988 + $0xec] sm:$0xf]
        %v1785 = vld [vmem:[%s988 + $0xf0] sm:$0xf]
        %v1786 = vld [vmem:[%s988 + $0xf4] sm:$0xf]
        %v1787 = vld [vmem:[%s988 + $0xf8] sm:$0xf]
        %v1788 = vld [vmem:[%s988 + $0xfc] sm:$0xf]
        %v1789 = vld [vmem:[%s992] sm:$0x1]
        %v1790 = vld [vmem:[%s992 + $0x1] sm:$0x1]
        %v1791 = vld [vmem:[%s992 + $0x2] sm:$0x1]
        %v1792 = vld [vmem:[%s992 + $0x3] sm:$0x1]
        %v1797 = vperm.slane %v1789, 0
        %v1798 = vperm.slane %v1790, 0
        %v1799 = vperm.slane %v1791, 0
        %v1800 = vperm.slane %v1792, 0
        %v1821 = vunpack.c.l.b16 %v1725
        %v1822 = vunpack.c.l.b16 %v1726
        %v1823 = vunpack.c.l.b16 %v1727
        %v1824 = vunpack.c.l.b16 %v1728
        %v1825 = vunpack.c.l.b16 %v1729
        %v1826 = vunpack.c.l.b16 %v1730
        %v1827 = vunpack.c.l.b16 %v1731
        %v1828 = vunpack.c.l.b16 %v1732
        %v1829 = vunpack.c.l.b16 %v1733
        %v1830 = vunpack.c.l.b16 %v1734
        %v1831 = vunpack.c.l.b16 %v1735
        %v1832 = vunpack.c.l.b16 %v1736
        %v1833 = vunpack.c.l.b16 %v1737
        %v1834 = vunpack.c.l.b16 %v1738
        %v1835 = vunpack.c.l.b16 %v1739
        %v1836 = vunpack.c.l.b16 %v1740
        %v1837 = vpack.c.b16 %v1822, %v1821
        %v1838 = vpack.c.b16 %v1824, %v1823
        %v1839 = vpack.c.b16 %v1826, %v1825
        %v1840 = vpack.c.b16 %v1828, %v1827
        %v1841 = vpack.c.b16 %v1830, %v1829
        %v1842 = vpack.c.b16 %v1832, %v1831
        %v1843 = vpack.c.b16 %v1834, %v1833
        %v1844 = vpack.c.b16 %v1836, %v1835
        %1853 = vmatpush.bf16.msra.mxu0 %v1844
        %1854 = vmatpush.bf16.msra.mxu0 %v1843
        %1855 = vmatpush.bf16.msra.mxu0 %v1842
        %1856 = vmatpush.bf16.msra.mxu0 %v1841
        %1857 = vmatpush.bf16.msra.mxu0 %v1840
        %1858 = vmatpush.bf16.msra.mxu0 %v1839
        %1859 = vmatpush.bf16.msra.mxu0 %v1838
        %1860 = vmatpush.bf16.msra.mxu0 %v1837
        %1861 = vmatmul.bf16.gmra.mxu0 %v1076
        %v1862 = vpop.f32.mrf.mxu0
        %v1863 = vadd.f32 %v1797, %v1862
        %v1864 = vpop.f32.mrf.mxu0
        %1865 = vdwg.mxu0
        %v1882 = vunpack.c.l.b16 %v1741
        %v1883 = vunpack.c.l.b16 %v1742
        %v1884 = vunpack.c.l.b16 %v1743
        %v1885 = vunpack.c.l.b16 %v1744
        %v1886 = vunpack.c.l.b16 %v1745
        %v1887 = vunpack.c.l.b16 %v1746
        %v1888 = vunpack.c.l.b16 %v1747
        %v1889 = vunpack.c.l.b16 %v1748
        %v1890 = vunpack.c.l.b16 %v1749
        %v1891 = vunpack.c.l.b16 %v1750
        %v1892 = vunpack.c.l.b16 %v1751
        %v1893 = vunpack.c.l.b16 %v1752
        %v1894 = vunpack.c.l.b16 %v1753
        %v1895 = vunpack.c.l.b16 %v1754
        %v1896 = vunpack.c.l.b16 %v1755
        %v1897 = vunpack.c.l.b16 %v1756
        %v1898 = vpack.c.b16 %v1883, %v1882
        %v1899 = vpack.c.b16 %v1885, %v1884
        %v1900 = vpack.c.b16 %v1887, %v1886
        %v1901 = vpack.c.b16 %v1889, %v1888
        %v1902 = vpack.c.b16 %v1891, %v1890
        %v1903 = vpack.c.b16 %v1893, %v1892
        %v1904 = vpack.c.b16 %v1895, %v1894
        %v1905 = vpack.c.b16 %v1897, %v1896
        %1914 = vmatpush.bf16.msra.mxu0 %v1905
        %1915 = vmatpush.bf16.msra.mxu0 %v1904
        %1916 = vmatpush.bf16.msra.mxu0 %v1903
        %1917 = vmatpush.bf16.msra.mxu0 %v1902
        %1918 = vmatpush.bf16.msra.mxu0 %v1901
        %1919 = vmatpush.bf16.msra.mxu0 %v1900
        %1920 = vmatpush.bf16.msra.mxu0 %v1899
        %1921 = vmatpush.bf16.msra.mxu0 %v1898
        %1922 = vmatmul.bf16.gmra.mxu0 %v1076
        %v1923 = vpop.f32.mrf.mxu0
        %v1924 = vadd.f32 %v1798, %v1923
        %v1925 = vpop.f32.mrf.mxu0
        %1926 = vdwg.mxu0
        %v1943 = vunpack.c.l.b16 %v1757
        %v1944 = vunpack.c.l.b16 %v1758
        %v1945 = vunpack.c.l.b16 %v1759
        %v1946 = vunpack.c.l.b16 %v1760
        %v1947 = vunpack.c.l.b16 %v1761
        %v1948 = vunpack.c.l.b16 %v1762
        %v1949 = vunpack.c.l.b16 %v1763
        %v1950 = vunpack.c.l.b16 %v1764
        %v1951 = vunpack.c.l.b16 %v1765
        %v1952 = vunpack.c.l.b16 %v1766
        %v1953 = vunpack.c.l.b16 %v1767
        %v1954 = vunpack.c.l.b16 %v1768
        %v1955 = vunpack.c.l.b16 %v1769
        %v1956 = vunpack.c.l.b16 %v1770
        %v1957 = vunpack.c.l.b16 %v1771
        %v1958 = vunpack.c.l.b16 %v1772
        %v1959 = vpack.c.b16 %v1944, %v1943
        %v1960 = vpack.c.b16 %v1946, %v1945
        %v1961 = vpack.c.b16 %v1948, %v1947
        %v1962 = vpack.c.b16 %v1950, %v1949
        %v1963 = vpack.c.b16 %v1952, %v1951
        %v1964 = vpack.c.b16 %v1954, %v1953
        %v1965 = vpack.c.b16 %v1956, %v1955
        %v1966 = vpack.c.b16 %v1958, %v1957
        %1975 = vmatpush.bf16.msra.mxu0 %v1966
        %1976 = vmatpush.bf16.msra.mxu0 %v1965
        %1977 = vmatpush.bf16.msra.mxu0 %v1964
        %1978 = vmatpush.bf16.msra.mxu0 %v1963
        %1979 = vmatpush.bf16.msra.mxu0 %v1962
        %1980 = vmatpush.bf16.msra.mxu0 %v1961
        %1981 = vmatpush.bf16.msra.mxu0 %v1960
        %1982 = vmatpush.bf16.msra.mxu0 %v1959
        %1983 = vmatmul.bf16.gmra.mxu0 %v1076
        %v1984 = vpop.f32.mrf.mxu0
        %v1985 = vadd.f32 %v1799, %v1984
        %v1986 = vpop.f32.mrf.mxu0
        %1987 = vdwg.mxu0
        %v2004 = vunpack.c.l.b16 %v1773
        %v2005 = vunpack.c.l.b16 %v1774
        %v2006 = vunpack.c.l.b16 %v1775
        %v2007 = vunpack.c.l.b16 %v1776
        %v2008 = vunpack.c.l.b16 %v1777
        %v2009 = vunpack.c.l.b16 %v1778
        %v2010 = vunpack.c.l.b16 %v1779
        %v2011 = vunpack.c.l.b16 %v1780
        %v2012 = vunpack.c.l.b16 %v1781
        %v2013 = vunpack.c.l.b16 %v1782
        %v2014 = vunpack.c.l.b16 %v1783
        %v2015 = vunpack.c.l.b16 %v1784
        %v2016 = vunpack.c.l.b16 %v1785
        %v2017 = vunpack.c.l.b16 %v1786
        %v2018 = vunpack.c.l.b16 %v1787
        %v2019 = vunpack.c.l.b16 %v1788
        %v2020 = vpack.c.b16 %v2005, %v2004
        %v2021 = vpack.c.b16 %v2007, %v2006
        %v2022 = vpack.c.b16 %v2009, %v2008
        %v2023 = vpack.c.b16 %v2011, %v2010
        %v2024 = vpack.c.b16 %v2013, %v2012
        %v2025 = vpack.c.b16 %v2015, %v2014
        %v2026 = vpack.c.b16 %v2017, %v2016
        %v2027 = vpack.c.b16 %v2019, %v2018
        %2036 = vmatpush.bf16.msra.mxu0 %v2027
        %2037 = vmatpush.bf16.msra.mxu0 %v2026
        %2038 = vmatpush.bf16.msra.mxu0 %v2025
        %2039 = vmatpush.bf16.msra.mxu0 %v2024
        %2040 = vmatpush.bf16.msra.mxu0 %v2023
        %2041 = vmatpush.bf16.msra.mxu0 %v2022
        %2042 = vmatpush.bf16.msra.mxu0 %v2021
        %2043 = vmatpush.bf16.msra.mxu0 %v2020
        %2044 = vmatmul.bf16.gmra.mxu0 %v1076
        %v2045 = vpop.f32.mrf.mxu0
        %v2046 = vadd.f32 %v1800, %v2045
        %v2047 = vpop.f32.mrf.mxu0
        %2048 = vdwg.mxu0
        %v2049 = vpack.c.bf16 %v1215, %v1215
        %v2050 = vpack.c.bf16 %v1276, %v1276
        %v2051 = vpack.c.bf16 %v1337, %v1337
        %v2052 = vpack.c.bf16 %v1398, %v1398
        %v2053 = vpack.c.bf16 %v1539, %v1539
        %v2054 = vpack.c.bf16 %v1600, %v1600
        %v2055 = vpack.c.bf16 %v1661, %v1661
        %v2056 = vpack.c.bf16 %v1722, %v1722
        %vm2057 = vcmask 261120
        %v2059 = vsel %vm2057, %v2049, 0
        %v2062 = vsel %vm2057, %v2053, 0
        %2064 = vmatpush.bf16.xpose.msra.mxu0 0
        %2065 = vmatpush.bf16.xpose.msra.mxu0 0
        %2066 = vmatpush.bf16.xpose.msra.mxu0 0
        %2067 = vmatpush.bf16.xpose.msra.mxu0 0
        %2068 = vmatpush.bf16.xpose.msra.mxu0 0
        %2069 = vmatpush.bf16.xpose.msra.mxu0 0
        %2070 = vmatpush.bf16.xpose.msra.mxu0 0
        %2071 = vmatpush.bf16.xpose.msra.mxu0 %v2062
        %2072 = vmatmul.bf16.gmra.mxu0 %v2059
        %v2073 = vpop.f32.mrf.mxu0
        %v2074 = vadd.f32 0.0, %v2073
        %v2075 = vpop.f32.mrf.mxu0
        %2076 = vdwg.mxu0
        %v2078 = vsel %vm2057, %v2050, 0
        %v2081 = vsel %vm2057, %v2054, 0
        %2083 = vmatpush.bf16.xpose.msra.mxu0 0
        %2084 = vmatpush.bf16.xpose.msra.mxu0 0
        %2085 = vmatpush.bf16.xpose.msra.mxu0 0
        %2086 = vmatpush.bf16.xpose.msra.mxu0 0
        %2087 = vmatpush.bf16.xpose.msra.mxu0 0
        %2088 = vmatpush.bf16.xpose.msra.mxu0 0
        %2089 = vmatpush.bf16.xpose.msra.mxu0 0
        %2090 = vmatpush.bf16.xpose.msra.mxu0 %v2081
        %2091 = vmatmul.bf16.gmra.mxu0 %v2078
        %v2092 = vpop.f32.mrf.mxu0
        %v2093 = vadd.f32 0.0, %v2092
        %v2094 = vpop.f32.mrf.mxu0
        %2095 = vdwg.mxu0
        %v2097 = vsel %vm2057, %v2051, 0
        %v2100 = vsel %vm2057, %v2055, 0
        %2102 = vmatpush.bf16.xpose.msra.mxu0 0
        %2103 = vmatpush.bf16.xpose.msra.mxu0 0
        %2104 = vmatpush.bf16.xpose.msra.mxu0 0
        %2105 = vmatpush.bf16.xpose.msra.mxu0 0
        %2106 = vmatpush.bf16.xpose.msra.mxu0 0
        %2107 = vmatpush.bf16.xpose.msra.mxu0 0
        %2108 = vmatpush.bf16.xpose.msra.mxu0 0
        %2109 = vmatpush.bf16.xpose.msra.mxu0 %v2100
        %2110 = vmatmul.bf16.gmra.mxu0 %v2097
        %v2111 = vpop.f32.mrf.mxu0
        %v2112 = vadd.f32 0.0, %v2111
        %v2113 = vpop.f32.mrf.mxu0
        %2114 = vdwg.mxu0
        %v2116 = vsel %vm2057, %v2052, 0
        %v2119 = vsel %vm2057, %v2056, 0
        %2121 = vmatpush.bf16.xpose.msra.mxu0 0
        %2122 = vmatpush.bf16.xpose.msra.mxu0 0
        %2123 = vmatpush.bf16.xpose.msra.mxu0 0
        %2124 = vmatpush.bf16.xpose.msra.mxu0 0
        %2125 = vmatpush.bf16.xpose.msra.mxu0 0
        %2126 = vmatpush.bf16.xpose.msra.mxu0 0
        %2127 = vmatpush.bf16.xpose.msra.mxu0 0
        %2128 = vmatpush.bf16.xpose.msra.mxu0 %v2119
        %2129 = vmatmul.bf16.gmra.mxu0 %v2116
        %v2130 = vpop.f32.mrf.mxu0
        %v2131 = vadd.f32 0.0, %v2130
        %v2132 = vpop.f32.mrf.mxu0
        %2133 = vdwg.mxu0
        %v2134 = vmul.f32 %v2074, 0.17677669
        %v2135 = vmul.f32 %v2093, 0.17677669
        %v2136 = vmul.f32 %v2112, 0.17677669
        %v2137 = vmul.f32 %v2131, 0.17677669
        %v2138 = vld [vmem:[%s965] sm:$0x1]
        %v2139 = vsub.f32 1.0, %v2138
        %v2140 = vmul.f32 %v2139, -10000.0
        %v2142 = vperm.slane %v2140, 0
        %v2144 = vadd.f32 %v2134, %v2142
        %v2145 = vadd.f32 %v2135, %v2142
        %v2146 = vadd.f32 %v2136, %v2142
        %v2147 = vadd.f32 %v2137, %v2142
        %vm2148 = vcmask 64512
        %v2149 = vsel %vm2148, %v2144, -inf
        %2150 = vmax.xlane.f32.xlu0 %v2149
        %v2151 = vpop.xlane.xlu0 %2150
        %v2152 = vsel %vm2148, %v2145, -inf
        %2153 = vmax.xlane.f32.xlu0 %v2152
        %v2154 = vpop.xlane.xlu0 %2153
        %v2155 = vsel %vm2148, %v2146, -inf
        %2156 = vmax.xlane.f32.xlu0 %v2155
        %v2157 = vpop.xlane.xlu0 %2156
        %v2158 = vsel %vm2148, %v2147, -inf
        %2159 = vmax.xlane.f32.xlu0 %v2158
        %v2160 = vpop.xlane.xlu0 %2159
        %v2161 = vsub.f32 %v2144, %v2151
        %v2162 = vsub.f32 %v2145, %v2154
        %v2163 = vsub.f32 %v2146, %v2157
        %v2164 = vsub.f32 %v2147, %v2160
        %v2165 = vmul.f32 %v2161, 1.442695
        %v2166 = vpow.pop %v2165
        %v2167 = vmul.f32 %v2162, 1.442695
        %v2168 = vpow.pop %v2167
        %v2169 = vmul.f32 %v2163, 1.442695
        %v2170 = vpow.pop %v2169
        %v2171 = vmul.f32 %v2164, 1.442695
        %v2172 = vpow.pop %v2171
        %v2173 = vsel %vm2148, %v2166, 0.0
        %2174 = vadd.xlane.f32.xlu0 %v2173
        %v2175 = vpop.xlane.xlu0 %2174
        %v2176 = vsel %vm2148, %v2168, 0.0
        %2177 = vadd.xlane.f32.xlu0 %v2176
        %v2178 = vpop.xlane.xlu0 %2177
        %v2179 = vsel %vm2148, %v2170, 0.0
        %2180 = vadd.xlane.f32.xlu0 %v2179
        %v2181 = vpop.xlane.xlu0 %2180
        %v2182 = vsel %vm2148, %v2172, 0.0
        %2183 = vadd.xlane.f32.xlu0 %v2182
        %v2184 = vpop.xlane.xlu0 %2183
        %v2185 = vrcp.pop %v2175
        %v2186 = vrcp.pop %v2178
        %v2187 = vrcp.pop %v2181
        %v2188 = vrcp.pop %v2184
        %v2189 = vmul.f32 %v2166, %v2185
        %v2190 = vmul.f32 %v2168, %v2186
        %v2191 = vmul.f32 %v2170, %v2187
        %v2192 = vmul.f32 %v2172, %v2188
        %v2193 = vpack.c.bf16 %v2189, %v2189
        %v2194 = vpack.c.bf16 %v2190, %v2190
        %v2195 = vpack.c.bf16 %v2191, %v2191
        %v2196 = vpack.c.bf16 %v2192, %v2192
        %v2197 = vpack.c.bf16 %v1863, %v1863
        %v2198 = vpack.c.bf16 %v1924, %v1924
        %v2199 = vpack.c.bf16 %v1985, %v1985
        %v2200 = vpack.c.bf16 %v2046, %v2046
        %v2202 = vsel %vm2148, %v2193, 0
        %vm2204 = vcmask 1043456
        %v2206 = vsel %vm2204, %v2197, 0
        %2208 = vmatpush.bf16.msra.mxu0 0
        %2209 = vmatpush.bf16.msra.mxu0 0
        %2210 = vmatpush.bf16.msra.mxu0 0
        %2211 = vmatpush.bf16.msra.mxu0 0
        %2212 = vmatpush.bf16.msra.mxu0 0
        %2213 = vmatpush.bf16.msra.mxu0 0
        %2214 = vmatpush.bf16.msra.mxu0 0
        %2215 = vmatpush.bf16.msra.mxu0 %v2206
        %2216 = vmatmul.bf16.gmra.mxu0 %v2202
        %v2217 = vpop.f32.mrf.mxu0
        %v2218 = vadd.f32 0.0, %v2217
        %v2219 = vpop.f32.mrf.mxu0
        %2220 = vdwg.mxu0
        %v2222 = vsel %vm2148, %v2194, 0
        %v2225 = vsel %vm2204, %v2198, 0
        %2227 = vmatpush.bf16.msra.mxu0 0
        %2228 = vmatpush.bf16.msra.mxu0 0
        %2229 = vmatpush.bf16.msra.mxu0 0
        %2230 = vmatpush.bf16.msra.mxu0 0
        %2231 = vmatpush.bf16.msra.mxu0 0
        %2232 = vmatpush.bf16.msra.mxu0 0
        %2233 = vmatpush.bf16.msra.mxu0 0
        %2234 = vmatpush.bf16.msra.mxu0 %v2225
        %2235 = vmatmul.bf16.gmra.mxu0 %v2222
        %v2236 = vpop.f32.mrf.mxu0
        %v2237 = vadd.f32 0.0, %v2236
        %v2238 = vpop.f32.mrf.mxu0
        %2239 = vdwg.mxu0
        %v2241 = vsel %vm2148, %v2195, 0
        %v2244 = vsel %vm2204, %v2199, 0
        %2246 = vmatpush.bf16.msra.mxu0 0
        %2247 = vmatpush.bf16.msra.mxu0 0
        %2248 = vmatpush.bf16.msra.mxu0 0
        %2249 = vmatpush.bf16.msra.mxu0 0
        %2250 = vmatpush.bf16.msra.mxu0 0
        %2251 = vmatpush.bf16.msra.mxu0 0
        %2252 = vmatpush.bf16.msra.mxu0 0
        %2253 = vmatpush.bf16.msra.mxu0 %v2244
        %2254 = vmatmul.bf16.gmra.mxu0 %v2241
        %v2255 = vpop.f32.mrf.mxu0
        %v2256 = vadd.f32 0.0, %v2255
        %v2257 = vpop.f32.mrf.mxu0
        %2258 = vdwg.mxu0
        %v2260 = vsel %vm2148, %v2196, 0
        %v2263 = vsel %vm2204, %v2200, 0
        %2265 = vmatpush.bf16.msra.mxu0 0
        %2266 = vmatpush.bf16.msra.mxu0 0
        %2267 = vmatpush.bf16.msra.mxu0 0
        %2268 = vmatpush.bf16.msra.mxu0 0
        %2269 = vmatpush.bf16.msra.mxu0 0
        %2270 = vmatpush.bf16.msra.mxu0 0
        %2271 = vmatpush.bf16.msra.mxu0 0
        %2272 = vmatpush.bf16.msra.mxu0 %v2263
        %2273 = vmatmul.bf16.gmra.mxu0 %v2260
        %v2274 = vpop.f32.mrf.mxu0
        %v2275 = vadd.f32 0.0, %v2274
        %v2276 = vpop.f32.mrf.mxu0
        %2277 = vdwg.mxu0
        %v2278 = vpack.c.bf16 %v2218, %v2218
        %v2279 = vpack.c.bf16 %v2237, %v2237
        %v2280 = vpack.c.bf16 %v2256, %v2256
        %v2281 = vpack.c.bf16 %v2275, %v2275
        %v2282 = vld [vmem:[%s997] sm:$0xf]
        %v2283 = vld [vmem:[%s997 + $0x4] sm:$0xf]
        %v2284 = vld [vmem:[%s997 + $0x8] sm:$0xf]
        %v2285 = vld [vmem:[%s997 + $0xc] sm:$0xf]
        %v2286 = vld [vmem:[%s997 + $0x10] sm:$0xf]
        %v2287 = vld [vmem:[%s997 + $0x14] sm:$0xf]
        %v2288 = vld [vmem:[%s997 + $0x18] sm:$0xf]
        %v2289 = vld [vmem:[%s997 + $0x1c] sm:$0xf]
        %v2290 = vld [vmem:[%s997 + $0x20] sm:$0xf]
        %v2291 = vld [vmem:[%s997 + $0x24] sm:$0xf]
        %v2292 = vld [vmem:[%s997 + $0x28] sm:$0xf]
        %v2293 = vld [vmem:[%s997 + $0x2c] sm:$0xf]
        %v2294 = vld [vmem:[%s997 + $0x30] sm:$0xf]
        %v2295 = vld [vmem:[%s997 + $0x34] sm:$0xf]
        %v2296 = vld [vmem:[%s997 + $0x38] sm:$0xf]
        %v2297 = vld [vmem:[%s997 + $0x3c] sm:$0xf]
        %v2302 = vunpack.c.l.b16 %v2282
        %v2303 = vunpack.c.l.b16 %v2283
        %v2304 = vunpack.c.l.b16 %v2284
        %v2305 = vunpack.c.l.b16 %v2285
        %v2306 = vpack.c.b16 %v2303, %v2302
        %v2307 = vpack.c.b16 %v2305, %v2304
        %v2311 = vsel %vm2057, %v2278, 0
        %2313 = vmatpush.bf16.msra.mxu0 0
        %2314 = vmatpush.bf16.msra.mxu0 0
        %2315 = vmatpush.bf16.msra.mxu0 0
        %2316 = vmatpush.bf16.msra.mxu0 0
        %2317 = vmatpush.bf16.msra.mxu0 0
        %2318 = vmatpush.bf16.msra.mxu0 0
        %2319 = vmatpush.bf16.msra.mxu0 %v2307
        %2320 = vmatpush.bf16.msra.mxu0 %v2306
        %2321 = vmatmul.bf16.gmra.mxu0 %v2311
        %v2322 = vpop.f32.mrf.mxu0
        %v2323 = vadd.f32 0.0, %v2322
        %v2324 = vpop.f32.mrf.mxu0
        %2325 = vdwg.mxu0
        %v2330 = vunpack.c.l.b16 %v2286
        %v2331 = vunpack.c.l.b16 %v2287
        %v2332 = vunpack.c.l.b16 %v2288
        %v2333 = vunpack.c.l.b16 %v2289
        %v2334 = vpack.c.b16 %v2331, %v2330
        %v2335 = vpack.c.b16 %v2333, %v2332
        %v2339 = vsel %vm2057, %v2279, 0
        %2341 = vmatpush.bf16.msra.mxu0 0
        %2342 = vmatpush.bf16.msra.mxu0 0
        %2343 = vmatpush.bf16.msra.mxu0 0
        %2344 = vmatpush.bf16.msra.mxu0 0
        %2345 = vmatpush.bf16.msra.mxu0 0
        %2346 = vmatpush.bf16.msra.mxu0 0
        %2347 = vmatpush.bf16.msra.mxu0 %v2335
        %2348 = vmatpush.bf16.msra.mxu0 %v2334
        %2349 = vmatmul.bf16.gmra.mxu0 %v2339
        %v2350 = vpop.f32.mrf.mxu0
        %v2351 = vadd.f32 0.0, %v2350
        %v2352 = vpop.f32.mrf.mxu0
        %2353 = vdwg.mxu0
        %v2358 = vunpack.c.l.b16 %v2290
        %v2359 = vunpack.c.l.b16 %v2291
        %v2360 = vunpack.c.l.b16 %v2292
        %v2361 = vunpack.c.l.b16 %v2293
        %v2362 = vpack.c.b16 %v2359, %v2358
        %v2363 = vpack.c.b16 %v2361, %v2360
        %v2367 = vsel %vm2057, %v2280, 0
        %2369 = vmatpush.bf16.msra.mxu0 0
        %2370 = vmatpush.bf16.msra.mxu0 0
        %2371 = vmatpush.bf16.msra.mxu0 0
        %2372 = vmatpush.bf16.msra.mxu0 0
        %2373 = vmatpush.bf16.msra.mxu0 0
        %2374 = vmatpush.bf16.msra.mxu0 0
        %2375 = vmatpush.bf16.msra.mxu0 %v2363
        %2376 = vmatpush.bf16.msra.mxu0 %v2362
        %2377 = vmatmul.bf16.gmra.mxu0 %v2367
        %v2378 = vpop.f32.mrf.mxu0
        %v2379 = vadd.f32 0.0, %v2378
        %v2380 = vpop.f32.mrf.mxu0
        %2381 = vdwg.mxu0
        %v2386 = vunpack.c.l.b16 %v2294
        %v2387 = vunpack.c.l.b16 %v2295
        %v2388 = vunpack.c.l.b16 %v2296
        %v2389 = vunpack.c.l.b16 %v2297
        %v2390 = vpack.c.b16 %v2387, %v2386
        %v2391 = vpack.c.b16 %v2389, %v2388
        %v2395 = vsel %vm2057, %v2281, 0
        %2397 = vmatpush.bf16.msra.mxu0 0
        %2398 = vmatpush.bf16.msra.mxu0 0
        %2399 = vmatpush.bf16.msra.mxu0 0
        %2400 = vmatpush.bf16.msra.mxu0 0
        %2401 = vmatpush.bf16.msra.mxu0 0
        %2402 = vmatpush.bf16.msra.mxu0 0
        %2403 = vmatpush.bf16.msra.mxu0 %v2391
        %2404 = vmatpush.bf16.msra.mxu0 %v2390
        %2405 = vmatmul.bf16.gmra.mxu0 %v2395
        %v2406 = vpop.f32.mrf.mxu0
        %v2407 = vadd.f32 0.0, %v2406
        %v2408 = vpop.f32.mrf.mxu0
        %2409 = vdwg.mxu0
        %v2410 = vadd.f32 %v2323, %v2351
        %v2411 = vadd.f32 %v2410, %v2379
        %v2412 = vadd.f32 %v2411, %v2407
        %v2413 = vld [vmem:[%s1000] sm:$0x1]
        %v2415 = vperm.slane %v2413, 0
        %v2417 = vadd.f32 %v2412, %v2415
        %v2418 = vadd.f32 %v2417, %v1075
        %v2419 = vld [vmem:[%s1003] sm:$0x1]
        %v2420 = vld [vmem:[%s1006] sm:$0x1]
        %2421 = vadd.xlane.f32.xlu0 %v2418
        %v2422 = vpop.xlane.xlu0 %2421
        %v2423 = vrcp.pop 128.0
        %v2424 = vmul.f32 128.0, %v2423
        %v2425 = vsub.f32 1.0, %v2424
        %v2426 = vmul.f32 %v2423, %v2425
        %v2427 = vadd.f32 %v2423, %v2426
        %vm2428 = vweird.f32 %v2423
        %v2429 = vsel %vm2428, %v2423, %v2427
        %v2430 = vmul.f32 %v2422, %v2429
        %v2431 = vsub.f32 %v2418, %v2430
        %v2432 = vmul.f32 %v2431, %v2431
        %2433 = vadd.xlane.f32.xlu0 %v2432
        %v2434 = vpop.xlane.xlu0 %2433
        %v2435 = vmul.f32 %v2434, %v2429
        %v2436 = vadd.f32 %v2435, 1e-12
        %v2437 = vrsqrt.pop %v2436
        %v2438 = vmul.f32 %v2437, %v2436
        %v2439 = vmul.f32 %v2438, %v2437
        %v2440 = vmul.f32 0.5, %v2439
        %v2441 = vsub.f32 1.5, %v2440
        %v2442 = vmul.f32 %v2437, %v2441
        %vm2443 = vweird.f32 %v2436
        %vm2444 = vweird.f32 %v2437
        %vm2445 = vmor %vm2443, %vm2444
        %v2446 = vsel %vm2445, %v2437, %v2442
        %v2447 = vmul.f32 %v2431, %v2446
        %v2449 = vperm.slane %v2419, 0
        %v2451 = vmul.f32 %v2447, %v2449
        %v2453 = vperm.slane %v2420, 0
        %v2455 = vadd.f32 %v2451, %v2453
        %v2456 = vpack.c.bf16 %v2455, %v2455
        %v2457 = vld [vmem:[%s1011] sm:$0xff]
        %v2458 = vld [vmem:[%s1011 + $0x8] sm:$0xff]
        %v2459 = vld [vmem:[%s1011 + $0x10] sm:$0xff]
        %v2460 = vld [vmem:[%s1011 + $0x18] sm:$0xff]
        %v2461 = vld [vmem:[%s1011 + $0x20] sm:$0xff]
        %v2462 = vld [vmem:[%s1011 + $0x28] sm:$0xff]
        %v2463 = vld [vmem:[%s1011 + $0x30] sm:$0xff]
        %v2464 = vld [vmem:[%s1011 + $0x38] sm:$0xff]
        %v2465 = vld [vmem:[%s1011 + $0x40] sm:$0xff]
        %v2466 = vld [vmem:[%s1011 + $0x48] sm:$0xff]
        %v2467 = vld [vmem:[%s1011 + $0x50] sm:$0xff]
        %v2468 = vld [vmem:[%s1011 + $0x58] sm:$0xff]
        %v2469 = vld [vmem:[%s1011 + $0x60] sm:$0xff]
        %v2470 = vld [vmem:[%s1011 + $0x68] sm:$0xff]
        %v2471 = vld [vmem:[%s1011 + $0x70] sm:$0xff]
        %v2472 = vld [vmem:[%s1011 + $0x78] sm:$0xff]
        %v2473 = vld [vmem:[%s1011 + $0x80] sm:$0xff]
        %v2474 = vld [vmem:[%s1011 + $0x88] sm:$0xff]
        %v2475 = vld [vmem:[%s1011 + $0x90] sm:$0xff]
        %v2476 = vld [vmem:[%s1011 + $0x98] sm:$0xff]
        %v2477 = vld [vmem:[%s1011 + $0xa0] sm:$0xff]
        %v2478 = vld [vmem:[%s1011 + $0xa8] sm:$0xff]
        %v2479 = vld [vmem:[%s1011 + $0xb0] sm:$0xff]
        %v2480 = vld [vmem:[%s1011 + $0xb8] sm:$0xff]
        %v2481 = vld [vmem:[%s1011 + $0xc0] sm:$0xff]
        %v2482 = vld [vmem:[%s1011 + $0xc8] sm:$0xff]
        %v2483 = vld [vmem:[%s1011 + $0xd0] sm:$0xff]
        %v2484 = vld [vmem:[%s1011 + $0xd8] sm:$0xff]
        %v2485 = vld [vmem:[%s1011 + $0xe0] sm:$0xff]
        %v2486 = vld [vmem:[%s1011 + $0xe8] sm:$0xff]
        %v2487 = vld [vmem:[%s1011 + $0xf0] sm:$0xff]
        %v2488 = vld [vmem:[%s1011 + $0xf8] sm:$0xff]
        %v2489 = vld [vmem:[%s1015] sm:$0xf]
        %v2491 = vperm.slane %v2489, 0
        %v2492 = vperm.slane %v2489, 1
        %v2493 = vperm.slane %v2489, 2
        %v2494 = vperm.slane %v2489, 3
        %v2531 = vunpack.c.l.b16 %v2457
        %v2532 = vunpack.c.h.b16 %v2457
        %v2533 = vunpack.c.l.b16 %v2458
        %v2534 = vunpack.c.h.b16 %v2458
        %v2535 = vunpack.c.l.b16 %v2459
        %v2536 = vunpack.c.h.b16 %v2459
        %v2537 = vunpack.c.l.b16 %v2460
        %v2538 = vunpack.c.h.b16 %v2460
        %v2539 = vunpack.c.l.b16 %v2461
        %v2540 = vunpack.c.h.b16 %v2461
        %v2541 = vunpack.c.l.b16 %v2462
        %v2542 = vunpack.c.h.b16 %v2462
        %v2543 = vunpack.c.l.b16 %v2463
        %v2544 = vunpack.c.h.b16 %v2463
        %v2545 = vunpack.c.l.b16 %v2464
        %v2546 = vunpack.c.h.b16 %v2464
        %v2547 = vunpack.c.l.b16 %v2465
        %v2548 = vunpack.c.h.b16 %v2465
        %v2549 = vunpack.c.l.b16 %v2466
        %v2550 = vunpack.c.h.b16 %v2466
        %v2551 = vunpack.c.l.b16 %v2467
        %v2552 = vunpack.c.h.b16 %v2467
        %v2553 = vunpack.c.l.b16 %v2468
        %v2554 = vunpack.c.h.b16 %v2468
        %v2555 = vunpack.c.l.b16 %v2469
        %v2556 = vunpack.c.h.b16 %v2469
        %v2557 = vunpack.c.l.b16 %v2470
        %v2558 = vunpack.c.h.b16 %v2470
        %v2559 = vunpack.c.l.b16 %v2471
        %v2560 = vunpack.c.h.b16 %v2471
        %v2561 = vunpack.c.l.b16 %v2472
        %v2562 = vunpack.c.h.b16 %v2472
        %v2563 = vunpack.c.l.b16 %v2473
        %v2564 = vunpack.c.h.b16 %v2473
        %v2565 = vunpack.c.l.b16 %v2474
        %v2566 = vunpack.c.h.b16 %v2474
        %v2567 = vunpack.c.l.b16 %v2475
        %v2568 = vunpack.c.h.b16 %v2475
        %v2569 = vunpack.c.l.b16 %v2476
        %v2570 = vunpack.c.h.b16 %v2476
        %v2571 = vunpack.c.l.b16 %v2477
        %v2572 = vunpack.c.h.b16 %v2477
        %v2573 = vunpack.c.l.b16 %v2478
        %v2574 = vunpack.c.h.b16 %v2478
        %v2575 = vunpack.c.l.b16 %v2479
        %v2576 = vunpack.c.h.b16 %v2479
        %v2577 = vunpack.c.l.b16 %v2480
        %v2578 = vunpack.c.h.b16 %v2480
        %v2579 = vunpack.c.l.b16 %v2481
        %v2580 = vunpack.c.h.b16 %v2481
        %v2581 = vunpack.c.l.b16 %v2482
        %v2582 = vunpack.c.h.b16 %v2482
        %v2583 = vunpack.c.l.b16 %v2483
        %v2584 = vunpack.c.h.b16 %v2483
        %v2585 = vunpack.c.l.b16 %v2484
        %v2586 = vunpack.c.h.b16 %v2484
        %v2587 = vunpack.c.l.b16 %v2485
        %v2588 = vunpack.c.h.b16 %v2485
        %v2589 = vunpack.c.l.b16 %v2486
        %v2590 = vunpack.c.h.b16 %v2486
        %v2591 = vunpack.c.l.b16 %v2487
        %v2592 = vunpack.c.h.b16 %v2487
        %v2593 = vunpack.c.l.b16 %v2488
        %v2594 = vunpack.c.h.b16 %v2488
        %v2595 = vpack.c.b16 %v2535, %v2531
        %v2596 = vpack.c.b16 %v2536, %v2532
        %v2597 = vpack.c.b16 %v2537, %v2533
        %v2598 = vpack.c.b16 %v2538, %v2534
        %v2599 = vpack.c.b16 %v2543, %v2539
        %v2600 = vpack.c.b16 %v2544, %v2540
        %v2601 = vpack.c.b16 %v2545, %v2541
        %v2602 = vpack.c.b16 %v2546, %v2542
        %v2603 = vpack.c.b16 %v2551, %v2547
        %v2604 = vpack.c.b16 %v2552, %v2548
        %v2605 = vpack.c.b16 %v2553, %v2549
        %v2606 = vpack.c.b16 %v2554, %v2550
        %v2607 = vpack.c.b16 %v2559, %v2555
        %v2608 = vpack.c.b16 %v2560, %v2556
        %v2609 = vpack.c.b16 %v2561, %v2557
        %v2610 = vpack.c.b16 %v2562, %v2558
        %v2611 = vpack.c.b16 %v2567, %v2563
        %v2612 = vpack.c.b16 %v2568, %v2564
        %v2613 = vpack.c.b16 %v2569, %v2565
        %v2614 = vpack.c.b16 %v2570, %v2566
        %v2615 = vpack.c.b16 %v2575, %v2571
        %v2616 = vpack.c.b16 %v2576, %v2572
        %v2617 = vpack.c.b16 %v2577, %v2573
        %v2618 = vpack.c.b16 %v2578, %v2574
        %v2619 = vpack.c.b16 %v2583, %v2579
        %v2620 = vpack.c.b16 %v2584, %v2580
        %v2621 = vpack.c.b16 %v2585, %v2581
        %v2622 = vpack.c.b16 %v2586, %v2582
        %v2623 = vpack.c.b16 %v2591, %v2587
        %v2624 = vpack.c.b16 %v2592, %v2588
        %v2625 = vpack.c.b16 %v2593, %v2589
        %v2626 = vpack.c.b16 %v2594, %v2590
        %2659 = vmatpush.bf16.msra.mxu0 %v2623
        %2660 = vmatpush.bf16.msra.mxu0 %v2619
        %2661 = vmatpush.bf16.msra.mxu0 %v2615
        %2662 = vmatpush.bf16.msra.mxu0 %v2611
        %2663 = vmatpush.bf16.msra.mxu0 %v2607
        %2664 = vmatpush.bf16.msra.mxu0 %v2603
        %2665 = vmatpush.bf16.msra.mxu0 %v2599
        %2666 = vmatpush.bf16.msra.mxu0 %v2595
        %2667 = vmatmul.bf16.gmra.mxu0 %v2456
        %v2668 = vpop.f32.mrf.mxu0
        %v2669 = vadd.f32 %v2491, %v2668
        %v2670 = vpop.f32.mrf.mxu0
        %2671 = vdwg.mxu0
        %2672 = vmatpush.bf16.msra.mxu0 %v2624
        %2673 = vmatpush.bf16.msra.mxu0 %v2620
        %2674 = vmatpush.bf16.msra.mxu0 %v2616
        %2675 = vmatpush.bf16.msra.mxu0 %v2612
        %2676 = vmatpush.bf16.msra.mxu0 %v2608
        %2677 = vmatpush.bf16.msra.mxu0 %v2604
        %2678 = vmatpush.bf16.msra.mxu0 %v2600
        %2679 = vmatpush.bf16.msra.mxu0 %v2596
        %2680 = vmatmul.bf16.gmra.mxu0 %v2456
        %v2681 = vpop.f32.mrf.mxu0
        %v2682 = vadd.f32 %v2492, %v2681
        %v2683 = vpop.f32.mrf.mxu0
        %2684 = vdwg.mxu0
        %2685 = vmatpush.bf16.msra.mxu0 %v2625
        %2686 = vmatpush.bf16.msra.mxu0 %v2621
        %2687 = vmatpush.bf16.msra.mxu0 %v2617
        %2688 = vmatpush.bf16.msra.mxu0 %v2613
        %2689 = vmatpush.bf16.msra.mxu0 %v2609
        %2690 = vmatpush.bf16.msra.mxu0 %v2605
        %2691 = vmatpush.bf16.msra.mxu0 %v2601
        %2692 = vmatpush.bf16.msra.mxu0 %v2597
        %2693 = vmatmul.bf16.gmra.mxu0 %v2456
        %v2694 = vpop.f32.mrf.mxu0
        %v2695 = vadd.f32 %v2493, %v2694
        %v2696 = vpop.f32.mrf.mxu0
        %2697 = vdwg.mxu0
        %2698 = vmatpush.bf16.msra.mxu0 %v2626
        %2699 = vmatpush.bf16.msra.mxu0 %v2622
        %2700 = vmatpush.bf16.msra.mxu0 %v2618
        %2701 = vmatpush.bf16.msra.mxu0 %v2614
        %2702 = vmatpush.bf16.msra.mxu0 %v2610
        %2703 = vmatpush.bf16.msra.mxu0 %v2606
        %2704 = vmatpush.bf16.msra.mxu0 %v2602
        %2705 = vmatpush.bf16.msra.mxu0 %v2598
        %2706 = vmatmul.bf16.gmra.mxu0 %v2456
        %v2707 = vpop.f32.mrf.mxu0
        %v2708 = vadd.f32 %v2494, %v2707
        %v2709 = vpop.f32.mrf.mxu0
        %2710 = vdwg.mxu0
        %v2711 = vmul.f32 %v2669, 0.5
        %v2712 = vmul.f32 %v2682, 0.5
        %v2713 = vmul.f32 %v2695, 0.5
        %v2714 = vmul.f32 %v2708, 0.5
        %v2715 = vmul.f32 %v2669, 0.044715
        %v2716 = vmul.f32 %v2682, 0.044715
        %v2717 = vmul.f32 %v2695, 0.044715
        %v2718 = vmul.f32 %v2708, 0.044715
        %v2719 = vmul.f32 %v2715, %v2669
        %v2720 = vmul.f32 %v2716, %v2682
        %v2721 = vmul.f32 %v2717, %v2695
        %v2722 = vmul.f32 %v2718, %v2708
        %v2723 = vmul.f32 %v2719, %v2669
        %v2724 = vmul.f32 %v2720, %v2682
        %v2725 = vmul.f32 %v2721, %v2695
        %v2726 = vmul.f32 %v2722, %v2708
        %v2727 = vadd.f32 %v2669, %v2723
        %v2728 = vadd.f32 %v2682, %v2724
        %v2729 = vadd.f32 %v2695, %v2725
        %v2730 = vadd.f32 %v2708, %v2726
        %v2731 = vmul.f32 %v2727, 0.7978846
        %v2732 = vmul.f32 %v2728, 0.7978846
        %v2733 = vmul.f32 %v2729, 0.7978846
        %v2734 = vmul.f32 %v2730, 0.7978846
        %v2735 = vtanh.pop %v2731
        %v2736 = vtanh.pop %v2732
        %v2737 = vtanh.pop %v2733
        %v2738 = vtanh.pop %v2734
        %v2739 = vadd.f32 %v2735, 1.0
        %v2740 = vadd.f32 %v2736, 1.0
        %v2741 = vadd.f32 %v2737, 1.0
        %v2742 = vadd.f32 %v2738, 1.0
        %v2743 = vmul.f32 %v2711, %v2739
        %v2744 = vmul.f32 %v2712, %v2740
        %v2745 = vmul.f32 %v2713, %v2741
        %v2746 = vmul.f32 %v2714, %v2742
        %v2747 = vpack.c.bf16 %v2743, %v2743
        %v2748 = vpack.c.bf16 %v2744, %v2744
        %v2749 = vpack.c.bf16 %v2745, %v2745
        %v2750 = vpack.c.bf16 %v2746, %v2746
        %v2751 = vld [vmem:[%s1020] sm:$0xf]
        %v2752 = vld [vmem:[%s1020 + $0x4] sm:$0xf]
        %v2753 = vld [vmem:[%s1020 + $0x8] sm:$0xf]
        %v2754 = vld [vmem:[%s1020 + $0xc] sm:$0xf]
        %v2755 = vld [vmem:[%s1020 + $0x10] sm:$0xf]
        %v2756 = vld [vmem:[%s1020 + $0x14] sm:$0xf]
        %v2757 = vld [vmem:[%s1020 + $0x18] sm:$0xf]
        %v2758 = vld [vmem:[%s1020 + $0x1c] sm:$0xf]
        %v2759 = vld [vmem:[%s1020 + $0x20] sm:$0xf]
        %v2760 = vld [vmem:[%s1020 + $0x24] sm:$0xf]
        %v2761 = vld [vmem:[%s1020 + $0x28] sm:$0xf]
        %v2762 = vld [vmem:[%s1020 + $0x2c] sm:$0xf]
        %v2763 = vld [vmem:[%s1020 + $0x30] sm:$0xf]
        %v2764 = vld [vmem:[%s1020 + $0x34] sm:$0xf]
        %v2765 = vld [vmem:[%s1020 + $0x38] sm:$0xf]
        %v2766 = vld [vmem:[%s1020 + $0x3c] sm:$0xf]
        %v2767 = vld [vmem:[%s1020 + $0x40] sm:$0xf]
        %v2768 = vld [vmem:[%s1020 + $0x44] sm:$0xf]
        %v2769 = vld [vmem:[%s1020 + $0x48] sm:$0xf]
        %v2770 = vld [vmem:[%s1020 + $0x4c] sm:$0xf]
        %v2771 = vld [vmem:[%s1020 + $0x50] sm:$0xf]
        %v2772 = vld [vmem:[%s1020 + $0x54] sm:$0xf]
        %v2773 = vld [vmem:[%s1020 + $0x58] sm:$0xf]
        %v2774 = vld [vmem:[%s1020 + $0x5c] sm:$0xf]
        %v2775 = vld [vmem:[%s1020 + $0x60] sm:$0xf]
        %v2776 = vld [vmem:[%s1020 + $0x64] sm:$0xf]
        %v2777 = vld [vmem:[%s1020 + $0x68] sm:$0xf]
        %v2778 = vld [vmem:[%s1020 + $0x6c] sm:$0xf]
        %v2779 = vld [vmem:[%s1020 + $0x70] sm:$0xf]
        %v2780 = vld [vmem:[%s1020 + $0x74] sm:$0xf]
        %v2781 = vld [vmem:[%s1020 + $0x78] sm:$0xf]
        %v2782 = vld [vmem:[%s1020 + $0x7c] sm:$0xf]
        %v2783 = vld [vmem:[%s1020 + $0x80] sm:$0xf]
        %v2784 = vld [vmem:[%s1020 + $0x84] sm:$0xf]
        %v2785 = vld [vmem:[%s1020 + $0x88] sm:$0xf]
        %v2786 = vld [vmem:[%s1020 + $0x8c] sm:$0xf]
        %v2787 = vld [vmem:[%s1020 + $0x90] sm:$0xf]
        %v2788 = vld [vmem:[%s1020 + $0x94] sm:$0xf]
        %v2789 = vld [vmem:[%s1020 + $0x98] sm:$0xf]
        %v2790 = vld [vmem:[%s1020 + $0x9c] sm:$0xf]
        %v2791 = vld [vmem:[%s1020 + $0xa0] sm:$0xf]
        %v2792 = vld [vmem:[%s1020 + $0xa4] sm:$0xf]
        %v2793 = vld [vmem:[%s1020 + $0xa8] sm:$0xf]
        %v2794 = vld [vmem:[%s1020 + $0xac] sm:$0xf]
        %v2795 = vld [vmem:[%s1020 + $0xb0] sm:$0xf]
        %v2796 = vld [vmem:[%s1020 + $0xb4] sm:$0xf]
        %v2797 = vld [vmem:[%s1020 + $0xb8] sm:$0xf]
        %v2798 = vld [vmem:[%s1020 + $0xbc] sm:$0xf]
        %v2799 = vld [vmem:[%s1020 + $0xc0] sm:$0xf]
        %v2800 = vld [vmem:[%s1020 + $0xc4] sm:$0xf]
        %v2801 = vld [vmem:[%s1020 + $0xc8] sm:$0xf]
        %v2802 = vld [vmem:[%s1020 + $0xcc] sm:$0xf]
        %v2803 = vld [vmem:[%s1020 + $0xd0] sm:$0xf]
        %v2804 = vld [vmem:[%s1020 + $0xd4] sm:$0xf]
        %v2805 = vld [vmem:[%s1020 + $0xd8] sm:$0xf]
        %v2806 = vld [vmem:[%s1020 + $0xdc] sm:$0xf]
        %v2807 = vld [vmem:[%s1020 + $0xe0] sm:$0xf]
        %v2808 = vld [vmem:[%s1020 + $0xe4] sm:$0xf]
        %v2809 = vld [vmem:[%s1020 + $0xe8] sm:$0xf]
        %v2810 = vld [vmem:[%s1020 + $0xec] sm:$0xf]
        %v2811 = vld [vmem:[%s1020 + $0xf0] sm:$0xf]
        %v2812 = vld [vmem:[%s1020 + $0xf4] sm:$0xf]
        %v2813 = vld [vmem:[%s1020 + $0xf8] sm:$0xf]
        %v2814 = vld [vmem:[%s1020 + $0xfc] sm:$0xf]
        %v2815 = vld [vmem:[%s1023] sm:$0x1]
        %v2817 = vperm.slane %v2815, 0
        %v2883 = vunpack.c.l.b16 %v2751
        %v2884 = vunpack.c.l.b16 %v2752
        %v2885 = vunpack.c.l.b16 %v2753
        %v2886 = vunpack.c.l.b16 %v2754
        %v2887 = vunpack.c.l.b16 %v2755
        %v2888 = vunpack.c.l.b16 %v2756
        %v2889 = vunpack.c.l.b16 %v2757
        %v2890 = vunpack.c.l.b16 %v2758
        %v2891 = vunpack.c.l.b16 %v2759
        %v2892 = vunpack.c.l.b16 %v2760
        %v2893 = vunpack.c.l.b16 %v2761
        %v2894 = vunpack.c.l.b16 %v2762
        %v2895 = vunpack.c.l.b16 %v2763
        %v2896 = vunpack.c.l.b16 %v2764
        %v2897 = vunpack.c.l.b16 %v2765
        %v2898 = vunpack.c.l.b16 %v2766
        %v2899 = vunpack.c.l.b16 %v2767
        %v2900 = vunpack.c.l.b16 %v2768
        %v2901 = vunpack.c.l.b16 %v2769
        %v2902 = vunpack.c.l.b16 %v2770
        %v2903 = vunpack.c.l.b16 %v2771
        %v2904 = vunpack.c.l.b16 %v2772
        %v2905 = vunpack.c.l.b16 %v2773
        %v2906 = vunpack.c.l.b16 %v2774
        %v2907 = vunpack.c.l.b16 %v2775
        %v2908 = vunpack.c.l.b16 %v2776
        %v2909 = vunpack.c.l.b16 %v2777
        %v2910 = vunpack.c.l.b16 %v2778
        %v2911 = vunpack.c.l.b16 %v2779
        %v2912 = vunpack.c.l.b16 %v2780
        %v2913 = vunpack.c.l.b16 %v2781
        %v2914 = vunpack.c.l.b16 %v2782
        %v2915 = vunpack.c.l.b16 %v2783
        %v2916 = vunpack.c.l.b16 %v2784
        %v2917 = vunpack.c.l.b16 %v2785
        %v2918 = vunpack.c.l.b16 %v2786
        %v2919 = vunpack.c.l.b16 %v2787
        %v2920 = vunpack.c.l.b16 %v2788
        %v2921 = vunpack.c.l.b16 %v2789
        %v2922 = vunpack.c.l.b16 %v2790
        %v2923 = vunpack.c.l.b16 %v2791
        %v2924 = vunpack.c.l.b16 %v2792
        %v2925 = vunpack.c.l.b16 %v2793
        %v2926 = vunpack.c.l.b16 %v2794
        %v2927 = vunpack.c.l.b16 %v2795
        %v2928 = vunpack.c.l.b16 %v2796
        %v2929 = vunpack.c.l.b16 %v2797
        %v2930 = vunpack.c.l.b16 %v2798
        %v2931 = vunpack.c.l.b16 %v2799
        %v2932 = vunpack.c.l.b16 %v2800
        %v2933 = vunpack.c.l.b16 %v2801
        %v2934 = vunpack.c.l.b16 %v2802
        %v2935 = vunpack.c.l.b16 %v2803
        %v2936 = vunpack.c.l.b16 %v2804
        %v2937 = vunpack.c.l.b16 %v2805
        %v2938 = vunpack.c.l.b16 %v2806
        %v2939 = vunpack.c.l.b16 %v2807
        %v2940 = vunpack.c.l.b16 %v2808
        %v2941 = vunpack.c.l.b16 %v2809
        %v2942 = vunpack.c.l.b16 %v2810
        %v2943 = vunpack.c.l.b16 %v2811
        %v2944 = vunpack.c.l.b16 %v2812
        %v2945 = vunpack.c.l.b16 %v2813
        %v2946 = vunpack.c.l.b16 %v2814
        %v2947 = vpack.c.b16 %v2884, %v2883
        %v2948 = vpack.c.b16 %v2886, %v2885
        %v2949 = vpack.c.b16 %v2888, %v2887
        %v2950 = vpack.c.b16 %v2890, %v2889
        %v2951 = vpack.c.b16 %v2892, %v2891
        %v2952 = vpack.c.b16 %v2894, %v2893
        %v2953 = vpack.c.b16 %v2896, %v2895
        %v2954 = vpack.c.b16 %v2898, %v2897
        %v2955 = vpack.c.b16 %v2900, %v2899
        %v2956 = vpack.c.b16 %v2902, %v2901
        %v2957 = vpack.c.b16 %v2904, %v2903
        %v2958 = vpack.c.b16 %v2906, %v2905
        %v2959 = vpack.c.b16 %v2908, %v2907
        %v2960 = vpack.c.b16 %v2910, %v2909
        %v2961 = vpack.c.b16 %v2912, %v2911
        %v2962 = vpack.c.b16 %v2914, %v2913
        %v2963 = vpack.c.b16 %v2916, %v2915
        %v2964 = vpack.c.b16 %v2918, %v2917
        %v2965 = vpack.c.b16 %v2920, %v2919
        %v2966 = vpack.c.b16 %v2922, %v2921
        %v2967 = vpack.c.b16 %v2924, %v2923
        %v2968 = vpack.c.b16 %v2926, %v2925
        %v2969 = vpack.c.b16 %v2928, %v2927
        %v2970 = vpack.c.b16 %v2930, %v2929
        %v2971 = vpack.c.b16 %v2932, %v2931
        %v2972 = vpack.c.b16 %v2934, %v2933
        %v2973 = vpack.c.b16 %v2936, %v2935
        %v2974 = vpack.c.b16 %v2938, %v2937
        %v2975 = vpack.c.b16 %v2940, %v2939
        %v2976 = vpack.c.b16 %v2942, %v2941
        %v2977 = vpack.c.b16 %v2944, %v2943
        %v2978 = vpack.c.b16 %v2946, %v2945
        %3011 = vmatpush.bf16.msra.mxu0 %v2954
        %3012 = vmatpush.bf16.msra.mxu0 %v2953
        %3013 = vmatpush.bf16.msra.mxu0 %v2952
        %3014 = vmatpush.bf16.msra.mxu0 %v2951
        %3015 = vmatpush.bf16.msra.mxu0 %v2950
        %3016 = vmatpush.bf16.msra.mxu0 %v2949
        %3017 = vmatpush.bf16.msra.mxu0 %v2948
        %3018 = vmatpush.bf16.msra.mxu0 %v2947
        %3019 = vmatmul.bf16.gmra.mxu0 %v2747
        %v3020 = vpop.f32.mrf.mxu0
        %v3021 = vadd.f32 %v2817, %v3020
        %v3022 = vpop.f32.mrf.mxu0
        %3023 = vdwg.mxu0
        %3024 = vmatpush.bf16.msra.mxu0 %v2962
        %3025 = vmatpush.bf16.msra.mxu0 %v2961
        %3026 = vmatpush.bf16.msra.mxu0 %v2960
        %3027 = vmatpush.bf16.msra.mxu0 %v2959
        %3028 = vmatpush.bf16.msra.mxu0 %v2958
        %3029 = vmatpush.bf16.msra.mxu0 %v2957
        %3030 = vmatpush.bf16.msra.mxu0 %v2956
        %3031 = vmatpush.bf16.msra.mxu0 %v2955
        %3032 = vmatmul.bf16.gmra.mxu0 %v2748
        %v3033 = vpop.f32.mrf.mxu0
        %v3034 = vadd.f32 %v3021, %v3033
        %v3035 = vpop.f32.mrf.mxu0
        %3036 = vdwg.mxu0
        %3037 = vmatpush.bf16.msra.mxu0 %v2970
        %3038 = vmatpush.bf16.msra.mxu0 %v2969
        %3039 = vmatpush.bf16.msra.mxu0 %v2968
        %3040 = vmatpush.bf16.msra.mxu0 %v2967
        %3041 = vmatpush.bf16.msra.mxu0 %v2966
        %3042 = vmatpush.bf16.msra.mxu0 %v2965
        %3043 = vmatpush.bf16.msra.mxu0 %v2964
        %3044 = vmatpush.bf16.msra.mxu0 %v2963
        %3045 = vmatmul.bf16.gmra.mxu0 %v2749
        %v3046 = vpop.f32.mrf.mxu0
        %v3047 = vadd.f32 %v3034, %v3046
        %v3048 = vpop.f32.mrf.mxu0
        %3049 = vdwg.mxu0
        %3050 = vmatpush.bf16.msra.mxu0 %v2978
        %3051 = vmatpush.bf16.msra.mxu0 %v2977
        %3052 = vmatpush.bf16.msra.mxu0 %v2976
        %3053 = vmatpush.bf16.msra.mxu0 %v2975
        %3054 = vmatpush.bf16.msra.mxu0 %v2974
        %3055 = vmatpush.bf16.msra.mxu0 %v2973
        %3056 = vmatpush.bf16.msra.mxu0 %v2972
        %3057 = vmatpush.bf16.msra.mxu0 %v2971
        %3058 = vmatmul.bf16.gmra.mxu0 %v2750
        %v3059 = vpop.f32.mrf.mxu0
        %v3060 = vadd.f32 %v3047, %v3059
        %v3061 = vpop.f32.mrf.mxu0
        %3062 = vdwg.mxu0
        %v3063 = vadd.f32 %v3060, %v2455
        %v3064 = vld [vmem:[%s1026] sm:$0x1]
        %v3065 = vld [vmem:[%s1029] sm:$0x1]
        %3066 = vadd.xlane.f32.xlu0 %v3063
        %v3067 = vpop.xlane.xlu0 %3066
        %v3068 = vmul.f32 %v3067, %v2429
        %v3069 = vsub.f32 %v3063, %v3068
        %v3070 = vmul.f32 %v3069, %v3069
        %3071 = vadd.xlane.f32.xlu0 %v3070
        %v3072 = vpop.xlane.xlu0 %3071
        %v3073 = vmul.f32 %v3072, %v2429
        %v3074 = vadd.f32 %v3073, 1e-12
        %v3075 = vrsqrt.pop %v3074
        %v3076 = vmul.f32 %v3075, %v3074
        %v3077 = vmul.f32 %v3076, %v3075
        %v3078 = vmul.f32 0.5, %v3077
        %v3079 = vsub.f32 1.5, %v3078
        %v3080 = vmul.f32 %v3075, %v3079
        %vm3081 = vweird.f32 %v3074
        %vm3082 = vweird.f32 %v3075
        %vm3083 = vmor %vm3081, %vm3082
        %v3084 = vsel %vm3083, %v3075, %v3080
        %v3085 = vmul.f32 %v3069, %v3084
        %v3087 = vperm.slane %v3064, 0
        %v3089 = vmul.f32 %v3085, %v3087
        %v3091 = vperm.slane %v3065, 0
        %v3093 = vadd.f32 %v3089, %v3091
        %3094 = vst [vmem:[#allocation2] sm:$0xff] %v3093
        %p3095 = scmp.eq.s32.totalorder %s43, 1
        // Predicated region
        $region121: #{tpu_custom_call.1} parent=115 // pred_check
          %p3096 = pneg %p3095
        $region122: #{tpu_custom_call.1} parent=115 // pred_check_branch
          %3098 = sbr.rel (%p3096) target = $region124
        $region123: #{tpu_custom_call.1} parent=115 // pred_region
          %v3099 = vpack.c.bf16 %v3093, %v3093
          %v3100 = vld [vmem:[%s20] sm:$0xf]
          %v3101 = vld [vmem:[%s20 + $0x4] sm:$0xf]
          %v3102 = vld [vmem:[%s20 + $0x8] sm:$0xf]
          %v3103 = vld [vmem:[%s20 + $0xc] sm:$0xf]
          %v3104 = vld [vmem:[%s20 + $0x10] sm:$0xf]
          %v3105 = vld [vmem:[%s20 + $0x14] sm:$0xf]
          %v3106 = vld [vmem:[%s20 + $0x18] sm:$0xf]
          %v3107 = vld [vmem:[%s20 + $0x1c] sm:$0xf]
          %v3108 = vld [vmem:[%s20 + $0x20] sm:$0xf]
          %v3109 = vld [vmem:[%s20 + $0x24] sm:$0xf]
          %v3110 = vld [vmem:[%s20 + $0x28] sm:$0xf]
          %v3111 = vld [vmem:[%s20 + $0x2c] sm:$0xf]
          %v3112 = vld [vmem:[%s20 + $0x30] sm:$0xf]
          %v3113 = vld [vmem:[%s20 + $0x34] sm:$0xf]
          %v3114 = vld [vmem:[%s20 + $0x38] sm:$0xf]
          %v3115 = vld [vmem:[%s20 + $0x3c] sm:$0xf]
          %v3116 = vld [vmem:[%s21] sm:$0x1]
          %v3133 = vunpack.c.l.b16 %v3100
          %v3134 = vunpack.c.l.b16 %v3101
          %v3135 = vunpack.c.l.b16 %v3102
          %v3136 = vunpack.c.l.b16 %v3103
          %v3137 = vunpack.c.l.b16 %v3104
          %v3138 = vunpack.c.l.b16 %v3105
          %v3139 = vunpack.c.l.b16 %v3106
          %v3140 = vunpack.c.l.b16 %v3107
          %v3141 = vunpack.c.l.b16 %v3108
          %v3142 = vunpack.c.l.b16 %v3109
          %v3143 = vunpack.c.l.b16 %v3110
          %v3144 = vunpack.c.l.b16 %v3111
          %v3145 = vunpack.c.l.b16 %v3112
          %v3146 = vunpack.c.l.b16 %v3113
          %v3147 = vunpack.c.l.b16 %v3114
          %v3148 = vunpack.c.l.b16 %v3115
          %v3149 = vpack.c.b16 %v3134, %v3133
          %v3150 = vpack.c.b16 %v3136, %v3135
          %v3151 = vpack.c.b16 %v3138, %v3137
          %v3152 = vpack.c.b16 %v3140, %v3139
          %v3153 = vpack.c.b16 %v3142, %v3141
          %v3154 = vpack.c.b16 %v3144, %v3143
          %v3155 = vpack.c.b16 %v3146, %v3145
          %v3156 = vpack.c.b16 %v3148, %v3147
          %3165 = vmatpush.bf16.msra.mxu0 %v3156
          %3166 = vmatpush.bf16.msra.mxu0 %v3155
          %3167 = vmatpush.bf16.msra.mxu0 %v3154
          %3168 = vmatpush.bf16.msra.mxu0 %v3153
          %3169 = vmatpush.bf16.msra.mxu0 %v3152
          %3170 = vmatpush.bf16.msra.mxu0 %v3151
          %3171 = vmatpush.bf16.msra.mxu0 %v3150
          %3172 = vmatpush.bf16.msra.mxu0 %v3149
          %3173 = vmatmul.bf16.gmra.mxu0 %v3099
          %v3174 = vpop.f32.mrf.mxu0
          %v3175 = vadd.f32 %v3116, %v3174
          %v3176 = vpop.f32.mrf.mxu0
          %3177 = vdwg.mxu0
          %v3178 = vtanh.pop %v3175
          %v3179 = vpack.c.bf16 %v3178, %v3178
          %v3180 = vld [vmem:[%s22] sm:$0xf]
          %v3181 = vld [vmem:[%s22 + $0x4] sm:$0xf]
          %v3182 = vld [vmem:[%s22 + $0x8] sm:$0xf]
          %v3183 = vld [vmem:[%s22 + $0xc] sm:$0xf]
          %v3184 = vld [vmem:[%s22 + $0x10] sm:$0xf]
          %v3185 = vld [vmem:[%s22 + $0x14] sm:$0xf]
          %v3186 = vld [vmem:[%s22 + $0x18] sm:$0xf]
          %v3187 = vld [vmem:[%s22 + $0x1c] sm:$0xf]
          %v3188 = vld [vmem:[%s22 + $0x20] sm:$0xf]
          %v3189 = vld [vmem:[%s22 + $0x24] sm:$0xf]
          %v3190 = vld [vmem:[%s22 + $0x28] sm:$0xf]
          %v3191 = vld [vmem:[%s22 + $0x2c] sm:$0xf]
          %v3192 = vld [vmem:[%s22 + $0x30] sm:$0xf]
          %v3193 = vld [vmem:[%s22 + $0x34] sm:$0xf]
          %v3194 = vld [vmem:[%s22 + $0x38] sm:$0xf]
          %v3195 = vld [vmem:[%s22 + $0x3c] sm:$0xf]
          %v3196 = vld [vmem:[%s23] sm:$0x1]
          %v3213 = vunpack.c.l.b16 %v3180
          %v3214 = vunpack.c.l.b16 %v3181
          %v3215 = vunpack.c.l.b16 %v3182
          %v3216 = vunpack.c.l.b16 %v3183
          %v3217 = vunpack.c.l.b16 %v3184
          %v3218 = vunpack.c.l.b16 %v3185
          %v3219 = vunpack.c.l.b16 %v3186
          %v3220 = vunpack.c.l.b16 %v3187
          %v3221 = vunpack.c.l.b16 %v3188
          %v3222 = vunpack.c.l.b16 %v3189
          %v3223 = vunpack.c.l.b16 %v3190
          %v3224 = vunpack.c.l.b16 %v3191
          %v3225 = vunpack.c.l.b16 %v3192
          %v3226 = vunpack.c.l.b16 %v3193
          %v3227 = vunpack.c.l.b16 %v3194
          %v3228 = vunpack.c.l.b16 %v3195
          %v3229 = vpack.c.b16 %v3214, %v3213
          %v3230 = vpack.c.b16 %v3216, %v3215
          %v3231 = vpack.c.b16 %v3218, %v3217
          %v3232 = vpack.c.b16 %v3220, %v3219
          %v3233 = vpack.c.b16 %v3222, %v3221
          %v3234 = vpack.c.b16 %v3224, %v3223
          %v3235 = vpack.c.b16 %v3226, %v3225
          %v3236 = vpack.c.b16 %v3228, %v3227
          %3245 = vmatpush.bf16.msra.mxu0 %v3236
          %3246 = vmatpush.bf16.msra.mxu0 %v3235
          %3247 = vmatpush.bf16.msra.mxu0 %v3234
          %3248 = vmatpush.bf16.msra.mxu0 %v3233
          %3249 = vmatpush.bf16.msra.mxu0 %v3232
          %3250 = vmatpush.bf16.msra.mxu0 %v3231
          %3251 = vmatpush.bf16.msra.mxu0 %v3230
          %3252 = vmatpush.bf16.msra.mxu0 %v3229
          %3253 = vmatmul.bf16.gmra.mxu0 %v3179
          %v3254 = vpop.f32.mrf.mxu0
          %v3255 = vadd.f32 %v3196, %v3254
          %v3256 = vpop.f32.mrf.mxu0
          %3257 = vdwg.mxu0
          %v3258 = vmul.f32 %v3255, 0.5
          %v3259 = vtanh.pop %v3258
          %v3260 = vadd.f32 %v3259, 1.0
          %v3261 = vmul.f32 %v3260, 0.5
          %3262 = vst [vmem:[%s958] sm:$0x1] %v3261
        $region124: #{tpu_custom_call.1} parent=115 // pred_fallthru
          _
        %s3263 = sand.u32 %s652, 1
        %s3264 = scalar_lea.sflag [#allocation4], %s3263
        %s3265 = sand.u32 %s652, 1
        %s3266 = scalar_lea.vmem [#allocation3], %s3265
        // Predicated region
        $region125: #{tpu_custom_call.1} parent=115 // pred_check
          %p3267 = pneg %p662
        $region126: #{tpu_custom_call.1} parent=115 // pred_check_branch
          %3269 = sbr.rel (%p3267) target = $region128
        $region127: #{tpu_custom_call.1} parent=115 // pred_region
          %3271 = vsyncadd %s3264, 0
          %s3272 = scalar_lea.hbm %s24, %s42
          %s3274 = sshll.u32 %s3266, 4
          %s3275 = int_to_ptr.vmem [resolvable:$true] %s3274
          %s3276 = sshll.u32 %s3272, 4
          %s3277 = int_to_ptr.hbm [resolvable:$true] %s3276
          %3279 = dma.vmem_to_hbm [thread:$0]  %s3275, 16, %s3277, %s3264
        $region128: #{tpu_custom_call.1} parent=115 // pred_fallthru
          _
      $region116: #{tpu_custom_call.1} parent=5 // pred_fallthru
        _
      %p3280 = scmp.le.s32.totalorder 2, %s33
      // Predicated region
      $region129: #{tpu_custom_call.1} parent=5 // pred_check
        %p3281 = pneg %p3280
      $region130: #{tpu_custom_call.1} parent=5 // pred_check_branch
        %3283 = sbr.rel (%p3281) target = $region132
      $region131: #{tpu_custom_call.1} parent=5 // pred_region
        %s3284 = ssub.s32 %s33, 2
        // Predicated region
        $region133: #{tpu_custom_call.1} parent=131 // pred_check
          %p3285 = pneg %p668
        $region134: #{tpu_custom_call.1} parent=131 // pred_check_branch
          %3287 = sbr.rel (%p3285) target = $region136
        $region135: #{tpu_custom_call.1} parent=131 // pred_region
          %s3288 = sand.u32 %s653, 1
          %s3289 = scalar_lea.sflag [#allocation4], %s3288
          %s3290 = sand.u32 %s653, 1
          %s3291 = scalar_lea.vmem [#allocation3], %s3290
          %3293 = dma.done %s3289, 16
        $region136: #{tpu_custom_call.1} parent=131 // pred_fallthru
          _
      $region132: #{tpu_custom_call.1} parent=5 // pred_fallthru
        _
    $region6: #{tpu_custom_call.1} parent=1 // loop_footer
      %s37 = sadd.s32 1, %s33
    $region7: #{tpu_custom_call.1} parent=1 // loop_footer_branch
      %32 = sbr.rel target = $region3
    $region8: #{tpu_custom_call.1} parent=1 // loop_exit
      _
    %3294 = vsyncpa [#allocation4], 1
    %s3295 = scalar_lea.sflag [#allocation4], 1
    %3296 = vsyncpa %s3295, 1

</llo_original>
